<compile_context>
chip_gen: v5e
topology: v5e:2x2
jax: 0.10.0
libtpu: 0.0.40
codegen_flags: <defaults>
</compile_context>

<pallas_src>
import functools

import jax
import jax.numpy as jnp
from jax.experimental import pallas as pl
from jax.experimental.pallas import tpu as pltpu


# ---------------------------------------------------------------------------
# small helpers
# ---------------------------------------------------------------------------
def _gelu(x):
    # enformer-pytorch GELU: x * sigmoid(1.702 * x)  (exp-only form; lowers cleanly).
    # TODO(synk): differs slightly from torch.nn.GELU's exact-erf definition.
    return x / (1.0 + jnp.exp(-1.702 * x))


def fold_bn(gamma, beta, mean, var, eps=1e-5):
    scale = gamma * jax.lax.rsqrt(var + eps)
    shift = beta - mean * scale
    return scale, shift


# ---------------------------------------------------------------------------
# Kernel 1/2: conv block (+ optional BN->GELU pre-op) + residual ConvBlock + AttentionPool
# ---------------------------------------------------------------------------
def _conv_block_pool_kernel(*refs, k, pre):
    if pre:
        (xp_ref, ps_ref, pq_ref, wc_ref, bc_ref,
         rs_ref, rq_ref, rw_ref, rb_ref, wp_ref, o_ref) = refs
    else:
        (xp_ref, wc_ref, bc_ref,
         rs_ref, rq_ref, rw_ref, rb_ref, wp_ref, o_ref) = refs

    xp = xp_ref[0].astype(jnp.float32)                 # (Lp, Cin) padded input
    Lp, Cin = xp.shape
    L = Lp - (k - 1)
    pad = (k - 1) // 2
    Cout = wc_ref.shape[1]

    if pre:
        # ConvBlock pre-op: folded BatchNorm -> GELU, then re-zero the halo rows so the
        # conv sees zero padding *after* the pointwise pre-op (matches Conv1d padding).
        xp = xp * ps_ref[...] + pq_ref[...]
        xp = _gelu(xp)
        pos = jax.lax.broadcasted_iota(jnp.int32, (Lp, 1), 0)
        valid = jnp.logical_and(pos >= pad, pos < pad + L).astype(jnp.float32)
        xp = xp * valid

    # conv as tap accumulation (k small MXU matmuls; bf16 operands, f32 accumulate)
    xpb = xp.astype(jnp.bfloat16)
    wc = wc_ref[...]                                   # (k*Cin, Cout) bf16
    acc = jnp.zeros((L, Cout), jnp.float32)
    for t in range(k):
        acc = acc + jnp.dot(xpb[t:t + L, :], wc[t * Cin:(t + 1) * Cin, :],
                            preferred_element_type=jnp.float32)
    x = acc + bc_ref[...]                              # (L, Cout)

    # Residual(ConvBlock(k=1)): BN -> GELU -> 1x1 conv, added back
    h = x * rs_ref[...] + rq_ref[...]
    h = _gelu(h)
    h = jnp.dot(h.astype(jnp.bfloat16), rw_ref[...],
                preferred_element_type=jnp.float32) + rb_ref[...]
    x = x + h

    # AttentionPool(pool=2): logits = 1x1 conv; softmax over each window of 2 positions.
    logits = jnp.dot(x.astype(jnp.bfloat16), wp_ref[...],
                     preferred_element_type=jnp.float32)
    Lh = L // 2
    # even/odd row gather done on the MXU (selection matmuls) -> no strided slices.
    r = jax.lax.broadcasted_iota(jnp.int32, (Lh, L), 0)
    c = jax.lax.broadcasted_iota(jnp.int32, (Lh, L), 1)
    pe = (c == 2 * r).astype(jnp.float32)
    po = (c == 2 * r + 1).astype(jnp.float32)
    x0 = jnp.dot(pe, x, preferred_element_type=jnp.float32)
    x1 = jnp.dot(po, x, preferred_element_type=jnp.float32)
    l0 = jnp.dot(pe, logits, preferred_element_type=jnp.float32)
    l1 = jnp.dot(po, logits, preferred_element_type=jnp.float32)
    m = jnp.maximum(l0, l1)
    w0 = jnp.exp(l0 - m)
    w1 = jnp.exp(l1 - m)
    out = (x0 * w0 + x1 * w1) * pl.reciprocal(w0 + w1, approx=True)
    o_ref[0] = out.astype(o_ref.dtype)


def conv_block_pool(x, pre_scale, pre_shift, wconv, bconv,
                    rb_scale, rb_shift, rb_w, rb_b, wpool, *, k):
    """[N, L, Cin] -> conv(k) [+ BN/GELU pre-op] -> residual 1x1 ConvBlock -> pool(2)."""
    N, L, Cin = x.shape
    Cout = wconv.shape[1]
    pad = (k - 1) // 2
    Lp = L + 2 * pad
    Lh = L // 2
    xp = jnp.pad(x, ((0, 0), (pad, pad), (0, 0)))
    pre = pre_scale is not None

    in_specs = [pl.BlockSpec((1, Lp, Cin), lambda i: (i, 0, 0))]
    inputs = [xp]
    if pre:
        in_specs += [pl.BlockSpec((1, Cin), lambda i: (0, 0)),
                     pl.BlockSpec((1, Cin), lambda i: (0, 0))]
        inputs += [pre_scale.reshape(1, Cin), pre_shift.reshape(1, Cin)]
    in_specs += [
        pl.BlockSpec((k * Cin, Cout), lambda i: (0, 0)),   # conv weight (resident)
        pl.BlockSpec((1, Cout), lambda i: (0, 0)),          # conv bias
        pl.BlockSpec((1, Cout), lambda i: (0, 0)),          # residual BN scale
        pl.BlockSpec((1, Cout), lambda i: (0, 0)),          # residual BN shift
        pl.BlockSpec((Cout, Cout), lambda i: (0, 0)),        # residual 1x1 conv weight
        pl.BlockSpec((1, Cout), lambda i: (0, 0)),           # residual 1x1 conv bias
        pl.BlockSpec((Cout, Cout), lambda i: (0, 0)),        # attention-pool logit weight
    ]
    inputs += [wconv, bconv.reshape(1, Cout), rb_scale.reshape(1, Cout),
               rb_shift.reshape(1, Cout), rb_w, rb_b.reshape(1, Cout), wpool]

    return pl.pallas_call(
        functools.partial(_conv_block_pool_kernel, k=k, pre=pre),
        out_shape=jax.ShapeDtypeStruct((N, Lh, Cout), jnp.float32),
        grid=(N,),
        in_specs=in_specs,
        out_specs=pl.BlockSpec((1, Lh, Cout), lambda i: (i, 0, 0)),
        compiler_params=pltpu.CompilerParams(dimension_semantics=("parallel",)),
    )(*inputs)


# ---------------------------------------------------------------------------
# Kernel 3: fused LN -> QKV -> per-head attention -> out-proj -> residual
# ---------------------------------------------------------------------------
def _mha_kernel(x_ref, g_ref, b_ref, wqkv_ref, bqkv_ref, wo_ref, bo_ref, o_ref,
                *, heads, dh):
    x = x_ref[0].astype(jnp.float32)                   # (Lt, dim)
    Lt, dim = x.shape
    mu = jnp.mean(x, axis=-1, keepdims=True)
    var = jnp.mean((x - mu) ** 2, axis=-1, keepdims=True)
    xn = (x - mu) * jax.lax.rsqrt(var + 1e-5) * g_ref[...] + b_ref[...]

    qkv = jnp.dot(xn.astype(jnp.bfloat16), wqkv_ref[...],
                  preferred_element_type=jnp.float32) + bqkv_ref[...]   # (Lt, 3*H*dh)
    wo = wo_ref[...]                                   # (H*dh, dim) bf16
    scale = dh ** -0.5

    acc = jnp.zeros((Lt, dim), jnp.float32)
    for h in range(heads):
        q = qkv[:, h * dh:(h + 1) * dh].astype(jnp.bfloat16)
        k = qkv[:, (heads + h) * dh:(heads + h + 1) * dh].astype(jnp.bfloat16)
        v = qkv[:, (2 * heads + h) * dh:(2 * heads + h + 1) * dh].astype(jnp.bfloat16)
        # TODO(synk): Enformer relative positional bias omitted.
        s = jax.lax.dot_general(q, k, (((1,), (1,)), ((), ())),
                                preferred_element_type=jnp.float32) * scale
        s = s - jnp.max(s, axis=-1, keepdims=True)
        p = jnp.exp(s)
        p = p * pl.reciprocal(jnp.sum(p, axis=-1, keepdims=True), approx=True)
        oh = jnp.dot(p.astype(jnp.bfloat16), v, preferred_element_type=jnp.float32)
        # out-proj applied per head slice (avoids an in-kernel concat)
        acc = acc + jnp.dot(oh.astype(jnp.bfloat16), wo[h * dh:(h + 1) * dh, :],
                            preferred_element_type=jnp.float32)
    o_ref[0] = (x + acc + bo_ref[...]).astype(o_ref.dtype)


def mha_block(x, p):
    N, Lt, dim = x.shape
    heads, dh = p["heads"], p["dim_head"]
    hdh = heads * dh
    return pl.pallas_call(
        functools.partial(_mha_kernel, heads=heads, dh=dh),
        out_shape=jax.ShapeDtypeStruct((N, Lt, dim), jnp.float32),
        grid=(N,),
        in_specs=[
            pl.BlockSpec((1, Lt, dim), lambda i: (i, 0, 0)),
            pl.BlockSpec((1, dim), lambda i: (0, 0)),
            pl.BlockSpec((1, dim), lambda i: (0, 0)),
            pl.BlockSpec((dim, 3 * hdh), lambda i: (0, 0)),
            pl.BlockSpec((1, 3 * hdh), lambda i: (0, 0)),
            pl.BlockSpec((hdh, dim), lambda i: (0, 0)),
            pl.BlockSpec((1, dim), lambda i: (0, 0)),
        ],
        out_specs=pl.BlockSpec((1, Lt, dim), lambda i: (i, 0, 0)),
        compiler_params=pltpu.CompilerParams(dimension_semantics=("parallel",)),
    )(x, p["ln1_g"].reshape(1, dim), p["ln1_b"].reshape(1, dim),
      p["w_qkv"], p["b_qkv"].reshape(1, 3 * hdh),
      p["w_attn_out"], p["b_attn_out"].reshape(1, dim))


# ---------------------------------------------------------------------------
# Kernel 4: fused LN -> FF1 -> ReLU -> FF2 -> residual (row-tiled)
# ---------------------------------------------------------------------------
def _ffn_kernel(x_ref, g_ref, b_ref, w1_ref, b1_ref, w2_ref, b2_ref, o_ref):
    x = x_ref[...].astype(jnp.float32)
    mu = jnp.mean(x, axis=-1, keepdims=True)
    var = jnp.mean((x - mu) ** 2, axis=-1, keepdims=True)
    xn = (x - mu) * jax.lax.rsqrt(var + 1e-5) * g_ref[...] + b_ref[...]
    h = jnp.dot(xn.astype(jnp.bfloat16), w1_ref[...],
                preferred_element_type=jnp.float32) + b1_ref[...]
    h = jnp.maximum(h, 0.0)
    y = jnp.dot(h.astype(jnp.bfloat16), w2_ref[...],
                preferred_element_type=jnp.float32) + b2_ref[...]
    o_ref[...] = (x + y).astype(o_ref.dtype)


def ffn_block(x, p):
    N, Lt, dim = x.shape
    hid = p["w_ff1"].shape[1]
    M = N * Lt
    x2 = x.reshape(M, dim)
    # row-tile: big tiles for pipelining at real sizes, must divide M and be 8-aligned
    TM = M if M <= 512 else 512
    while M % TM != 0:
        TM //= 2
    y = pl.pallas_call(
        _ffn_kernel,
        out_shape=jax.ShapeDtypeStruct((M, dim), jnp.float32),
        grid=(M // TM,),
        in_specs=[
            pl.BlockSpec((TM, dim), lambda i: (i, 0)),
            pl.BlockSpec((1, dim), lambda i: (0, 0)),
            pl.BlockSpec((1, dim), lambda i: (0, 0)),
            pl.BlockSpec((dim, hid), lambda i: (0, 0)),   # weights resident across grid
            pl.BlockSpec((1, hid), lambda i: (0, 0)),
            pl.BlockSpec((hid, dim), lambda i: (0, 0)),
            pl.BlockSpec((1, dim), lambda i: (0, 0)),
        ],
        out_specs=pl.BlockSpec((TM, dim), lambda i: (i, 0)),
        compiler_params=pltpu.CompilerParams(dimension_semantics=("parallel",)),
    )(x2, p["ln2_g"].reshape(1, dim), p["ln2_b"].reshape(1, dim),
      p["w_ff1"], p["b_ff1"].reshape(1, hid), p["w_ff2"], p["b_ff2"].reshape(1, dim))
    return y.reshape(N, Lt, dim)


# ---------------------------------------------------------------------------
# Kernel 5: bin-window extraction + final pointwise ConvBlock+GELU + merge
#   Only the 2*add_bin+1 needed rows are DMA'd per example (scalar-prefetched bins,
#   manual HBM->VMEM copy). The final pointwise conv commutes with row selection, so
#   applying it on the window only is exactly equivalent to trunk-then-extract.
# ---------------------------------------------------------------------------
def _bin_final_kernel(bins_ref, emb_hbm, fs_ref, fq_ref, fw_ref, fb_ref, o_ref,
                      win, sem, *, add_bin, crop, merge, t_crop):
    b = pl.program_id(0)
    width = 2 * add_bin + 1
    # TODO(synk): PyTorch would wrap/raise on out-of-range bins; we clamp the window.
    start = jnp.clip(bins_ref[b] - add_bin, 0, t_crop - width) + crop
    cp = pltpu.make_async_copy(emb_hbm.at[b, pl.ds(start, width)], win, sem)
    cp.start()
    cp.wait()

    x = win[...].astype(jnp.float32)                   # (width, dim)
    h = x * fs_ref[...] + fq_ref[...]                  # folded BatchNorm
    h = _gelu(h)
    y = jnp.dot(h.astype(jnp.bfloat16), fw_ref[...],
                preferred_element_type=jnp.float32) + fb_ref[...]
    y = _gelu(y)                                       # (width, 2*dim); dropout = identity

    if merge == "nomerge":
        o_ref[0] = y.astype(o_ref.dtype)
    else:
        acc = jnp.sum(y, axis=0, keepdims=True)
        if merge == "mean":
            acc = acc * (1.0 / width)
        o_ref[0] = acc.astype(o_ref.dtype)


def bin_extract_final_merge(emb, bins, p, *, add_bin, merge, crop):
    N, Lt, dim = emb.shape
    E = p["final_w"].shape[1]
    width = 2 * add_bin + 1
    t_crop = Lt - 2 * crop
    out_rows = width if merge == "nomerge" else 1
    return pl.pallas_call(
        functools.partial(_bin_final_kernel, add_bin=add_bin, crop=crop,
                          merge=merge, t_crop=t_crop),
        out_shape=jax.ShapeDtypeStruct((N, out_rows, E), jnp.float32),
        grid_spec=pltpu.PrefetchScalarGridSpec(
            num_scalar_prefetch=1,
            grid=(N,),
            in_specs=[
                pl.BlockSpec(memory_space=pl.ANY),            # trunk emb stays in HBM
                pl.BlockSpec((1, dim), lambda i, bins: (0, 0)),
                pl.BlockSpec((1, dim), lambda i, bins: (0, 0)),
                pl.BlockSpec((dim, E), lambda i, bins: (0, 0)),
                pl.BlockSpec((1, E), lambda i, bins: (0, 0)),
            ],
            out_specs=pl.BlockSpec((1, out_rows, E), lambda i, bins: (i, 0, 0)),
            scratch_shapes=[pltpu.VMEM((width, dim), jnp.float32),
                            pltpu.SemaphoreType.DMA],
        ),
        compiler_params=pltpu.CompilerParams(dimension_semantics=("parallel",)),
    )(bins, emb, p["final_scale"].reshape(1, dim), p["final_shift"].reshape(1, dim),
      p["final_w"], p["final_b"].reshape(1, E))


# ---------------------------------------------------------------------------
# Parameters (synthetic Enformer-style trunk)
# ---------------------------------------------------------------------------
def make_params(key, *, half_dim=16, dim=32, heads=2, dim_head=16):
    ks = iter(jax.random.split(key, 40))

    def nrm(shape, scale=0.05):
        return scale * jax.random.normal(next(ks), shape, dtype=jnp.float32)

    def bn(c):
        gamma = 1.0 + nrm((c,), 0.01)
        beta = nrm((c,), 0.01)
        mean = nrm((c,), 0.01)
        var = jnp.ones((c,), jnp.float32)
        return fold_bn(gamma, beta, mean, var)

    def bf(w):  # MXU operand weights stored in bf16 (f32 accumulation in-kernel)
        return w.astype(jnp.bfloat16)

    p = {"heads": heads, "dim_head": dim_head, "half_dim": half_dim, "dim": dim}
    # stem: Conv1d(4 -> half_dim, k=15) ; weight rows ordered [tap0 ch..., tap1 ch...,...]
    p["stem_w"] = bf(nrm((4 * 15, half_dim)))
    p["stem_b"] = nrm((half_dim,))
    p["stem_rb_scale"], p["stem_rb_shift"] = bn(half_dim)
    p["stem_rb_w"] = bf(nrm((half_dim, half_dim)))
    p["stem_rb_b"] = nrm((half_dim,))
    p["pool1_w"] = bf(2.0 * jnp.eye(half_dim, dtype=jnp.float32))
    # conv tower (1 block): ConvBlock(half_dim -> dim, k=5)
    p["tower_scale"], p["tower_shift"] = bn(half_dim)
    p["tower_w"] = bf(nrm((half_dim * 5, dim)))
    p["tower_b"] = nrm((dim,))
    p["tower_rb_scale"], p["tower_rb_shift"] = bn(dim)
    p["tower_rb_w"] = bf(nrm((dim, dim)))
    p["tower_rb_b"] = nrm((dim,))
    p["pool2_w"] = bf(2.0 * jnp.eye(dim, dtype=jnp.float32))
    # transformer (1 layer)
    p["ln1_g"] = jnp.ones((dim,), jnp.float32)
    p["ln1_b"] = jnp.zeros((dim,), jnp.float32)
    p["w_qkv"] = bf(nrm((dim, 3 * heads * dim_head)))
    p["b_qkv"] = nrm((3 * heads * dim_head,))
    p["w_attn_out"] = bf(nrm((heads * dim_head, dim)))
    p["b_attn_out"] = nrm((dim,))
    p["ln2_g"] = jnp.ones((dim,), jnp.float32)
    p["ln2_b"] = jnp.zeros((dim,), jnp.float32)
    p["w_ff1"] = bf(nrm((dim, 2 * dim)))
    p["b_ff1"] = nrm((2 * dim,))
    p["w_ff2"] = bf(nrm((2 * dim, dim)))
    p["b_ff2"] = nrm((dim,))
    # final pointwise ConvBlock(dim -> 2*dim, k=1)
    p["final_scale"], p["final_shift"] = bn(dim)
    p["final_w"] = bf(nrm((dim, 2 * dim)))
    p["final_b"] = nrm((2 * dim,))
    return p


# ---------------------------------------------------------------------------
# Trunk + forward (mirrors EnformerTrunk.forward)
# ---------------------------------------------------------------------------
def enformer_trunk(p, seq):
    """Synthetic Enformer trunk body up to (and excluding) crop + final pointwise conv.

    [N, L, 4] -> [N, L/4, dim].  Crop and the final pointwise ConvBlock are pointwise
    over sequence positions and are fused into the bin-extraction kernel.
    """
    # stem: Conv1d(4 -> half_dim, 15) + Residual(ConvBlock k=1) + AttentionPool(2)
    x = conv_block_pool(seq, None, None, p["stem_w"], p["stem_b"],
                        p["stem_rb_scale"], p["stem_rb_shift"],
                        p["stem_rb_w"], p["stem_rb_b"], p["pool1_w"], k=15)
    # conv tower (1 block): ConvBlock(half_dim -> dim, 5) + Residual + AttentionPool(2)
    x = conv_block_pool(x, p["tower_scale"], p["tower_shift"], p["tower_w"], p["tower_b"],
                        p["tower_rb_scale"], p["tower_rb_shift"],
                        p["tower_rb_w"], p["tower_rb_b"], p["pool2_w"], k=5)
    # transformer (1 layer): x + MHA(LN(x)); x + FFN(LN(x))
    x = mha_block(x, p)
    x = ffn_block(x, p)
    return x                                            # [N, Lt, dim]


def enformer_trunk_forward(params, seq, bin_to_extract, add_bin=0, bin_merge_mode="mean"):
    """Mirrors EnformerTrunk.forward: trunk -> per-example bin extraction -> merge."""
    emb = enformer_trunk(params, seq)                   # pre-crop, pre-final-conv
    N = emb.shape[0]
    crop = 2                                            # trunk crops 2 bins per side
    if isinstance(bin_to_extract, int):
        bins = jnp.full((N,), bin_to_extract, dtype=jnp.int32)
    else:
        bins = bin_to_extract.astype(jnp.int32)
    # add_bin == 0: no merging in the reference (width-1 window) -> "nomerge" path
    merge = bin_merge_mode if add_bin != 0 else "nomerge"
    return bin_extract_final_merge(emb, bins, params,
                                   add_bin=add_bin, merge=merge, crop=crop)


if __name__ == "__main__":
    key = jax.random.PRNGKey(0)
    k_seq, k_params = jax.random.split(key)

    Nb, L = 2, 128                                      # small shapes: batch=2, seq_length=128
    base_idx = jax.random.randint(k_seq, (Nb, L), 0, 4)
    seq = jax.nn.one_hot(base_idx, 4, dtype=jnp.float32)   # [N, seq_length, 4]
    params = make_params(k_params)

    bins = jnp.array([14, 9], dtype=jnp.int32)          # per-example bins (tensor case)
    out = enformer_trunk_forward(params, seq, bins, add_bin=1, bin_merge_mode="mean")
    out = jax.block_until_ready(out)
    assert out.shape == (Nb, 1, 2 * params["dim"]), out.shape
    assert bool(jnp.all(jnp.isfinite(out)))

    # also exercise the previously-missing 'nomerge' path and int-bin path
    out_nm = enformer_trunk_forward(params, seq, 10, add_bin=1, bin_merge_mode="nomerge")
    out_nm = jax.block_until_ready(out_nm)
    assert out_nm.shape == (Nb, 3, 2 * params["dim"]), out_nm.shape
    assert bool(jnp.all(jnp.isfinite(out_nm)))

    print("KERNEL_OK")
</pallas_src>

<mosaic_0001>
module attributes {stable_mosaic.version = 11 : i64} {
  func.func @_conv_block_pool_kernel(%arg0: i32, %arg1: memref<1x142x4xf32, #tpu.memory_space<vmem>>, %arg2: memref<60x16xbf16, #tpu.memory_space<vmem>>, %arg3: memref<1x16xf32, #tpu.memory_space<vmem>>, %arg4: memref<1x16xf32, #tpu.memory_space<vmem>>, %arg5: memref<1x16xf32, #tpu.memory_space<vmem>>, %arg6: memref<16x16xbf16, #tpu.memory_space<vmem>>, %arg7: memref<1x16xf32, #tpu.memory_space<vmem>>, %arg8: memref<16x16xbf16, #tpu.memory_space<vmem>>, %arg9: memref<1x64x16xf32, #tpu.memory_space<vmem>>) attributes {dimension_semantics = [#tpu.dimension_semantics<parallel>], iteration_bounds = array<i64: 2>, scalar_prefetch = 0 : i64, scratch_operands = 0 : i64, tpu.core_type = #tpu.core_type<tc>, window_params = [{transform_indices = @transform_0, window_bounds = array<i64: 1, 142, 4>}, {pipeline_mode = #tpu.pipeline_mode<synchronous>, transform_indices = @transform_1, window_bounds = array<i64: 60, 16>}, {pipeline_mode = #tpu.pipeline_mode<synchronous>, transform_indices = @transform_2, window_bounds = array<i64: 1, 16>}, {pipeline_mode = #tpu.pipeline_mode<synchronous>, transform_indices = @transform_3, window_bounds = array<i64: 1, 16>}, {pipeline_mode = #tpu.pipeline_mode<synchronous>, transform_indices = @transform_4, window_bounds = array<i64: 1, 16>}, {pipeline_mode = #tpu.pipeline_mode<synchronous>, transform_indices = @transform_5, window_bounds = array<i64: 16, 16>}, {pipeline_mode = #tpu.pipeline_mode<synchronous>, transform_indices = @transform_6, window_bounds = array<i64: 1, 16>}, {pipeline_mode = #tpu.pipeline_mode<synchronous>, transform_indices = @transform_7, window_bounds = array<i64: 16, 16>}, {transform_indices = @transform_8, window_bounds = array<i64: 1, 64, 16>}]} {
    %c0 = arith.constant 0 : index
    %c0_0 = arith.constant 0 : index
    %c0_1 = arith.constant 0 : index
    %0 = vector.load %arg1[%c0, %c0_0, %c0_1] : memref<1x142x4xf32, #tpu.memory_space<vmem>>, vector<1x142x4xf32>
    %1 = vector.shape_cast %0 : vector<1x142x4xf32> to vector<142x4xf32>
    %2 = arith.truncf %1 : vector<142x4xf32> to vector<142x4xbf16>
    %c0_2 = arith.constant 0 : index
    %c0_3 = arith.constant 0 : index
    %3 = vector.load %arg2[%c0_2, %c0_3] : memref<60x16xbf16, #tpu.memory_space<vmem>>, vector<60x16xbf16>
    %cst = arith.constant 0.000000e+00 : f32
    %4 = vector.broadcast %cst : f32 to vector<128x16xf32>
    %5 = vector.extract_strided_slice %2 {offsets = [0, 0], sizes = [128, 4], strides = [1, 1]} : vector<142x4xbf16> to vector<128x4xbf16>
    %6 = vector.extract_strided_slice %3 {offsets = [0, 0], sizes = [4, 16], strides = [1, 1]} : vector<60x16xbf16> to vector<4x16xbf16>
    %cst_4 = arith.constant dense<0.000000e+00> : vector<128x16xf32>
    %7 = tpu.matmul %5, %6, %cst_4 {dimension_numbers = #tpu.dot_dimension_numbers<[1], [0], [0], [1], [0, 0, 1, 1], [], []>} : vector<128x4xbf16>, vector<4x16xbf16>, vector<128x16xf32> -> vector<128x16xf32>
    %8 = arith.addf %4, %7 : vector<128x16xf32>
    %9 = vector.extract_strided_slice %2 {offsets = [1, 0], sizes = [128, 4], strides = [1, 1]} : vector<142x4xbf16> to vector<128x4xbf16>
    %10 = vector.extract_strided_slice %3 {offsets = [4, 0], sizes = [4, 16], strides = [1, 1]} : vector<60x16xbf16> to vector<4x16xbf16>
    %cst_5 = arith.constant dense<0.000000e+00> : vector<128x16xf32>
    %11 = tpu.matmul %9, %10, %cst_5 {dimension_numbers = #tpu.dot_dimension_numbers<[1], [0], [0], [1], [0, 0, 1, 1], [], []>} : vector<128x4xbf16>, vector<4x16xbf16>, vector<128x16xf32> -> vector<128x16xf32>
    %12 = arith.addf %8, %11 : vector<128x16xf32>
    %13 = vector.extract_strided_slice %2 {offsets = [2, 0], sizes = [128, 4], strides = [1, 1]} : vector<142x4xbf16> to vector<128x4xbf16>
    %14 = vector.extract_strided_slice %3 {offsets = [8, 0], sizes = [4, 16], strides = [1, 1]} : vector<60x16xbf16> to vector<4x16xbf16>
    %cst_6 = arith.constant dense<0.000000e+00> : vector<128x16xf32>
    %15 = tpu.matmul %13, %14, %cst_6 {dimension_numbers = #tpu.dot_dimension_numbers<[1], [0], [0], [1], [0, 0, 1, 1], [], []>} : vector<128x4xbf16>, vector<4x16xbf16>, vector<128x16xf32> -> vector<128x16xf32>
    %16 = arith.addf %12, %15 : vector<128x16xf32>
    %17 = vector.extract_strided_slice %2 {offsets = [3, 0], sizes = [128, 4], strides = [1, 1]} : vector<142x4xbf16> to vector<128x4xbf16>
    %18 = vector.extract_strided_slice %3 {offsets = [12, 0], sizes = [4, 16], strides = [1, 1]} : vector<60x16xbf16> to vector<4x16xbf16>
    %cst_7 = arith.constant dense<0.000000e+00> : vector<128x16xf32>
    %19 = tpu.matmul %17, %18, %cst_7 {dimension_numbers = #tpu.dot_dimension_numbers<[1], [0], [0], [1], [0, 0, 1, 1], [], []>} : vector<128x4xbf16>, vector<4x16xbf16>, vector<128x16xf32> -> vector<128x16xf32>
    %20 = arith.addf %16, %19 : vector<128x16xf32>
    %21 = vector.extract_strided_slice %2 {offsets = [4, 0], sizes = [128, 4], strides = [1, 1]} : vector<142x4xbf16> to vector<128x4xbf16>
    %22 = vector.extract_strided_slice %3 {offsets = [16, 0], sizes = [4, 16], strides = [1, 1]} : vector<60x16xbf16> to vector<4x16xbf16>
    %cst_8 = arith.constant dense<0.000000e+00> : vector<128x16xf32>
    %23 = tpu.matmul %21, %22, %cst_8 {dimension_numbers = #tpu.dot_dimension_numbers<[1], [0], [0], [1], [0, 0, 1, 1], [], []>} : vector<128x4xbf16>, vector<4x16xbf16>, vector<128x16xf32> -> vector<128x16xf32>
    %24 = arith.addf %20, %23 : vector<128x16xf32>
    %25 = vector.extract_strided_slice %2 {offsets = [5, 0], sizes = [128, 4], strides = [1, 1]} : vector<142x4xbf16> to vector<128x4xbf16>
    %26 = vector.extract_strided_slice %3 {offsets = [20, 0], sizes = [4, 16], strides = [1, 1]} : vector<60x16xbf16> to vector<4x16xbf16>
    %cst_9 = arith.constant dense<0.000000e+00> : vector<128x16xf32>
    %27 = tpu.matmul %25, %26, %cst_9 {dimension_numbers = #tpu.dot_dimension_numbers<[1], [0], [0], [1], [0, 0, 1, 1], [], []>} : vector<128x4xbf16>, vector<4x16xbf16>, vector<128x16xf32> -> vector<128x16xf32>
    %28 = arith.addf %24, %27 : vector<128x16xf32>
    %29 = vector.extract_strided_slice %2 {offsets = [6, 0], sizes = [128, 4], strides = [1, 1]} : vector<142x4xbf16> to vector<128x4xbf16>
    %30 = vector.extract_strided_slice %3 {offsets = [24, 0], sizes = [4, 16], strides = [1, 1]} : vector<60x16xbf16> to vector<4x16xbf16>
    %cst_10 = arith.constant dense<0.000000e+00> : vector<128x16xf32>
    %31 = tpu.matmul %29, %30, %cst_10 {dimension_numbers = #tpu.dot_dimension_numbers<[1], [0], [0], [1], [0, 0, 1, 1], [], []>} : vector<128x4xbf16>, vector<4x16xbf16>, vector<128x16xf32> -> vector<128x16xf32>
    %32 = arith.addf %28, %31 : vector<128x16xf32>
    %33 = vector.extract_strided_slice %2 {offsets = [7, 0], sizes = [128, 4], strides = [1, 1]} : vector<142x4xbf16> to vector<128x4xbf16>
    %34 = vector.extract_strided_slice %3 {offsets = [28, 0], sizes = [4, 16], strides = [1, 1]} : vector<60x16xbf16> to vector<4x16xbf16>
    %cst_11 = arith.constant dense<0.000000e+00> : vector<128x16xf32>
    %35 = tpu.matmul %33, %34, %cst_11 {dimension_numbers = #tpu.dot_dimension_numbers<[1], [0], [0], [1], [0, 0, 1, 1], [], []>} : vector<128x4xbf16>, vector<4x16xbf16>, vector<128x16xf32> -> vector<128x16xf32>
    %36 = arith.addf %32, %35 : vector<128x16xf32>
    %37 = vector.extract_strided_slice %2 {offsets = [8, 0], sizes = [128, 4], strides = [1, 1]} : vector<142x4xbf16> to vector<128x4xbf16>
    %38 = vector.extract_strided_slice %3 {offsets = [32, 0], sizes = [4, 16], strides = [1, 1]} : vector<60x16xbf16> to vector<4x16xbf16>
    %cst_12 = arith.constant dense<0.000000e+00> : vector<128x16xf32>
    %39 = tpu.matmul %37, %38, %cst_12 {dimension_numbers = #tpu.dot_dimension_numbers<[1], [0], [0], [1], [0, 0, 1, 1], [], []>} : vector<128x4xbf16>, vector<4x16xbf16>, vector<128x16xf32> -> vector<128x16xf32>
    %40 = arith.addf %36, %39 : vector<128x16xf32>
    %41 = vector.extract_strided_slice %2 {offsets = [9, 0], sizes = [128, 4], strides = [1, 1]} : vector<142x4xbf16> to vector<128x4xbf16>
    %42 = vector.extract_strided_slice %3 {offsets = [36, 0], sizes = [4, 16], strides = [1, 1]} : vector<60x16xbf16> to vector<4x16xbf16>
    %cst_13 = arith.constant dense<0.000000e+00> : vector<128x16xf32>
    %43 = tpu.matmul %41, %42, %cst_13 {dimension_numbers = #tpu.dot_dimension_numbers<[1], [0], [0], [1], [0, 0, 1, 1], [], []>} : vector<128x4xbf16>, vector<4x16xbf16>, vector<128x16xf32> -> vector<128x16xf32>
    %44 = arith.addf %40, %43 : vector<128x16xf32>
    %45 = vector.extract_strided_slice %2 {offsets = [10, 0], sizes = [128, 4], strides = [1, 1]} : vector<142x4xbf16> to vector<128x4xbf16>
    %46 = vector.extract_strided_slice %3 {offsets = [40, 0], sizes = [4, 16], strides = [1, 1]} : vector<60x16xbf16> to vector<4x16xbf16>
    %cst_14 = arith.constant dense<0.000000e+00> : vector<128x16xf32>
    %47 = tpu.matmul %45, %46, %cst_14 {dimension_numbers = #tpu.dot_dimension_numbers<[1], [0], [0], [1], [0, 0, 1, 1], [], []>} : vector<128x4xbf16>, vector<4x16xbf16>, vector<128x16xf32> -> vector<128x16xf32>
    %48 = arith.addf %44, %47 : vector<128x16xf32>
    %49 = vector.extract_strided_slice %2 {offsets = [11, 0], sizes = [128, 4], strides = [1, 1]} : vector<142x4xbf16> to vector<128x4xbf16>
    %50 = vector.extract_strided_slice %3 {offsets = [44, 0], sizes = [4, 16], strides = [1, 1]} : vector<60x16xbf16> to vector<4x16xbf16>
    %cst_15 = arith.constant dense<0.000000e+00> : vector<128x16xf32>
    %51 = tpu.matmul %49, %50, %cst_15 {dimension_numbers = #tpu.dot_dimension_numbers<[1], [0], [0], [1], [0, 0, 1, 1], [], []>} : vector<128x4xbf16>, vector<4x16xbf16>, vector<128x16xf32> -> vector<128x16xf32>
    %52 = arith.addf %48, %51 : vector<128x16xf32>
    %53 = vector.extract_strided_slice %2 {offsets = [12, 0], sizes = [128, 4], strides = [1, 1]} : vector<142x4xbf16> to vector<128x4xbf16>
    %54 = vector.extract_strided_slice %3 {offsets = [48, 0], sizes = [4, 16], strides = [1, 1]} : vector<60x16xbf16> to vector<4x16xbf16>
    %cst_16 = arith.constant dense<0.000000e+00> : vector<128x16xf32>
    %55 = tpu.matmul %53, %54, %cst_16 {dimension_numbers = #tpu.dot_dimension_numbers<[1], [0], [0], [1], [0, 0, 1, 1], [], []>} : vector<128x4xbf16>, vector<4x16xbf16>, vector<128x16xf32> -> vector<128x16xf32>
    %56 = arith.addf %52, %55 : vector<128x16xf32>
    %57 = vector.extract_strided_slice %2 {offsets = [13, 0], sizes = [128, 4], strides = [1, 1]} : vector<142x4xbf16> to vector<128x4xbf16>
    %58 = vector.extract_strided_slice %3 {offsets = [52, 0], sizes = [4, 16], strides = [1, 1]} : vector<60x16xbf16> to vector<4x16xbf16>
    %cst_17 = arith.constant dense<0.000000e+00> : vector<128x16xf32>
    %59 = tpu.matmul %57, %58, %cst_17 {dimension_numbers = #tpu.dot_dimension_numbers<[1], [0], [0], [1], [0, 0, 1, 1], [], []>} : vector<128x4xbf16>, vector<4x16xbf16>, vector<128x16xf32> -> vector<128x16xf32>
    %60 = arith.addf %56, %59 : vector<128x16xf32>
    %61 = vector.extract_strided_slice %2 {offsets = [14, 0], sizes = [128, 4], strides = [1, 1]} : vector<142x4xbf16> to vector<128x4xbf16>
    %62 = vector.extract_strided_slice %3 {offsets = [56, 0], sizes = [4, 16], strides = [1, 1]} : vector<60x16xbf16> to vector<4x16xbf16>
    %cst_18 = arith.constant dense<0.000000e+00> : vector<128x16xf32>
    %63 = tpu.matmul %61, %62, %cst_18 {dimension_numbers = #tpu.dot_dimension_numbers<[1], [0], [0], [1], [0, 0, 1, 1], [], []>} : vector<128x4xbf16>, vector<4x16xbf16>, vector<128x16xf32> -> vector<128x16xf32>
    %64 = arith.addf %60, %63 : vector<128x16xf32>
    %c0_19 = arith.constant 0 : index
    %c0_20 = arith.constant 0 : index
    %65 = vector.load %arg3[%c0_19, %c0_20] : memref<1x16xf32, #tpu.memory_space<vmem>>, vector<1x16xf32>
    %66 = vector.broadcast %65 : vector<1x16xf32> to vector<128x16xf32>
    %67 = arith.addf %64, %66 : vector<128x16xf32>
    %c0_21 = arith.constant 0 : index
    %c0_22 = arith.constant 0 : index
    %68 = vector.load %arg4[%c0_21, %c0_22] : memref<1x16xf32, #tpu.memory_space<vmem>>, vector<1x16xf32>
    %69 = vector.broadcast %68 : vector<1x16xf32> to vector<128x16xf32>
    %70 = arith.mulf %67, %69 : vector<128x16xf32>
    %c0_23 = arith.constant 0 : index
    %c0_24 = arith.constant 0 : index
    %71 = vector.load %arg5[%c0_23, %c0_24] : memref<1x16xf32, #tpu.memory_space<vmem>>, vector<1x16xf32>
    %72 = vector.broadcast %71 : vector<1x16xf32> to vector<128x16xf32>
    %73 = arith.addf %70, %72 : vector<128x16xf32>
    %cst_25 = arith.constant -1.702000e+00 : f32
    %74 = vector.broadcast %cst_25 : f32 to vector<128x16xf32>
    %75 = arith.mulf %74, %73 : vector<128x16xf32>
    %76 = math.exp %75 : vector<128x16xf32>
    %cst_26 = arith.constant 1.000000e+00 : f32
    %77 = vector.broadcast %cst_26 : f32 to vector<128x16xf32>
    %78 = arith.addf %77, %76 : vector<128x16xf32>
    %79 = arith.divf %73, %78 : vector<128x16xf32>
    %80 = arith.truncf %79 : vector<128x16xf32> to vector<128x16xbf16>
    %c0_27 = arith.constant 0 : index
    %c0_28 = arith.constant 0 : index
    %81 = vector.load %arg6[%c0_27, %c0_28] : memref<16x16xbf16, #tpu.memory_space<vmem>>, vector<16x16xbf16>
    %cst_29 = arith.constant dense<0.000000e+00> : vector<128x16xf32>
    %82 = tpu.matmul %80, %81, %cst_29 {dimension_numbers = #tpu.dot_dimension_numbers<[1], [0], [0], [1], [0, 0, 1, 1], [], []>} : vector<128x16xbf16>, vector<16x16xbf16>, vector<128x16xf32> -> vector<128x16xf32>
    %c0_30 = arith.constant 0 : index
    %c0_31 = arith.constant 0 : index
    %83 = vector.load %arg7[%c0_30, %c0_31] : memref<1x16xf32, #tpu.memory_space<vmem>>, vector<1x16xf32>
    %84 = vector.broadcast %83 : vector<1x16xf32> to vector<128x16xf32>
    %85 = arith.addf %82, %84 : vector<128x16xf32>
    %86 = arith.addf %67, %85 : vector<128x16xf32>
    %87 = arith.truncf %86 : vector<128x16xf32> to vector<128x16xbf16>
    %c0_32 = arith.constant 0 : index
    %c0_33 = arith.constant 0 : index
    %88 = vector.load %arg8[%c0_32, %c0_33] : memref<16x16xbf16, #tpu.memory_space<vmem>>, vector<16x16xbf16>
    %cst_34 = arith.constant dense<0.000000e+00> : vector<128x16xf32>
    %89 = tpu.matmul %87, %88, %cst_34 {dimension_numbers = #tpu.dot_dimension_numbers<[1], [0], [0], [1], [0, 0, 1, 1], [], []>} : vector<128x16xbf16>, vector<16x16xbf16>, vector<128x16xf32> -> vector<128x16xf32>
    %90 = tpu.iota {dimensions = array<i32: 0>} : vector<64x128xi32>
    %91 = tpu.iota {dimensions = array<i32: 1>} : vector<64x128xi32>
    %c2_i32 = arith.constant 2 : i32
    %92 = vector.broadcast %c2_i32 : i32 to vector<64x128xi32>
    %93 = arith.muli %92, %90 : vector<64x128xi32>
    %94 = arith.cmpi eq, %91, %93 : vector<64x128xi32>
    %95 = arith.extui %94 : vector<64x128xi1> to vector<64x128xi32>
    %96 = arith.sitofp %95 : vector<64x128xi32> to vector<64x128xf32>
    %c2_i32_35 = arith.constant 2 : i32
    %97 = vector.broadcast %c2_i32_35 : i32 to vector<64x128xi32>
    %98 = arith.muli %97, %90 : vector<64x128xi32>
    %c1_i32 = arith.constant 1 : i32
    %99 = vector.broadcast %c1_i32 : i32 to vector<64x128xi32>
    %100 = arith.addi %98, %99 : vector<64x128xi32>
    %101 = arith.cmpi eq, %91, %100 : vector<64x128xi32>
    %102 = arith.extui %101 : vector<64x128xi1> to vector<64x128xi32>
    %103 = arith.sitofp %102 : vector<64x128xi32> to vector<64x128xf32>
    %cst_36 = arith.constant dense<0.000000e+00> : vector<64x16xf32>
    %104 = tpu.matmul %96, %86, %cst_36 {dimension_numbers = #tpu.dot_dimension_numbers<[1], [0], [0], [1], [0, 0, 1, 1], [], []>} : vector<64x128xf32>, vector<128x16xf32>, vector<64x16xf32> -> vector<64x16xf32>
    %cst_37 = arith.constant dense<0.000000e+00> : vector<64x16xf32>
    %105 = tpu.matmul %103, %86, %cst_37 {dimension_numbers = #tpu.dot_dimension_numbers<[1], [0], [0], [1], [0, 0, 1, 1], [], []>} : vector<64x128xf32>, vector<128x16xf32>, vector<64x16xf32> -> vector<64x16xf32>
    %cst_38 = arith.constant dense<0.000000e+00> : vector<64x16xf32>
    %106 = tpu.matmul %96, %89, %cst_38 {dimension_numbers = #tpu.dot_dimension_numbers<[1], [0], [0], [1], [0, 0, 1, 1], [], []>} : vector<64x128xf32>, vector<128x16xf32>, vector<64x16xf32> -> vector<64x16xf32>
    %cst_39 = arith.constant dense<0.000000e+00> : vector<64x16xf32>
    %107 = tpu.matmul %103, %89, %cst_39 {dimension_numbers = #tpu.dot_dimension_numbers<[1], [0], [0], [1], [0, 0, 1, 1], [], []>} : vector<64x128xf32>, vector<128x16xf32>, vector<64x16xf32> -> vector<64x16xf32>
    %108 = arith.maximumf %106, %107 : vector<64x16xf32>
    %109 = arith.subf %106, %108 : vector<64x16xf32>
    %110 = math.exp %109 : vector<64x16xf32>
    %111 = arith.subf %107, %108 : vector<64x16xf32>
    %112 = math.exp %111 : vector<64x16xf32>
    %113 = arith.mulf %104, %110 : vector<64x16xf32>
    %114 = arith.mulf %105, %112 : vector<64x16xf32>
    %115 = arith.addf %113, %114 : vector<64x16xf32>
    %116 = arith.addf %110, %112 : vector<64x16xf32>
    %117 = tpu.reciprocal %116 {approx = true} : vector<64x16xf32> -> vector<64x16xf32>
    %118 = arith.mulf %115, %117 : vector<64x16xf32>
    %c0_40 = arith.constant 0 : index
    %c0_41 = arith.constant 0 : index
    %c0_42 = arith.constant 0 : index
    %119 = vector.load %arg9[%c0_40, %c0_41, %c0_42] : memref<1x64x16xf32, #tpu.memory_space<vmem>>, vector<1x64x16xf32>
    %120 = vector.shape_cast %119 : vector<1x64x16xf32> to vector<64x16xf32>
    %121 = vector.shape_cast %118 : vector<64x16xf32> to vector<1x64x16xf32>
    tpu.vector_store %arg9[%c0_40, %c0_41, %c0_42], %121 {strides = array<i32>} : memref<1x64x16xf32, #tpu.memory_space<vmem>>, vector<1x64x16xf32>,
    return
  }
  func.func @transform_0(%arg0: i32) -> (i32, i32, i32) {
    %c0_i32 = arith.constant 0 : i32
    %c0_i32_0 = arith.constant 0 : i32
    %c0_i32_1 = arith.constant 0 : i32
    return %arg0, %c0_i32, %c0_i32_0 : i32, i32, i32
  }
  func.func @transform_1(%arg0: i32) -> (i32, i32) {
    %c0_i32 = arith.constant 0 : i32
    %c0_i32_0 = arith.constant 0 : i32
    %c0_i32_1 = arith.constant 0 : i32
    return %c0_i32, %c0_i32_0 : i32, i32
  }
  func.func @transform_2(%arg0: i32) -> (i32, i32) {
    %c0_i32 = arith.constant 0 : i32
    %c0_i32_0 = arith.constant 0 : i32
    %c0_i32_1 = arith.constant 0 : i32
    return %c0_i32, %c0_i32_0 : i32, i32
  }
  func.func @transform_3(%arg0: i32) -> (i32, i32) {
    %c0_i32 = arith.constant 0 : i32
    %c0_i32_0 = arith.constant 0 : i32
    %c0_i32_1 = arith.constant 0 : i32
    return %c0_i32, %c0_i32_0 : i32, i32
  }
  func.func @transform_4(%arg0: i32) -> (i32, i32) {
    %c0_i32 = arith.constant 0 : i32
    %c0_i32_0 = arith.constant 0 : i32
    %c0_i32_1 = arith.constant 0 : i32
    return %c0_i32, %c0_i32_0 : i32, i32
  }
  func.func @transform_5(%arg0: i32) -> (i32, i32) {
    %c0_i32 = arith.constant 0 : i32
    %c0_i32_0 = arith.constant 0 : i32
    %c0_i32_1 = arith.constant 0 : i32
    return %c0_i32, %c0_i32_0 : i32, i32
  }
  func.func @transform_6(%arg0: i32) -> (i32, i32) {
    %c0_i32 = arith.constant 0 : i32
    %c0_i32_0 = arith.constant 0 : i32
    %c0_i32_1 = arith.constant 0 : i32
    return %c0_i32, %c0_i32_0 : i32, i32
  }
  func.func @transform_7(%arg0: i32) -> (i32, i32) {
    %c0_i32 = arith.constant 0 : i32
    %c0_i32_0 = arith.constant 0 : i32
    %c0_i32_1 = arith.constant 0 : i32
    return %c0_i32, %c0_i32_0 : i32, i32
  }
  func.func @transform_8(%arg0: i32) -> (i32, i32, i32) {
    %c0_i32 = arith.constant 0 : i32
    %c0_i32_0 = arith.constant 0 : i32
    %c0_i32_1 = arith.constant 0 : i32
    return %arg0, %c0_i32, %c0_i32_0 : i32, i32, i32
  }
}

</mosaic_0001>

<llo_original>
// kernel: tpu_custom_call.1
$region0: #{tpu_custom_call.1}
  #allocation0 [shape = 'u32[]', space=smem, size = 0x4, offset = 0x4, fixed_abs, tag = 'smem constant byte address 0x4 - core index']
  #allocation1 [shape = 'u32[72,128]{1,0:T(1,128)}', space=vmem, size = 0x9000, scoped, tag = 'internal scratch']
  %s0 = inlined_call_operand.vmem [shape: f32[2,142,4], index: 0, kind: input, shape index: {}]
  %s1 = inlined_call_operand.vmem [shape: bf16[60,16], index: 1, kind: input, shape index: {}]
  %s2 = inlined_call_operand.vmem [shape: f32[1,16], index: 2, kind: input, shape index: {}]
  %s3 = inlined_call_operand.vmem [shape: f32[1,16], index: 3, kind: input, shape index: {}]
  %s4 = inlined_call_operand.vmem [shape: f32[1,16], index: 4, kind: input, shape index: {}]
  %s5 = inlined_call_operand.vmem [shape: bf16[16,16], index: 5, kind: input, shape index: {}]
  %s6 = inlined_call_operand.vmem [shape: f32[1,16], index: 6, kind: input, shape index: {}]
  %s7 = inlined_call_operand.vmem [shape: bf16[16,16], index: 7, kind: input, shape index: {}]
  %s8 = inlined_call_operand.vmem [shape: f32[2,64,16], index: 8, kind: output, shape index: {}]
  %s9 = sld [smem:[#allocation0]]
  $region65: #{tpu_custom_call.1} parent=0
    _
  %s11 = ssub.s32 1, %s9
  %s12 = scalar_select 0, %s11, %s9
  loop: start=0, step=1, limit=4
  $region2: #{tpu_custom_call.1} parent=0 // loop_pre_header
    _
  $region3: #{tpu_custom_call.1} parent=0 // loop_header
    %s14 = sphi 0, %s18
    %p15 = scmp.ge.s32.totalorder %s14, 4
    %s24 = sphi 0, %s26
    %s27 = sphi 0, %s24
    %s28 = sphi 0, %s27
    %s44 = sphi 0, %s28
    %s48 = sphi 0, %s48
    %s50 = sphi 0, %s48
    %s51 = sphi 0, %s50
    %s65 = sphi 0, %s51
    %s69 = sphi 0, %s69
    %s71 = sphi 0, %s69
    %s72 = sphi 0, %s71
    %s86 = sphi 0, %s72
    %s90 = sphi 0, %s90
    %s92 = sphi 0, %s90
    %s93 = sphi 0, %s92
    %s107 = sphi 0, %s93
    %s111 = sphi 0, %s111
    %s113 = sphi 0, %s111
    %s114 = sphi 0, %s113
    %s128 = sphi 0, %s114
    %s132 = sphi 0, %s132
    %s134 = sphi 0, %s132
    %s135 = sphi 0, %s134
    %s149 = sphi 0, %s135
    %s153 = sphi 0, %s153
    %s155 = sphi 0, %s153
    %s156 = sphi 0, %s155
    %s170 = sphi 0, %s156
    %s174 = sphi 0, %s174
    %s176 = sphi 0, %s174
    %s177 = sphi 0, %s176
    %s191 = sphi 0, %s177
    %s197 = sphi 0, %s199
    %s200 = sphi 0, %s197
    %s201 = sphi 0, %s200
    %s217 = sphi 0, %s201
  $region4: #{tpu_custom_call.1} parent=0 // loop_header_branch
    %17 = sbr.rel (%p15) target = $region8
  $region5: #{tpu_custom_call.1} parent=0 // loop_body
    %s19 = ssub.s32 %s14, 1
    %s20 = ssub.s32 %s14, 2
    %s21 = sadd.s32 %s14, 1
    %s22 = ssub.s32 %s14, %s21
    %p23 = scmp.eq.s32.totalorder %s22, 0
    %s25 = sadd.s32 %s24, 1
    %s26 = scalar_select %p23, %s24, %s25
    %p29 = pneg %p23
    %p30 = scmp.eq.s32.totalorder %s14, 1
    %p31 = por %p29, %p30
    %p32 = scmp.ne.s32.totalorder %s24, %s27
    %p33 = scmp.eq.s32.totalorder %s14, 0
    %p34 = por %p32, %p33
    %p35 = scmp.ne.s32.totalorder %s24, %s27
    %p36 = scmp.eq.s32.totalorder %s19, 1
    %p37 = por %p35, %p36
    %p38 = scmp.ne.s32.totalorder %s27, %s28
    %p39 = scmp.eq.s32.totalorder %s19, 0
    %p40 = por %p38, %p39
    %p41 = scmp.ne.s32.totalorder %s27, %s28
    %p42 = scmp.eq.s32.totalorder %s20, 1
    %p43 = por %p41, %p42
    %p45 = scmp.ne.s32.totalorder %s28, %s44
    %p46 = scmp.eq.s32.totalorder %s20, 0
    %p47 = por %p45, %p46
    %s49 = sadd.s32 %s48, 1
    %p52 = scmp.eq.s32.totalorder %s14, 1
    %p53 = scmp.ne.s32.totalorder %s48, %s50
    %p54 = scmp.eq.s32.totalorder %s14, 0
    %p55 = por %p53, %p54
    %p56 = scmp.ne.s32.totalorder %s48, %s50
    %p57 = scmp.eq.s32.totalorder %s19, 1
    %p58 = por %p56, %p57
    %p59 = scmp.ne.s32.totalorder %s50, %s51
    %p60 = scmp.eq.s32.totalorder %s19, 0
    %p61 = por %p59, %p60
    %p62 = scmp.ne.s32.totalorder %s50, %s51
    %p63 = scmp.eq.s32.totalorder %s20, 1
    %p64 = por %p62, %p63
    %p66 = scmp.ne.s32.totalorder %s51, %s65
    %p67 = scmp.eq.s32.totalorder %s20, 0
    %p68 = por %p66, %p67
    %s70 = sadd.s32 %s69, 1
    %p73 = scmp.eq.s32.totalorder %s14, 1
    %p74 = scmp.ne.s32.totalorder %s69, %s71
    %p75 = scmp.eq.s32.totalorder %s14, 0
    %p76 = por %p74, %p75
    %p77 = scmp.ne.s32.totalorder %s69, %s71
    %p78 = scmp.eq.s32.totalorder %s19, 1
    %p79 = por %p77, %p78
    %p80 = scmp.ne.s32.totalorder %s71, %s72
    %p81 = scmp.eq.s32.totalorder %s19, 0
    %p82 = por %p80, %p81
    %p83 = scmp.ne.s32.totalorder %s71, %s72
    %p84 = scmp.eq.s32.totalorder %s20, 1
    %p85 = por %p83, %p84
    %p87 = scmp.ne.s32.totalorder %s72, %s86
    %p88 = scmp.eq.s32.totalorder %s20, 0
    %p89 = por %p87, %p88
    %s91 = sadd.s32 %s90, 1
    %p94 = scmp.eq.s32.totalorder %s14, 1
    %p95 = scmp.ne.s32.totalorder %s90, %s92
    %p96 = scmp.eq.s32.totalorder %s14, 0
    %p97 = por %p95, %p96
    %p98 = scmp.ne.s32.totalorder %s90, %s92
    %p99 = scmp.eq.s32.totalorder %s19, 1
    %p100 = por %p98, %p99
    %p101 = scmp.ne.s32.totalorder %s92, %s93
    %p102 = scmp.eq.s32.totalorder %s19, 0
    %p103 = por %p101, %p102
    %p104 = scmp.ne.s32.totalorder %s92, %s93
    %p105 = scmp.eq.s32.totalorder %s20, 1
    %p106 = por %p104, %p105
    %p108 = scmp.ne.s32.totalorder %s93, %s107
    %p109 = scmp.eq.s32.totalorder %s20, 0
    %p110 = por %p108, %p109
    %s112 = sadd.s32 %s111, 1
    %p115 = scmp.eq.s32.totalorder %s14, 1
    %p116 = scmp.ne.s32.totalorder %s111, %s113
    %p117 = scmp.eq.s32.totalorder %s14, 0
    %p118 = por %p116, %p117
    %p119 = scmp.ne.s32.totalorder %s111, %s113
    %p120 = scmp.eq.s32.totalorder %s19, 1
    %p121 = por %p119, %p120
    %p122 = scmp.ne.s32.totalorder %s113, %s114
    %p123 = scmp.eq.s32.totalorder %s19, 0
    %p124 = por %p122, %p123
    %p125 = scmp.ne.s32.totalorder %s113, %s114
    %p126 = scmp.eq.s32.totalorder %s20, 1
    %p127 = por %p125, %p126
    %p129 = scmp.ne.s32.totalorder %s114, %s128
    %p130 = scmp.eq.s32.totalorder %s20, 0
    %p131 = por %p129, %p130
    %s133 = sadd.s32 %s132, 1
    %p136 = scmp.eq.s32.totalorder %s14, 1
    %p137 = scmp.ne.s32.totalorder %s132, %s134
    %p138 = scmp.eq.s32.totalorder %s14, 0
    %p139 = por %p137, %p138
    %p140 = scmp.ne.s32.totalorder %s132, %s134
    %p141 = scmp.eq.s32.totalorder %s19, 1
    %p142 = por %p140, %p141
    %p143 = scmp.ne.s32.totalorder %s134, %s135
    %p144 = scmp.eq.s32.totalorder %s19, 0
    %p145 = por %p143, %p144
    %p146 = scmp.ne.s32.totalorder %s134, %s135
    %p147 = scmp.eq.s32.totalorder %s20, 1
    %p148 = por %p146, %p147
    %p150 = scmp.ne.s32.totalorder %s135, %s149
    %p151 = scmp.eq.s32.totalorder %s20, 0
    %p152 = por %p150, %p151
    %s154 = sadd.s32 %s153, 1
    %p157 = scmp.eq.s32.totalorder %s14, 1
    %p158 = scmp.ne.s32.totalorder %s153, %s155
    %p159 = scmp.eq.s32.totalorder %s14, 0
    %p160 = por %p158, %p159
    %p161 = scmp.ne.s32.totalorder %s153, %s155
    %p162 = scmp.eq.s32.totalorder %s19, 1
    %p163 = por %p161, %p162
    %p164 = scmp.ne.s32.totalorder %s155, %s156
    %p165 = scmp.eq.s32.totalorder %s19, 0
    %p166 = por %p164, %p165
    %p167 = scmp.ne.s32.totalorder %s155, %s156
    %p168 = scmp.eq.s32.totalorder %s20, 1
    %p169 = por %p167, %p168
    %p171 = scmp.ne.s32.totalorder %s156, %s170
    %p172 = scmp.eq.s32.totalorder %s20, 0
    %p173 = por %p171, %p172
    %s175 = sadd.s32 %s174, 1
    %p178 = scmp.eq.s32.totalorder %s14, 1
    %p179 = scmp.ne.s32.totalorder %s174, %s176
    %p180 = scmp.eq.s32.totalorder %s14, 0
    %p181 = por %p179, %p180
    %p182 = scmp.ne.s32.totalorder %s174, %s176
    %p183 = scmp.eq.s32.totalorder %s19, 1
    %p184 = por %p182, %p183
    %p185 = scmp.ne.s32.totalorder %s176, %s177
    %p186 = scmp.eq.s32.totalorder %s19, 0
    %p187 = por %p185, %p186
    %p188 = scmp.ne.s32.totalorder %s176, %s177
    %p189 = scmp.eq.s32.totalorder %s20, 1
    %p190 = por %p188, %p189
    %p192 = scmp.ne.s32.totalorder %s177, %s191
    %p193 = scmp.eq.s32.totalorder %s20, 0
    %p194 = por %p192, %p193
    %s195 = ssub.s32 %s14, %s21
    %p196 = scmp.eq.s32.totalorder %s195, 0
    %s198 = sadd.s32 %s197, 1
    %s199 = scalar_select %p196, %s197, %s198
    %p202 = pneg %p196
    %p203 = scmp.eq.s32.totalorder %s14, 1
    %p204 = por %p202, %p203
    %p205 = scmp.ne.s32.totalorder %s197, %s200
    %p206 = scmp.eq.s32.totalorder %s14, 0
    %p207 = por %p205, %p206
    %p208 = scmp.ne.s32.totalorder %s197, %s200
    %p209 = scmp.eq.s32.totalorder %s19, 1
    %p210 = por %p208, %p209
    %p211 = scmp.ne.s32.totalorder %s200, %s201
    %p212 = scmp.eq.s32.totalorder %s19, 0
    %p213 = por %p211, %p212
    %p214 = scmp.ne.s32.totalorder %s200, %s201
    %p215 = scmp.eq.s32.totalorder %s20, 1
    %p216 = por %p214, %p215
    %p218 = scmp.ne.s32.totalorder %s201, %s217
    %p219 = scmp.eq.s32.totalorder %s20, 0
    %p220 = por %p218, %p219
    %p221 = scmp.le.s32.totalorder 1, %s14
    %p222 = scmp.lt.s32.totalorder %s14, 3
    %p223 = pnand %p221, %p222
    %p224 = pneg %p223
    // Predicated region
    $region9: #{tpu_custom_call.1} parent=5 // pred_check
      _
    $region10: #{tpu_custom_call.1} parent=5 // pred_check_branch
      %226 = sbr.rel (%p223) target = $region12
    $region11: #{tpu_custom_call.1} parent=5 // pred_region
      %s227 = ssub.s32 %s14, 1
      // Predicated region
      $region13: #{tpu_custom_call.1} parent=11 // pred_check
        %p228 = pneg %p61
      $region14: #{tpu_custom_call.1} parent=11 // pred_check_branch
        %230 = sbr.rel (%p228) target = $region16
      $region15: #{tpu_custom_call.1} parent=11 // pred_region
        _
      $region16: #{tpu_custom_call.1} parent=11 // pred_fallthru
        _
      // Predicated region
      $region17: #{tpu_custom_call.1} parent=11 // pred_check
        %p231 = pneg %p82
      $region18: #{tpu_custom_call.1} parent=11 // pred_check_branch
        %233 = sbr.rel (%p231) target = $region20
      $region19: #{tpu_custom_call.1} parent=11 // pred_region
        _
      $region20: #{tpu_custom_call.1} parent=11 // pred_fallthru
        _
      // Predicated region
      $region21: #{tpu_custom_call.1} parent=11 // pred_check
        %p234 = pneg %p103
      $region22: #{tpu_custom_call.1} parent=11 // pred_check_branch
        %236 = sbr.rel (%p234) target = $region24
      $region23: #{tpu_custom_call.1} parent=11 // pred_region
        _
      $region24: #{tpu_custom_call.1} parent=11 // pred_fallthru
        _
      // Predicated region
      $region25: #{tpu_custom_call.1} parent=11 // pred_check
        %p237 = pneg %p124
      $region26: #{tpu_custom_call.1} parent=11 // pred_check_branch
        %239 = sbr.rel (%p237) target = $region28
      $region27: #{tpu_custom_call.1} parent=11 // pred_region
        _
      $region28: #{tpu_custom_call.1} parent=11 // pred_fallthru
        _
      // Predicated region
      $region29: #{tpu_custom_call.1} parent=11 // pred_check
        %p240 = pneg %p145
      $region30: #{tpu_custom_call.1} parent=11 // pred_check_branch
        %242 = sbr.rel (%p240) target = $region32
      $region31: #{tpu_custom_call.1} parent=11 // pred_region
        _
      $region32: #{tpu_custom_call.1} parent=11 // pred_fallthru
        _
      // Predicated region
      $region33: #{tpu_custom_call.1} parent=11 // pred_check
        %p243 = pneg %p166
      $region34: #{tpu_custom_call.1} parent=11 // pred_check_branch
        %245 = sbr.rel (%p243) target = $region36
      $region35: #{tpu_custom_call.1} parent=11 // pred_region
        _
      $region36: #{tpu_custom_call.1} parent=11 // pred_fallthru
        _
      // Predicated region
      $region37: #{tpu_custom_call.1} parent=11 // pred_check
        %p246 = pneg %p187
      $region38: #{tpu_custom_call.1} parent=11 // pred_check_branch
        %248 = sbr.rel (%p246) target = $region40
      $region39: #{tpu_custom_call.1} parent=11 // pred_region
        _
      $region40: #{tpu_custom_call.1} parent=11 // pred_fallthru
        _
    $region12: #{tpu_custom_call.1} parent=5 // pred_fallthru
      _
    %p249 = scmp.lt.s32.totalorder %s14, 2
    // Predicated region
    $region41: #{tpu_custom_call.1} parent=5 // pred_check
      %p250 = pneg %p249
    $region42: #{tpu_custom_call.1} parent=5 // pred_check_branch
      %252 = sbr.rel (%p250) target = $region44
    $region43: #{tpu_custom_call.1} parent=5 // pred_region
      // Predicated region
      $region45: #{tpu_custom_call.1} parent=43 // pred_check
        %p253 = pneg %p34
      $region46: #{tpu_custom_call.1} parent=43 // pred_check_branch
        %255 = sbr.rel (%p253) target = $region48
      $region47: #{tpu_custom_call.1} parent=43 // pred_region
        %p256 = scmp.lt.s32.totalorder %s14, 1
        %s257 = scalar_select %p256, %s14, 1
        %s258 = smul.addr %s257, 18
        %s259 = smul.addr %s258, 8
        %s260 = scalar_lea.vmem %s0, %s259
      $region48: #{tpu_custom_call.1} parent=43 // pred_fallthru
        _
    $region44: #{tpu_custom_call.1} parent=5 // pred_fallthru
      _
    %p261 = scmp.le.s32.totalorder 1, %s14
    %p262 = scmp.lt.s32.totalorder %s14, 3
    %p263 = pnand %p261, %p262
    %p264 = pneg %p263
    // Predicated region
    $region49: #{tpu_custom_call.1} parent=5 // pred_check
      _
    $region50: #{tpu_custom_call.1} parent=5 // pred_check_branch
      %266 = sbr.rel (%p263) target = $region52
    $region51: #{tpu_custom_call.1} parent=5 // pred_region
      %s267 = ssub.s32 %s14, 1
      %p268 = scmp.lt.s32.totalorder %s19, 1
      %s269 = scalar_select %p268, %s19, 1
      %s270 = smul.addr %s269, 18
      %s271 = smul.addr %s270, 8
      %s272 = scalar_lea.vmem %s0, %s271
      %p273 = pneg %p40
      %p274 = pneg %p37
      %p275 = pneg %p61
      %p276 = pneg %p58
      %p277 = pneg %p82
      %p278 = pneg %p79
      %p279 = pneg %p103
      %p280 = pneg %p100
      %p281 = pneg %p124
      %p282 = pneg %p121
      %p283 = pneg %p145
      %p284 = pneg %p142
      %p285 = pneg %p166
      %p286 = pneg %p163
      %p287 = pneg %p187
      %p288 = pneg %p184
      %p289 = pneg %p213
      %p290 = pneg %p210
      %p291 = scmp.lt.s32.totalorder %s19, 1
      %s292 = scalar_select %p291, %s19, 1
      %s293 = smul.addr %s292, 8
      %s294 = smul.addr %s293, 8
      %s295 = scalar_lea.vmem %s8, %s294
      %p296 = scmp.lt.s32.totalorder %s19, 1
      %s297 = scalar_select %p296, %s19, 1
      %s298 = smul.addr %s297, 18
      %s299 = smul.addr %s298, 8
      %s300 = scalar_lea.vmem %s0, %s299
      %p301 = scmp.lt.s32.totalorder %s19, 1
      %s302 = scalar_select %p301, %s19, 1
      %s303 = smul.addr %s302, 8
      %s304 = smul.addr %s303, 8
      %s305 = scalar_lea.vmem %s8, %s304
      %v307 = vld [vmem:[%s300] sm:$0xff]
      %v308 = vld [vmem:[%s300 + $0x8] sm:$0xff]
      %v309 = vld [vmem:[%s300 + $0x10] sm:$0xff]
      %v310 = vld [vmem:[%s300 + $0x18] sm:$0xff]
      %v311 = vld [vmem:[%s300 + $0x20] sm:$0xff]
      %v312 = vld [vmem:[%s300 + $0x28] sm:$0xff]
      %v313 = vld [vmem:[%s300 + $0x30] sm:$0xff]
      %v314 = vld [vmem:[%s300 + $0x38] sm:$0xff]
      %v315 = vld [vmem:[%s300 + $0x40] sm:$0xff]
      %v316 = vld [vmem:[%s300 + $0x48] sm:$0xff]
      %v317 = vld [vmem:[%s300 + $0x50] sm:$0xff]
      %v318 = vld [vmem:[%s300 + $0x58] sm:$0xff]
      %v319 = vld [vmem:[%s300 + $0x60] sm:$0xff]
      %v320 = vld [vmem:[%s300 + $0x68] sm:$0xff]
      %v321 = vld [vmem:[%s300 + $0x70] sm:$0xff]
      %v322 = vld [vmem:[%s300 + $0x78] sm:$0xff]
      %v323 = vld [vmem:[%s300 + $0x80] sm:$0xff]
      %v324 = vld [vmem:[%s300 + $0x88] sm:$0x3f]
      %v325 = vpack.c.bf16 %v307, %v307
      %v326 = vpack.c.bf16 %v308, %v308
      %v327 = vpack.c.bf16 %v309, %v309
      %v328 = vpack.c.bf16 %v310, %v310
      %v329 = vpack.c.bf16 %v311, %v311
      %v330 = vpack.c.bf16 %v312, %v312
      %v331 = vpack.c.bf16 %v313, %v313
      %v332 = vpack.c.bf16 %v314, %v314
      %v333 = vpack.c.bf16 %v315, %v315
      %v334 = vpack.c.bf16 %v316, %v316
      %v335 = vpack.c.bf16 %v317, %v317
      %v336 = vpack.c.bf16 %v318, %v318
      %v337 = vpack.c.bf16 %v319, %v319
      %v338 = vpack.c.bf16 %v320, %v320
      %v339 = vpack.c.bf16 %v321, %v321
      %v340 = vpack.c.bf16 %v322, %v322
      %v341 = vpack.c.bf16 %v323, %v323
      %v342 = vpack.c.bf16 %v324, %v324
      %v343 = vld [vmem:[%s1] sm:$0xf]
      %v344 = vld [vmem:[%s1 + $0x4] sm:$0xf]
      %v345 = vld [vmem:[%s1 + $0x8] sm:$0xf]
      %v346 = vld [vmem:[%s1 + $0xc] sm:$0xf]
      %v347 = vld [vmem:[%s1 + $0x10] sm:$0xf]
      %v348 = vld [vmem:[%s1 + $0x14] sm:$0xf]
      %v349 = vld [vmem:[%s1 + $0x18] sm:$0xf]
      %v350 = vld [vmem:[%s1 + $0x1c] sm:$0x3]
      %v368 = vunpack.c.l.b16 %v325
      %v369 = vunpack.c.l.b16 %v326
      %v370 = vunpack.c.l.b16 %v327
      %v371 = vunpack.c.l.b16 %v328
      %v372 = vunpack.c.l.b16 %v329
      %v373 = vunpack.c.l.b16 %v330
      %v374 = vunpack.c.l.b16 %v331
      %v375 = vunpack.c.l.b16 %v332
      %v376 = vunpack.c.l.b16 %v333
      %v377 = vunpack.c.l.b16 %v334
      %v378 = vunpack.c.l.b16 %v335
      %v379 = vunpack.c.l.b16 %v336
      %v380 = vunpack.c.l.b16 %v337
      %v381 = vunpack.c.l.b16 %v338
      %v382 = vunpack.c.l.b16 %v339
      %v383 = vunpack.c.l.b16 %v340
      %v384 = vunpack.c.l.b16 %v341
      %v385 = vpack.c.b16 %v369, %v368
      %v386 = vpack.c.b16 %v371, %v370
      %v387 = vpack.c.b16 %v373, %v372
      %v388 = vpack.c.b16 %v375, %v374
      %v389 = vpack.c.b16 %v377, %v376
      %v390 = vpack.c.b16 %v379, %v378
      %v391 = vpack.c.b16 %v381, %v380
      %v392 = vpack.c.b16 %v383, %v382
      %v393 = vpack.c.b16 %v384, %v384
      %vm394 = vsmask.f32 7424
      %v396 = vshrl.u32 %v385, 16
      %v398 = vshll.u32 %v385, 16
      %v400 = vrot.slane %v398, 1
      %v401 = vor.u32 %v396, %v400
      %v403 = vshll.u32 %v386, 16
      %v405 = vrot.slane %v403, 1
      %v406 = vsel %vm394, %v401, %v405
      %v407 = vshrl.u32 %v386, 16
      %v409 = vor.u32 %v407, %v405
      %v411 = vshll.u32 %v387, 16
      %v413 = vrot.slane %v411, 1
      %v414 = vsel %vm394, %v409, %v413
      %v415 = vshrl.u32 %v387, 16
      %v417 = vor.u32 %v415, %v413
      %v419 = vshll.u32 %v388, 16
      %v421 = vrot.slane %v419, 1
      %v422 = vsel %vm394, %v417, %v421
      %v423 = vshrl.u32 %v388, 16
      %v425 = vor.u32 %v423, %v421
      %v427 = vshll.u32 %v389, 16
      %v429 = vrot.slane %v427, 1
      %v430 = vsel %vm394, %v425, %v429
      %v431 = vshrl.u32 %v389, 16
      %v433 = vor.u32 %v431, %v429
      %v435 = vshll.u32 %v390, 16
      %v437 = vrot.slane %v435, 1
      %v438 = vsel %vm394, %v433, %v437
      %v439 = vshrl.u32 %v390, 16
      %v441 = vor.u32 %v439, %v437
      %v443 = vshll.u32 %v391, 16
      %v445 = vrot.slane %v443, 1
      %v446 = vsel %vm394, %v441, %v445
      %v447 = vshrl.u32 %v391, 16
      %v449 = vor.u32 %v447, %v445
      %v451 = vshll.u32 %v392, 16
      %v453 = vrot.slane %v451, 1
      %v454 = vsel %vm394, %v449, %v453
      %v455 = vshrl.u32 %v392, 16
      %v457 = vor.u32 %v455, %v453
      %v459 = vshll.u32 %v393, 16
      %v461 = vrot.slane %v459, 1
      %v462 = vsel %vm394, %v457, %v461
      %v464 = vunpack.c.l.b16 %v343
      %v465 = vpack.c.b16 %v464, %v464
      %v466 = vrot.slane %v465, 2
      %vm467 = vcmask 31744
      %v469 = vsel %vm467, %v406, 0
      %v472 = vsel %vm467, %v414, 0
      %v475 = vsel %vm467, %v422, 0
      %v478 = vsel %vm467, %v430, 0
      %v481 = vsel %vm467, %v438, 0
      %v484 = vsel %vm467, %v446, 0
      %v487 = vsel %vm467, %v454, 0
      %v490 = vsel %vm467, %v462, 0
      %vm492 = vcmask 1041408
      %v494 = vsel %vm492, %v466, 0
      %496 = vmatpush.bf16.msra.mxu0 0
      %497 = vmatpush.bf16.msra.mxu0 0
      %498 = vmatpush.bf16.msra.mxu0 0
      %499 = vmatpush.bf16.msra.mxu0 0
      %500 = vmatpush.bf16.msra.mxu0 0
      %501 = vmatpush.bf16.msra.mxu0 0
      %502 = vmatpush.bf16.msra.mxu0 0
      %503 = vmatpush.bf16.msra.mxu0 %v494
      %504 = vmatmul.bf16.gmra.mxu0 %v469
      %v505 = vpop.f32.mrf.mxu0
      %v506 = vadd.f32 0.0, %v505
      %v507 = vpop.f32.mrf.mxu0
      %v508 = vadd.f32 0.0, %v507
      %509 = vmatmul.bf16.gmra.mxu0 %v472
      %v510 = vpop.f32.mrf.mxu0
      %v511 = vadd.f32 0.0, %v510
      %v512 = vpop.f32.mrf.mxu0
      %v513 = vadd.f32 0.0, %v512
      %514 = vmatmul.bf16.gmra.mxu0 %v475
      %v515 = vpop.f32.mrf.mxu0
      %v516 = vadd.f32 0.0, %v515
      %v517 = vpop.f32.mrf.mxu0
      %v518 = vadd.f32 0.0, %v517
      %519 = vmatmul.bf16.gmra.mxu0 %v478
      %v520 = vpop.f32.mrf.mxu0
      %v521 = vadd.f32 0.0, %v520
      %v522 = vpop.f32.mrf.mxu0
      %v523 = vadd.f32 0.0, %v522
      %524 = vmatmul.bf16.gmra.mxu0 %v481
      %v525 = vpop.f32.mrf.mxu0
      %v526 = vadd.f32 0.0, %v525
      %v527 = vpop.f32.mrf.mxu0
      %v528 = vadd.f32 0.0, %v527
      %529 = vmatmul.bf16.gmra.mxu0 %v484
      %v530 = vpop.f32.mrf.mxu0
      %v531 = vadd.f32 0.0, %v530
      %v532 = vpop.f32.mrf.mxu0
      %v533 = vadd.f32 0.0, %v532
      %534 = vmatmul.bf16.gmra.mxu0 %v487
      %v535 = vpop.f32.mrf.mxu0
      %v536 = vadd.f32 0.0, %v535
      %v537 = vpop.f32.mrf.mxu0
      %v538 = vadd.f32 0.0, %v537
      %539 = vmatmul.bf16.gmra.mxu0 %v490
      %v540 = vpop.f32.mrf.mxu0
      %v541 = vadd.f32 0.0, %v540
      %v542 = vpop.f32.mrf.mxu0
      %v543 = vadd.f32 0.0, %v542
      %544 = vdwg.mxu0
      %v545 = vsel %vm467, %v385, 0
      %v547 = vsel %vm467, %v386, 0
      %v549 = vsel %vm467, %v387, 0
      %v551 = vsel %vm467, %v388, 0
      %v553 = vsel %vm467, %v389, 0
      %v555 = vsel %vm467, %v390, 0
      %v557 = vsel %vm467, %v391, 0
      %v559 = vsel %vm467, %v392, 0
      %v562 = vsel %vm492, %v343, 0
      %564 = vmatpush.bf16.msra.mxu0 0
      %565 = vmatpush.bf16.msra.mxu0 0
      %566 = vmatpush.bf16.msra.mxu0 0
      %567 = vmatpush.bf16.msra.mxu0 0
      %568 = vmatpush.bf16.msra.mxu0 0
      %569 = vmatpush.bf16.msra.mxu0 0
      %570 = vmatpush.bf16.msra.mxu0 0
      %571 = vmatpush.bf16.msra.mxu0 %v562
      %572 = vmatmul.bf16.gmra.mxu0 %v545
      %v573 = vpop.f32.mrf.mxu0
      %v574 = vadd.f32 %v506, %v573
      %v575 = vpop.f32.mrf.mxu0
      %v576 = vadd.f32 %v508, %v575
      %577 = vmatmul.bf16.gmra.mxu0 %v547
      %v578 = vpop.f32.mrf.mxu0
      %v579 = vadd.f32 %v511, %v578
      %v580 = vpop.f32.mrf.mxu0
      %v581 = vadd.f32 %v513, %v580
      %582 = vmatmul.bf16.gmra.mxu0 %v549
      %v583 = vpop.f32.mrf.mxu0
      %v584 = vadd.f32 %v516, %v583
      %v585 = vpop.f32.mrf.mxu0
      %v586 = vadd.f32 %v518, %v585
      %587 = vmatmul.bf16.gmra.mxu0 %v551
      %v588 = vpop.f32.mrf.mxu0
      %v589 = vadd.f32 %v521, %v588
      %v590 = vpop.f32.mrf.mxu0
      %v591 = vadd.f32 %v523, %v590
      %592 = vmatmul.bf16.gmra.mxu0 %v553
      %v593 = vpop.f32.mrf.mxu0
      %v594 = vadd.f32 %v526, %v593
      %v595 = vpop.f32.mrf.mxu0
      %v596 = vadd.f32 %v528, %v595
      %597 = vmatmul.bf16.gmra.mxu0 %v555
      %v598 = vpop.f32.mrf.mxu0
      %v599 = vadd.f32 %v531, %v598
      %v600 = vpop.f32.mrf.mxu0
      %v601 = vadd.f32 %v533, %v600
      %602 = vmatmul.bf16.gmra.mxu0 %v557
      %v603 = vpop.f32.mrf.mxu0
      %v604 = vadd.f32 %v536, %v603
      %v605 = vpop.f32.mrf.mxu0
      %v606 = vadd.f32 %v538, %v605
      %607 = vmatmul.bf16.gmra.mxu0 %v559
      %v608 = vpop.f32.mrf.mxu0
      %v609 = vadd.f32 %v541, %v608
      %v610 = vpop.f32.mrf.mxu0
      %v611 = vadd.f32 %v543, %v610
      %612 = vdwg.mxu0
      %vm613 = vcmask 1046528
      %v614 = vrot.slane %v385, 1
      %v615 = vrot.slane %v386, 1
      %v616 = vsel %vm613, %v614, %v615
      %v617 = vrot.slane %v387, 1
      %v618 = vsel %vm613, %v615, %v617
      %v619 = vrot.slane %v388, 1
      %v620 = vsel %vm613, %v617, %v619
      %v621 = vrot.slane %v389, 1
      %v622 = vsel %vm613, %v619, %v621
      %v623 = vrot.slane %v390, 1
      %v624 = vsel %vm613, %v621, %v623
      %v625 = vrot.slane %v391, 1
      %v626 = vsel %vm613, %v623, %v625
      %v627 = vrot.slane %v392, 1
      %v628 = vsel %vm613, %v625, %v627
      %v629 = vrot.slane %v393, 1
      %v630 = vsel %vm613, %v627, %v629
      %v632 = vsel %vm467, %v616, 0
      %v635 = vsel %vm467, %v618, 0
      %v638 = vsel %vm467, %v620, 0
      %v641 = vsel %vm467, %v622, 0
      %v644 = vsel %vm467, %v624, 0
      %v647 = vsel %vm467, %v626, 0
      %v650 = vsel %vm467, %v628, 0
      %v653 = vsel %vm467, %v630, 0
      %v656 = vsel %vm492, %v344, 0
      %658 = vmatpush.bf16.msra.mxu0 0
      %659 = vmatpush.bf16.msra.mxu0 0
      %660 = vmatpush.bf16.msra.mxu0 0
      %661 = vmatpush.bf16.msra.mxu0 0
      %662 = vmatpush.bf16.msra.mxu0 0
      %663 = vmatpush.bf16.msra.mxu0 0
      %664 = vmatpush.bf16.msra.mxu0 0
      %665 = vmatpush.bf16.msra.mxu0 %v656
      %666 = vmatmul.bf16.gmra.mxu0 %v632
      %v667 = vpop.f32.mrf.mxu0
      %v668 = vadd.f32 0.0, %v667
      %v669 = vpop.f32.mrf.mxu0
      %v670 = vadd.f32 0.0, %v669
      %671 = vmatmul.bf16.gmra.mxu0 %v635
      %v672 = vpop.f32.mrf.mxu0
      %v673 = vadd.f32 0.0, %v672
      %v674 = vpop.f32.mrf.mxu0
      %v675 = vadd.f32 0.0, %v674
      %676 = vmatmul.bf16.gmra.mxu0 %v638
      %v677 = vpop.f32.mrf.mxu0
      %v678 = vadd.f32 0.0, %v677
      %v679 = vpop.f32.mrf.mxu0
      %v680 = vadd.f32 0.0, %v679
      %681 = vmatmul.bf16.gmra.mxu0 %v641
      %v682 = vpop.f32.mrf.mxu0
      %v683 = vadd.f32 0.0, %v682
      %v684 = vpop.f32.mrf.mxu0
      %v685 = vadd.f32 0.0, %v684
      %686 = vmatmul.bf16.gmra.mxu0 %v644
      %v687 = vpop.f32.mrf.mxu0
      %v688 = vadd.f32 0.0, %v687
      %v689 = vpop.f32.mrf.mxu0
      %v690 = vadd.f32 0.0, %v689
      %691 = vmatmul.bf16.gmra.mxu0 %v647
      %v692 = vpop.f32.mrf.mxu0
      %v693 = vadd.f32 0.0, %v692
      %v694 = vpop.f32.mrf.mxu0
      %v695 = vadd.f32 0.0, %v694
      %696 = vmatmul.bf16.gmra.mxu0 %v650
      %v697 = vpop.f32.mrf.mxu0
      %v698 = vadd.f32 0.0, %v697
      %v699 = vpop.f32.mrf.mxu0
      %v700 = vadd.f32 0.0, %v699
      %701 = vmatmul.bf16.gmra.mxu0 %v653
      %v702 = vpop.f32.mrf.mxu0
      %v703 = vadd.f32 0.0, %v702
      %v704 = vpop.f32.mrf.mxu0
      %v705 = vadd.f32 0.0, %v704
      %706 = vdwg.mxu0
      %v707 = vadd.f32 %v574, %v668
      %v708 = vadd.f32 %v576, %v670
      %v709 = vadd.f32 %v579, %v673
      %v710 = vadd.f32 %v581, %v675
      %v711 = vadd.f32 %v584, %v678
      %v712 = vadd.f32 %v586, %v680
      %v713 = vadd.f32 %v589, %v683
      %v714 = vadd.f32 %v591, %v685
      %v715 = vadd.f32 %v594, %v688
      %v716 = vadd.f32 %v596, %v690
      %v717 = vadd.f32 %v599, %v693
      %v718 = vadd.f32 %v601, %v695
      %v719 = vadd.f32 %v604, %v698
      %v720 = vadd.f32 %v606, %v700
      %v721 = vadd.f32 %v609, %v703
      %v722 = vadd.f32 %v611, %v705
      %vm723 = vsmask.f32 6400
      %v724 = vrot.slane %v396, 1
      %v725 = vrot.slane %v398, 2
      %v726 = vor.u32 %v724, %v725
      %v727 = vrot.slane %v407, 1
      %v728 = vrot.slane %v403, 2
      %v729 = vor.u32 %v727, %v728
      %v730 = vsel %vm723, %v726, %v729
      %v731 = vrot.slane %v415, 1
      %v732 = vrot.slane %v411, 2
      %v733 = vor.u32 %v731, %v732
      %v734 = vsel %vm723, %v729, %v733
      %v735 = vrot.slane %v423, 1
      %v736 = vrot.slane %v419, 2
      %v737 = vor.u32 %v735, %v736
      %v738 = vsel %vm723, %v733, %v737
      %v739 = vrot.slane %v431, 1
      %v740 = vrot.slane %v427, 2
      %v741 = vor.u32 %v739, %v740
      %v742 = vsel %vm723, %v737, %v741
      %v743 = vrot.slane %v439, 1
      %v744 = vrot.slane %v435, 2
      %v745 = vor.u32 %v743, %v744
      %v746 = vsel %vm723, %v741, %v745
      %v747 = vrot.slane %v447, 1
      %v748 = vrot.slane %v443, 2
      %v749 = vor.u32 %v747, %v748
      %v750 = vsel %vm723, %v745, %v749
      %v751 = vrot.slane %v455, 1
      %v752 = vrot.slane %v451, 2
      %v753 = vor.u32 %v751, %v752
      %v754 = vsel %vm723, %v749, %v753
      %v755 = vshrl.u32 %v393, 16
      %v757 = vrot.slane %v755, 1
      %v758 = vrot.slane %v459, 2
      %v759 = vor.u32 %v757, %v758
      %v760 = vsel %vm723, %v753, %v759
      %v762 = vunpack.c.l.b16 %v344
      %v763 = vpack.c.b16 %v762, %v762
      %v764 = vrot.slane %v763, 2
      %v766 = vsel %vm467, %v730, 0
      %v769 = vsel %vm467, %v734, 0
      %v772 = vsel %vm467, %v738, 0
      %v775 = vsel %vm467, %v742, 0
      %v778 = vsel %vm467, %v746, 0
      %v781 = vsel %vm467, %v750, 0
      %v784 = vsel %vm467, %v754, 0
      %v787 = vsel %vm467, %v760, 0
      %v790 = vsel %vm492, %v764, 0
      %792 = vmatpush.bf16.msra.mxu0 0
      %793 = vmatpush.bf16.msra.mxu0 0
      %794 = vmatpush.bf16.msra.mxu0 0
      %795 = vmatpush.bf16.msra.mxu0 0
      %796 = vmatpush.bf16.msra.mxu0 0
      %797 = vmatpush.bf16.msra.mxu0 0
      %798 = vmatpush.bf16.msra.mxu0 0
      %799 = vmatpush.bf16.msra.mxu0 %v790
      %800 = vmatmul.bf16.gmra.mxu0 %v766
      %v801 = vpop.f32.mrf.mxu0
      %v802 = vadd.f32 0.0, %v801
      %v803 = vpop.f32.mrf.mxu0
      %v804 = vadd.f32 0.0, %v803
      %805 = vmatmul.bf16.gmra.mxu0 %v769
      %v806 = vpop.f32.mrf.mxu0
      %v807 = vadd.f32 0.0, %v806
      %v808 = vpop.f32.mrf.mxu0
      %v809 = vadd.f32 0.0, %v808
      %810 = vmatmul.bf16.gmra.mxu0 %v772
      %v811 = vpop.f32.mrf.mxu0
      %v812 = vadd.f32 0.0, %v811
      %v813 = vpop.f32.mrf.mxu0
      %v814 = vadd.f32 0.0, %v813
      %815 = vmatmul.bf16.gmra.mxu0 %v775
      %v816 = vpop.f32.mrf.mxu0
      %v817 = vadd.f32 0.0, %v816
      %v818 = vpop.f32.mrf.mxu0
      %v819 = vadd.f32 0.0, %v818
      %820 = vmatmul.bf16.gmra.mxu0 %v778
      %v821 = vpop.f32.mrf.mxu0
      %v822 = vadd.f32 0.0, %v821
      %v823 = vpop.f32.mrf.mxu0
      %v824 = vadd.f32 0.0, %v823
      %825 = vmatmul.bf16.gmra.mxu0 %v781
      %v826 = vpop.f32.mrf.mxu0
      %v827 = vadd.f32 0.0, %v826
      %v828 = vpop.f32.mrf.mxu0
      %v829 = vadd.f32 0.0, %v828
      %830 = vmatmul.bf16.gmra.mxu0 %v784
      %v831 = vpop.f32.mrf.mxu0
      %v832 = vadd.f32 0.0, %v831
      %v833 = vpop.f32.mrf.mxu0
      %v834 = vadd.f32 0.0, %v833
      %835 = vmatmul.bf16.gmra.mxu0 %v787
      %v836 = vpop.f32.mrf.mxu0
      %v837 = vadd.f32 0.0, %v836
      %v838 = vpop.f32.mrf.mxu0
      %v839 = vadd.f32 0.0, %v838
      %840 = vdwg.mxu0
      %v841 = vadd.f32 %v707, %v802
      %v842 = vadd.f32 %v708, %v804
      %v843 = vadd.f32 %v709, %v807
      %v844 = vadd.f32 %v710, %v809
      %v845 = vadd.f32 %v711, %v812
      %v846 = vadd.f32 %v712, %v814
      %v847 = vadd.f32 %v713, %v817
      %v848 = vadd.f32 %v714, %v819
      %v849 = vadd.f32 %v715, %v822
      %v850 = vadd.f32 %v716, %v824
      %v851 = vadd.f32 %v717, %v827
      %v852 = vadd.f32 %v718, %v829
      %v853 = vadd.f32 %v719, %v832
      %v854 = vadd.f32 %v720, %v834
      %v855 = vadd.f32 %v721, %v837
      %v856 = vadd.f32 %v722, %v839
      %vm857 = vcmask 1045504
      %v858 = vrot.slane %v385, 2
      %v859 = vrot.slane %v386, 2
      %v860 = vsel %vm857, %v858, %v859
      %v861 = vrot.slane %v387, 2
      %v862 = vsel %vm857, %v859, %v861
      %v863 = vrot.slane %v388, 2
      %v864 = vsel %vm857, %v861, %v863
      %v865 = vrot.slane %v389, 2
      %v866 = vsel %vm857, %v863, %v865
      %v867 = vrot.slane %v390, 2
      %v868 = vsel %vm857, %v865, %v867
      %v869 = vrot.slane %v391, 2
      %v870 = vsel %vm857, %v867, %v869
      %v871 = vrot.slane %v392, 2
      %v872 = vsel %vm857, %v869, %v871
      %v873 = vrot.slane %v393, 2
      %v874 = vsel %vm857, %v871, %v873
      %v876 = vsel %vm467, %v860, 0
      %v879 = vsel %vm467, %v862, 0
      %v882 = vsel %vm467, %v864, 0
      %v885 = vsel %vm467, %v866, 0
      %v888 = vsel %vm467, %v868, 0
      %v891 = vsel %vm467, %v870, 0
      %v894 = vsel %vm467, %v872, 0
      %v897 = vsel %vm467, %v874, 0
      %v900 = vsel %vm492, %v345, 0
      %902 = vmatpush.bf16.msra.mxu0 0
      %903 = vmatpush.bf16.msra.mxu0 0
      %904 = vmatpush.bf16.msra.mxu0 0
      %905 = vmatpush.bf16.msra.mxu0 0
      %906 = vmatpush.bf16.msra.mxu0 0
      %907 = vmatpush.bf16.msra.mxu0 0
      %908 = vmatpush.bf16.msra.mxu0 0
      %909 = vmatpush.bf16.msra.mxu0 %v900
      %910 = vmatmul.bf16.gmra.mxu0 %v876
      %v911 = vpop.f32.mrf.mxu0
      %v912 = vadd.f32 0.0, %v911
      %v913 = vpop.f32.mrf.mxu0
      %v914 = vadd.f32 0.0, %v913
      %915 = vmatmul.bf16.gmra.mxu0 %v879
      %v916 = vpop.f32.mrf.mxu0
      %v917 = vadd.f32 0.0, %v916
      %v918 = vpop.f32.mrf.mxu0
      %v919 = vadd.f32 0.0, %v918
      %920 = vmatmul.bf16.gmra.mxu0 %v882
      %v921 = vpop.f32.mrf.mxu0
      %v922 = vadd.f32 0.0, %v921
      %v923 = vpop.f32.mrf.mxu0
      %v924 = vadd.f32 0.0, %v923
      %925 = vmatmul.bf16.gmra.mxu0 %v885
      %v926 = vpop.f32.mrf.mxu0
      %v927 = vadd.f32 0.0, %v926
      %v928 = vpop.f32.mrf.mxu0
      %v929 = vadd.f32 0.0, %v928
      %930 = vmatmul.bf16.gmra.mxu0 %v888
      %v931 = vpop.f32.mrf.mxu0
      %v932 = vadd.f32 0.0, %v931
      %v933 = vpop.f32.mrf.mxu0
      %v934 = vadd.f32 0.0, %v933
      %935 = vmatmul.bf16.gmra.mxu0 %v891
      %v936 = vpop.f32.mrf.mxu0
      %v937 = vadd.f32 0.0, %v936
      %v938 = vpop.f32.mrf.mxu0
      %v939 = vadd.f32 0.0, %v938
      %940 = vmatmul.bf16.gmra.mxu0 %v894
      %v941 = vpop.f32.mrf.mxu0
      %v942 = vadd.f32 0.0, %v941
      %v943 = vpop.f32.mrf.mxu0
      %v944 = vadd.f32 0.0, %v943
      %945 = vmatmul.bf16.gmra.mxu0 %v897
      %v946 = vpop.f32.mrf.mxu0
      %v947 = vadd.f32 0.0, %v946
      %v948 = vpop.f32.mrf.mxu0
      %v949 = vadd.f32 0.0, %v948
      %950 = vdwg.mxu0
      %v951 = vadd.f32 %v841, %v912
      %v952 = vadd.f32 %v842, %v914
      %v953 = vadd.f32 %v843, %v917
      %v954 = vadd.f32 %v844, %v919
      %v955 = vadd.f32 %v845, %v922
      %v956 = vadd.f32 %v846, %v924
      %v957 = vadd.f32 %v847, %v927
      %v958 = vadd.f32 %v848, %v929
      %v959 = vadd.f32 %v849, %v932
      %v960 = vadd.f32 %v850, %v934
      %v961 = vadd.f32 %v851, %v937
      %v962 = vadd.f32 %v852, %v939
      %v963 = vadd.f32 %v853, %v942
      %v964 = vadd.f32 %v854, %v944
      %v965 = vadd.f32 %v855, %v947
      %v966 = vadd.f32 %v856, %v949
      %vm967 = vsmask.f32 5376
      %v968 = vrot.slane %v396, 2
      %v969 = vrot.slane %v398, 3
      %v970 = vor.u32 %v968, %v969
      %v971 = vrot.slane %v407, 2
      %v972 = vrot.slane %v403, 3
      %v973 = vor.u32 %v971, %v972
      %v974 = vsel %vm967, %v970, %v973
      %v975 = vrot.slane %v415, 2
      %v976 = vrot.slane %v411, 3
      %v977 = vor.u32 %v975, %v976
      %v978 = vsel %vm967, %v973, %v977
      %v979 = vrot.slane %v423, 2
      %v980 = vrot.slane %v419, 3
      %v981 = vor.u32 %v979, %v980
      %v982 = vsel %vm967, %v977, %v981
      %v983 = vrot.slane %v431, 2
      %v984 = vrot.slane %v427, 3
      %v985 = vor.u32 %v983, %v984
      %v986 = vsel %vm967, %v981, %v985
      %v987 = vrot.slane %v439, 2
      %v988 = vrot.slane %v435, 3
      %v989 = vor.u32 %v987, %v988
      %v990 = vsel %vm967, %v985, %v989
      %v991 = vrot.slane %v447, 2
      %v992 = vrot.slane %v443, 3
      %v993 = vor.u32 %v991, %v992
      %v994 = vsel %vm967, %v989, %v993
      %v995 = vrot.slane %v455, 2
      %v996 = vrot.slane %v451, 3
      %v997 = vor.u32 %v995, %v996
      %v998 = vsel %vm967, %v993, %v997
      %v999 = vrot.slane %v755, 2
      %v1000 = vrot.slane %v459, 3
      %v1001 = vor.u32 %v999, %v1000
      %v1002 = vsel %vm967, %v997, %v1001
      %v1004 = vunpack.c.l.b16 %v345
      %v1005 = vpack.c.b16 %v1004, %v1004
      %v1006 = vrot.slane %v1005, 2
      %v1008 = vsel %vm467, %v974, 0
      %v1011 = vsel %vm467, %v978, 0
      %v1014 = vsel %vm467, %v982, 0
      %v1017 = vsel %vm467, %v986, 0
      %v1020 = vsel %vm467, %v990, 0
      %v1023 = vsel %vm467, %v994, 0
      %v1026 = vsel %vm467, %v998, 0
      %v1029 = vsel %vm467, %v1002, 0
      %v1032 = vsel %vm492, %v1006, 0
      %1034 = vmatpush.bf16.msra.mxu0 0
      %1035 = vmatpush.bf16.msra.mxu0 0
      %1036 = vmatpush.bf16.msra.mxu0 0
      %1037 = vmatpush.bf16.msra.mxu0 0
      %1038 = vmatpush.bf16.msra.mxu0 0
      %1039 = vmatpush.bf16.msra.mxu0 0
      %1040 = vmatpush.bf16.msra.mxu0 0
      %1041 = vmatpush.bf16.msra.mxu0 %v1032
      %1042 = vmatmul.bf16.gmra.mxu0 %v1008
      %v1043 = vpop.f32.mrf.mxu0
      %v1044 = vadd.f32 0.0, %v1043
      %v1045 = vpop.f32.mrf.mxu0
      %v1046 = vadd.f32 0.0, %v1045
      %1047 = vmatmul.bf16.gmra.mxu0 %v1011
      %v1048 = vpop.f32.mrf.mxu0
      %v1049 = vadd.f32 0.0, %v1048
      %v1050 = vpop.f32.mrf.mxu0
      %v1051 = vadd.f32 0.0, %v1050
      %1052 = vmatmul.bf16.gmra.mxu0 %v1014
      %v1053 = vpop.f32.mrf.mxu0
      %v1054 = vadd.f32 0.0, %v1053
      %v1055 = vpop.f32.mrf.mxu0
      %v1056 = vadd.f32 0.0, %v1055
      %1057 = vmatmul.bf16.gmra.mxu0 %v1017
      %v1058 = vpop.f32.mrf.mxu0
      %v1059 = vadd.f32 0.0, %v1058
      %v1060 = vpop.f32.mrf.mxu0
      %v1061 = vadd.f32 0.0, %v1060
      %1062 = vmatmul.bf16.gmra.mxu0 %v1020
      %v1063 = vpop.f32.mrf.mxu0
      %v1064 = vadd.f32 0.0, %v1063
      %v1065 = vpop.f32.mrf.mxu0
      %v1066 = vadd.f32 0.0, %v1065
      %1067 = vmatmul.bf16.gmra.mxu0 %v1023
      %v1068 = vpop.f32.mrf.mxu0
      %v1069 = vadd.f32 0.0, %v1068
      %v1070 = vpop.f32.mrf.mxu0
      %v1071 = vadd.f32 0.0, %v1070
      %1072 = vmatmul.bf16.gmra.mxu0 %v1026
      %v1073 = vpop.f32.mrf.mxu0
      %v1074 = vadd.f32 0.0, %v1073
      %v1075 = vpop.f32.mrf.mxu0
      %v1076 = vadd.f32 0.0, %v1075
      %1077 = vmatmul.bf16.gmra.mxu0 %v1029
      %v1078 = vpop.f32.mrf.mxu0
      %v1079 = vadd.f32 0.0, %v1078
      %v1080 = vpop.f32.mrf.mxu0
      %v1081 = vadd.f32 0.0, %v1080
      %1082 = vdwg.mxu0
      %v1083 = vadd.f32 %v951, %v1044
      %v1084 = vadd.f32 %v952, %v1046
      %v1085 = vadd.f32 %v953, %v1049
      %v1086 = vadd.f32 %v954, %v1051
      %v1087 = vadd.f32 %v955, %v1054
      %v1088 = vadd.f32 %v956, %v1056
      %v1089 = vadd.f32 %v957, %v1059
      %v1090 = vadd.f32 %v958, %v1061
      %v1091 = vadd.f32 %v959, %v1064
      %v1092 = vadd.f32 %v960, %v1066
      %v1093 = vadd.f32 %v961, %v1069
      %v1094 = vadd.f32 %v962, %v1071
      %v1095 = vadd.f32 %v963, %v1074
      %v1096 = vadd.f32 %v964, %v1076
      %v1097 = vadd.f32 %v965, %v1079
      %v1098 = vadd.f32 %v966, %v1081
      %vm1099 = vcmask 1044480
      %v1100 = vrot.slane %v385, 3
      %v1101 = vrot.slane %v386, 3
      %v1102 = vsel %vm1099, %v1100, %v1101
      %v1103 = vrot.slane %v387, 3
      %v1104 = vsel %vm1099, %v1101, %v1103
      %v1105 = vrot.slane %v388, 3
      %v1106 = vsel %vm1099, %v1103, %v1105
      %v1107 = vrot.slane %v389, 3
      %v1108 = vsel %vm1099, %v1105, %v1107
      %v1109 = vrot.slane %v390, 3
      %v1110 = vsel %vm1099, %v1107, %v1109
      %v1111 = vrot.slane %v391, 3
      %v1112 = vsel %vm1099, %v1109, %v1111
      %v1113 = vrot.slane %v392, 3
      %v1114 = vsel %vm1099, %v1111, %v1113
      %v1115 = vrot.slane %v393, 3
      %v1116 = vsel %vm1099, %v1113, %v1115
      %v1118 = vsel %vm467, %v1102, 0
      %v1121 = vsel %vm467, %v1104, 0
      %v1124 = vsel %vm467, %v1106, 0
      %v1127 = vsel %vm467, %v1108, 0
      %v1130 = vsel %vm467, %v1110, 0
      %v1133 = vsel %vm467, %v1112, 0
      %v1136 = vsel %vm467, %v1114, 0
      %v1139 = vsel %vm467, %v1116, 0
      %v1142 = vsel %vm492, %v346, 0
      %1144 = vmatpush.bf16.msra.mxu0 0
      %1145 = vmatpush.bf16.msra.mxu0 0
      %1146 = vmatpush.bf16.msra.mxu0 0
      %1147 = vmatpush.bf16.msra.mxu0 0
      %1148 = vmatpush.bf16.msra.mxu0 0
      %1149 = vmatpush.bf16.msra.mxu0 0
      %1150 = vmatpush.bf16.msra.mxu0 0
      %1151 = vmatpush.bf16.msra.mxu0 %v1142
      %1152 = vmatmul.bf16.gmra.mxu0 %v1118
      %v1153 = vpop.f32.mrf.mxu0
      %v1154 = vadd.f32 0.0, %v1153
      %v1155 = vpop.f32.mrf.mxu0
      %v1156 = vadd.f32 0.0, %v1155
      %1157 = vmatmul.bf16.gmra.mxu0 %v1121
      %v1158 = vpop.f32.mrf.mxu0
      %v1159 = vadd.f32 0.0, %v1158
      %v1160 = vpop.f32.mrf.mxu0
      %v1161 = vadd.f32 0.0, %v1160
      %1162 = vmatmul.bf16.gmra.mxu0 %v1124
      %v1163 = vpop.f32.mrf.mxu0
      %v1164 = vadd.f32 0.0, %v1163
      %v1165 = vpop.f32.mrf.mxu0
      %v1166 = vadd.f32 0.0, %v1165
      %1167 = vmatmul.bf16.gmra.mxu0 %v1127
      %v1168 = vpop.f32.mrf.mxu0
      %v1169 = vadd.f32 0.0, %v1168
      %v1170 = vpop.f32.mrf.mxu0
      %v1171 = vadd.f32 0.0, %v1170
      %1172 = vmatmul.bf16.gmra.mxu0 %v1130
      %v1173 = vpop.f32.mrf.mxu0
      %v1174 = vadd.f32 0.0, %v1173
      %v1175 = vpop.f32.mrf.mxu0
      %v1176 = vadd.f32 0.0, %v1175
      %1177 = vmatmul.bf16.gmra.mxu0 %v1133
      %v1178 = vpop.f32.mrf.mxu0
      %v1179 = vadd.f32 0.0, %v1178
      %v1180 = vpop.f32.mrf.mxu0
      %v1181 = vadd.f32 0.0, %v1180
      %1182 = vmatmul.bf16.gmra.mxu0 %v1136
      %v1183 = vpop.f32.mrf.mxu0
      %v1184 = vadd.f32 0.0, %v1183
      %v1185 = vpop.f32.mrf.mxu0
      %v1186 = vadd.f32 0.0, %v1185
      %1187 = vmatmul.bf16.gmra.mxu0 %v1139
      %v1188 = vpop.f32.mrf.mxu0
      %v1189 = vadd.f32 0.0, %v1188
      %v1190 = vpop.f32.mrf.mxu0
      %v1191 = vadd.f32 0.0, %v1190
      %1192 = vdwg.mxu0
      %v1193 = vadd.f32 %v1083, %v1154
      %v1194 = vadd.f32 %v1084, %v1156
      %v1195 = vadd.f32 %v1085, %v1159
      %v1196 = vadd.f32 %v1086, %v1161
      %v1197 = vadd.f32 %v1087, %v1164
      %v1198 = vadd.f32 %v1088, %v1166
      %v1199 = vadd.f32 %v1089, %v1169
      %v1200 = vadd.f32 %v1090, %v1171
      %v1201 = vadd.f32 %v1091, %v1174
      %v1202 = vadd.f32 %v1092, %v1176
      %v1203 = vadd.f32 %v1093, %v1179
      %v1204 = vadd.f32 %v1094, %v1181
      %v1205 = vadd.f32 %v1095, %v1184
      %v1206 = vadd.f32 %v1096, %v1186
      %v1207 = vadd.f32 %v1097, %v1189
      %v1208 = vadd.f32 %v1098, %v1191
      %vm1209 = vsmask.f32 4352
      %v1210 = vrot.slane %v396, 3
      %v1211 = vrot.slane %v398, 4
      %v1212 = vor.u32 %v1210, %v1211
      %v1213 = vrot.slane %v407, 3
      %v1214 = vrot.slane %v403, 4
      %v1215 = vor.u32 %v1213, %v1214
      %v1216 = vsel %vm1209, %v1212, %v1215
      %v1217 = vrot.slane %v415, 3
      %v1218 = vrot.slane %v411, 4
      %v1219 = vor.u32 %v1217, %v1218
      %v1220 = vsel %vm1209, %v1215, %v1219
      %v1221 = vrot.slane %v423, 3
      %v1222 = vrot.slane %v419, 4
      %v1223 = vor.u32 %v1221, %v1222
      %v1224 = vsel %vm1209, %v1219, %v1223
      %v1225 = vrot.slane %v431, 3
      %v1226 = vrot.slane %v427, 4
      %v1227 = vor.u32 %v1225, %v1226
      %v1228 = vsel %vm1209, %v1223, %v1227
      %v1229 = vrot.slane %v439, 3
      %v1230 = vrot.slane %v435, 4
      %v1231 = vor.u32 %v1229, %v1230
      %v1232 = vsel %vm1209, %v1227, %v1231
      %v1233 = vrot.slane %v447, 3
      %v1234 = vrot.slane %v443, 4
      %v1235 = vor.u32 %v1233, %v1234
      %v1236 = vsel %vm1209, %v1231, %v1235
      %v1237 = vrot.slane %v455, 3
      %v1238 = vrot.slane %v451, 4
      %v1239 = vor.u32 %v1237, %v1238
      %v1240 = vsel %vm1209, %v1235, %v1239
      %v1241 = vrot.slane %v755, 3
      %v1242 = vrot.slane %v459, 4
      %v1243 = vor.u32 %v1241, %v1242
      %v1244 = vsel %vm1209, %v1239, %v1243
      %v1246 = vunpack.c.l.b16 %v346
      %v1247 = vpack.c.b16 %v1246, %v1246
      %v1248 = vrot.slane %v1247, 2
      %v1250 = vsel %vm467, %v1216, 0
      %v1253 = vsel %vm467, %v1220, 0
      %v1256 = vsel %vm467, %v1224, 0
      %v1259 = vsel %vm467, %v1228, 0
      %v1262 = vsel %vm467, %v1232, 0
      %v1265 = vsel %vm467, %v1236, 0
      %v1268 = vsel %vm467, %v1240, 0
      %v1271 = vsel %vm467, %v1244, 0
      %v1274 = vsel %vm492, %v1248, 0
      %1276 = vmatpush.bf16.msra.mxu0 0
      %1277 = vmatpush.bf16.msra.mxu0 0
      %1278 = vmatpush.bf16.msra.mxu0 0
      %1279 = vmatpush.bf16.msra.mxu0 0
      %1280 = vmatpush.bf16.msra.mxu0 0
      %1281 = vmatpush.bf16.msra.mxu0 0
      %1282 = vmatpush.bf16.msra.mxu0 0
      %1283 = vmatpush.bf16.msra.mxu0 %v1274
      %1284 = vmatmul.bf16.gmra.mxu0 %v1250
      %v1285 = vpop.f32.mrf.mxu0
      %v1286 = vadd.f32 0.0, %v1285
      %v1287 = vpop.f32.mrf.mxu0
      %v1288 = vadd.f32 0.0, %v1287
      %1289 = vmatmul.bf16.gmra.mxu0 %v1253
      %v1290 = vpop.f32.mrf.mxu0
      %v1291 = vadd.f32 0.0, %v1290
      %v1292 = vpop.f32.mrf.mxu0
      %v1293 = vadd.f32 0.0, %v1292
      %1294 = vmatmul.bf16.gmra.mxu0 %v1256
      %v1295 = vpop.f32.mrf.mxu0
      %v1296 = vadd.f32 0.0, %v1295
      %v1297 = vpop.f32.mrf.mxu0
      %v1298 = vadd.f32 0.0, %v1297
      %1299 = vmatmul.bf16.gmra.mxu0 %v1259
      %v1300 = vpop.f32.mrf.mxu0
      %v1301 = vadd.f32 0.0, %v1300
      %v1302 = vpop.f32.mrf.mxu0
      %v1303 = vadd.f32 0.0, %v1302
      %1304 = vmatmul.bf16.gmra.mxu0 %v1262
      %v1305 = vpop.f32.mrf.mxu0
      %v1306 = vadd.f32 0.0, %v1305
      %v1307 = vpop.f32.mrf.mxu0
      %v1308 = vadd.f32 0.0, %v1307
      %1309 = vmatmul.bf16.gmra.mxu0 %v1265
      %v1310 = vpop.f32.mrf.mxu0
      %v1311 = vadd.f32 0.0, %v1310
      %v1312 = vpop.f32.mrf.mxu0
      %v1313 = vadd.f32 0.0, %v1312
      %1314 = vmatmul.bf16.gmra.mxu0 %v1268
      %v1315 = vpop.f32.mrf.mxu0
      %v1316 = vadd.f32 0.0, %v1315
      %v1317 = vpop.f32.mrf.mxu0
      %v1318 = vadd.f32 0.0, %v1317
      %1319 = vmatmul.bf16.gmra.mxu0 %v1271
      %v1320 = vpop.f32.mrf.mxu0
      %v1321 = vadd.f32 0.0, %v1320
      %v1322 = vpop.f32.mrf.mxu0
      %v1323 = vadd.f32 0.0, %v1322
      %1324 = vdwg.mxu0
      %v1325 = vadd.f32 %v1193, %v1286
      %v1326 = vadd.f32 %v1194, %v1288
      %v1327 = vadd.f32 %v1195, %v1291
      %v1328 = vadd.f32 %v1196, %v1293
      %v1329 = vadd.f32 %v1197, %v1296
      %v1330 = vadd.f32 %v1198, %v1298
      %v1331 = vadd.f32 %v1199, %v1301
      %v1332 = vadd.f32 %v1200, %v1303
      %v1333 = vadd.f32 %v1201, %v1306
      %v1334 = vadd.f32 %v1202, %v1308
      %v1335 = vadd.f32 %v1203, %v1311
      %v1336 = vadd.f32 %v1204, %v1313
      %v1337 = vadd.f32 %v1205, %v1316
      %v1338 = vadd.f32 %v1206, %v1318
      %v1339 = vadd.f32 %v1207, %v1321
      %v1340 = vadd.f32 %v1208, %v1323
      %v1341 = vpack.c.b16 %v370, %v369
      %v1342 = vpack.c.b16 %v372, %v371
      %v1343 = vpack.c.b16 %v374, %v373
      %v1344 = vpack.c.b16 %v376, %v375
      %v1345 = vpack.c.b16 %v378, %v377
      %v1346 = vpack.c.b16 %v380, %v379
      %v1347 = vpack.c.b16 %v382, %v381
      %v1348 = vpack.c.b16 %v384, %v383
      %v1350 = vsel %vm467, %v1341, 0
      %v1353 = vsel %vm467, %v1342, 0
      %v1356 = vsel %vm467, %v1343, 0
      %v1359 = vsel %vm467, %v1344, 0
      %v1362 = vsel %vm467, %v1345, 0
      %v1365 = vsel %vm467, %v1346, 0
      %v1368 = vsel %vm467, %v1347, 0
      %v1371 = vsel %vm467, %v1348, 0
      %v1374 = vsel %vm492, %v347, 0
      %1376 = vmatpush.bf16.msra.mxu0 0
      %1377 = vmatpush.bf16.msra.mxu0 0
      %1378 = vmatpush.bf16.msra.mxu0 0
      %1379 = vmatpush.bf16.msra.mxu0 0
      %1380 = vmatpush.bf16.msra.mxu0 0
      %1381 = vmatpush.bf16.msra.mxu0 0
      %1382 = vmatpush.bf16.msra.mxu0 0
      %1383 = vmatpush.bf16.msra.mxu0 %v1374
      %1384 = vmatmul.bf16.gmra.mxu0 %v1350
      %v1385 = vpop.f32.mrf.mxu0
      %v1386 = vadd.f32 0.0, %v1385
      %v1387 = vpop.f32.mrf.mxu0
      %v1388 = vadd.f32 0.0, %v1387
      %1389 = vmatmul.bf16.gmra.mxu0 %v1353
      %v1390 = vpop.f32.mrf.mxu0
      %v1391 = vadd.f32 0.0, %v1390
      %v1392 = vpop.f32.mrf.mxu0
      %v1393 = vadd.f32 0.0, %v1392
      %1394 = vmatmul.bf16.gmra.mxu0 %v1356
      %v1395 = vpop.f32.mrf.mxu0
      %v1396 = vadd.f32 0.0, %v1395
      %v1397 = vpop.f32.mrf.mxu0
      %v1398 = vadd.f32 0.0, %v1397
      %1399 = vmatmul.bf16.gmra.mxu0 %v1359
      %v1400 = vpop.f32.mrf.mxu0
      %v1401 = vadd.f32 0.0, %v1400
      %v1402 = vpop.f32.mrf.mxu0
      %v1403 = vadd.f32 0.0, %v1402
      %1404 = vmatmul.bf16.gmra.mxu0 %v1362
      %v1405 = vpop.f32.mrf.mxu0
      %v1406 = vadd.f32 0.0, %v1405
      %v1407 = vpop.f32.mrf.mxu0
      %v1408 = vadd.f32 0.0, %v1407
      %1409 = vmatmul.bf16.gmra.mxu0 %v1365
      %v1410 = vpop.f32.mrf.mxu0
      %v1411 = vadd.f32 0.0, %v1410
      %v1412 = vpop.f32.mrf.mxu0
      %v1413 = vadd.f32 0.0, %v1412
      %1414 = vmatmul.bf16.gmra.mxu0 %v1368
      %v1415 = vpop.f32.mrf.mxu0
      %v1416 = vadd.f32 0.0, %v1415
      %v1417 = vpop.f32.mrf.mxu0
      %v1418 = vadd.f32 0.0, %v1417
      %1419 = vmatmul.bf16.gmra.mxu0 %v1371
      %v1420 = vpop.f32.mrf.mxu0
      %v1421 = vadd.f32 0.0, %v1420
      %v1422 = vpop.f32.mrf.mxu0
      %v1423 = vadd.f32 0.0, %v1422
      %1424 = vdwg.mxu0
      %v1425 = vadd.f32 %v1325, %v1386
      %v1426 = vadd.f32 %v1326, %v1388
      %v1427 = vadd.f32 %v1327, %v1391
      %v1428 = vadd.f32 %v1328, %v1393
      %v1429 = vadd.f32 %v1329, %v1396
      %v1430 = vadd.f32 %v1330, %v1398
      %v1431 = vadd.f32 %v1331, %v1401
      %v1432 = vadd.f32 %v1332, %v1403
      %v1433 = vadd.f32 %v1333, %v1406
      %v1434 = vadd.f32 %v1334, %v1408
      %v1435 = vadd.f32 %v1335, %v1411
      %v1436 = vadd.f32 %v1336, %v1413
      %v1437 = vadd.f32 %v1337, %v1416
      %v1438 = vadd.f32 %v1338, %v1418
      %v1439 = vadd.f32 %v1339, %v1421
      %v1440 = vadd.f32 %v1340, %v1423
      %v1442 = vunpack.c.l.b16 %v342
      %v1443 = vpack.c.b16 %v1442, %v1442
      %v1444 = vshrl.u32 %v1341, 16
      %v1446 = vshll.u32 %v1341, 16
      %v1448 = vrot.slane %v1446, 1
      %v1449 = vor.u32 %v1444, %v1448
      %v1450 = vshll.u32 %v1342, 16
      %v1452 = vrot.slane %v1450, 1
      %v1453 = vsel %vm394, %v1449, %v1452
      %v1454 = vshrl.u32 %v1342, 16
      %v1456 = vor.u32 %v1454, %v1452
      %v1457 = vshll.u32 %v1343, 16
      %v1459 = vrot.slane %v1457, 1
      %v1460 = vsel %vm394, %v1456, %v1459
      %v1461 = vshrl.u32 %v1343, 16
      %v1463 = vor.u32 %v1461, %v1459
      %v1464 = vshll.u32 %v1344, 16
      %v1466 = vrot.slane %v1464, 1
      %v1467 = vsel %vm394, %v1463, %v1466
      %v1468 = vshrl.u32 %v1344, 16
      %v1470 = vor.u32 %v1468, %v1466
      %v1471 = vshll.u32 %v1345, 16
      %v1473 = vrot.slane %v1471, 1
      %v1474 = vsel %vm394, %v1470, %v1473
      %v1475 = vshrl.u32 %v1345, 16
      %v1477 = vor.u32 %v1475, %v1473
      %v1478 = vshll.u32 %v1346, 16
      %v1480 = vrot.slane %v1478, 1
      %v1481 = vsel %vm394, %v1477, %v1480
      %v1482 = vshrl.u32 %v1346, 16
      %v1484 = vor.u32 %v1482, %v1480
      %v1485 = vshll.u32 %v1347, 16
      %v1487 = vrot.slane %v1485, 1
      %v1488 = vsel %vm394, %v1484, %v1487
      %v1489 = vshrl.u32 %v1347, 16
      %v1491 = vor.u32 %v1489, %v1487
      %v1492 = vshll.u32 %v1348, 16
      %v1494 = vrot.slane %v1492, 1
      %v1495 = vsel %vm394, %v1491, %v1494
      %v1496 = vshrl.u32 %v1348, 16
      %v1498 = vor.u32 %v1496, %v1494
      %v1500 = vshll.u32 %v1443, 16
      %v1502 = vrot.slane %v1500, 1
      %v1503 = vsel %vm394, %v1498, %v1502
      %v1505 = vunpack.c.l.b16 %v347
      %v1506 = vpack.c.b16 %v1505, %v1505
      %v1507 = vrot.slane %v1506, 2
      %v1509 = vsel %vm467, %v1453, 0
      %v1512 = vsel %vm467, %v1460, 0
      %v1515 = vsel %vm467, %v1467, 0
      %v1518 = vsel %vm467, %v1474, 0
      %v1521 = vsel %vm467, %v1481, 0
      %v1524 = vsel %vm467, %v1488, 0
      %v1527 = vsel %vm467, %v1495, 0
      %v1530 = vsel %vm467, %v1503, 0
      %v1533 = vsel %vm492, %v1507, 0
      %1535 = vmatpush.bf16.msra.mxu0 0
      %1536 = vmatpush.bf16.msra.mxu0 0
      %1537 = vmatpush.bf16.msra.mxu0 0
      %1538 = vmatpush.bf16.msra.mxu0 0
      %1539 = vmatpush.bf16.msra.mxu0 0
      %1540 = vmatpush.bf16.msra.mxu0 0
      %1541 = vmatpush.bf16.msra.mxu0 0
      %1542 = vmatpush.bf16.msra.mxu0 %v1533
      %1543 = vmatmul.bf16.gmra.mxu0 %v1509
      %v1544 = vpop.f32.mrf.mxu0
      %v1545 = vadd.f32 0.0, %v1544
      %v1546 = vpop.f32.mrf.mxu0
      %v1547 = vadd.f32 0.0, %v1546
      %1548 = vmatmul.bf16.gmra.mxu0 %v1512
      %v1549 = vpop.f32.mrf.mxu0
      %v1550 = vadd.f32 0.0, %v1549
      %v1551 = vpop.f32.mrf.mxu0
      %v1552 = vadd.f32 0.0, %v1551
      %1553 = vmatmul.bf16.gmra.mxu0 %v1515
      %v1554 = vpop.f32.mrf.mxu0
      %v1555 = vadd.f32 0.0, %v1554
      %v1556 = vpop.f32.mrf.mxu0
      %v1557 = vadd.f32 0.0, %v1556
      %1558 = vmatmul.bf16.gmra.mxu0 %v1518
      %v1559 = vpop.f32.mrf.mxu0
      %v1560 = vadd.f32 0.0, %v1559
      %v1561 = vpop.f32.mrf.mxu0
      %v1562 = vadd.f32 0.0, %v1561
      %1563 = vmatmul.bf16.gmra.mxu0 %v1521
      %v1564 = vpop.f32.mrf.mxu0
      %v1565 = vadd.f32 0.0, %v1564
      %v1566 = vpop.f32.mrf.mxu0
      %v1567 = vadd.f32 0.0, %v1566
      %1568 = vmatmul.bf16.gmra.mxu0 %v1524
      %v1569 = vpop.f32.mrf.mxu0
      %v1570 = vadd.f32 0.0, %v1569
      %v1571 = vpop.f32.mrf.mxu0
      %v1572 = vadd.f32 0.0, %v1571
      %1573 = vmatmul.bf16.gmra.mxu0 %v1527
      %v1574 = vpop.f32.mrf.mxu0
      %v1575 = vadd.f32 0.0, %v1574
      %v1576 = vpop.f32.mrf.mxu0
      %v1577 = vadd.f32 0.0, %v1576
      %1578 = vmatmul.bf16.gmra.mxu0 %v1530
      %v1579 = vpop.f32.mrf.mxu0
      %v1580 = vadd.f32 0.0, %v1579
      %v1581 = vpop.f32.mrf.mxu0
      %v1582 = vadd.f32 0.0, %v1581
      %1583 = vdwg.mxu0
      %v1584 = vadd.f32 %v1425, %v1545
      %v1585 = vadd.f32 %v1426, %v1547
      %v1586 = vadd.f32 %v1427, %v1550
      %v1587 = vadd.f32 %v1428, %v1552
      %v1588 = vadd.f32 %v1429, %v1555
      %v1589 = vadd.f32 %v1430, %v1557
      %v1590 = vadd.f32 %v1431, %v1560
      %v1591 = vadd.f32 %v1432, %v1562
      %v1592 = vadd.f32 %v1433, %v1565
      %v1593 = vadd.f32 %v1434, %v1567
      %v1594 = vadd.f32 %v1435, %v1570
      %v1595 = vadd.f32 %v1436, %v1572
      %v1596 = vadd.f32 %v1437, %v1575
      %v1597 = vadd.f32 %v1438, %v1577
      %v1598 = vadd.f32 %v1439, %v1580
      %v1599 = vadd.f32 %v1440, %v1582
      %v1600 = vrot.slane %v1341, 1
      %v1601 = vrot.slane %v1342, 1
      %v1602 = vsel %vm613, %v1600, %v1601
      %v1603 = vrot.slane %v1343, 1
      %v1604 = vsel %vm613, %v1601, %v1603
      %v1605 = vrot.slane %v1344, 1
      %v1606 = vsel %vm613, %v1603, %v1605
      %v1607 = vrot.slane %v1345, 1
      %v1608 = vsel %vm613, %v1605, %v1607
      %v1609 = vrot.slane %v1346, 1
      %v1610 = vsel %vm613, %v1607, %v1609
      %v1611 = vrot.slane %v1347, 1
      %v1612 = vsel %vm613, %v1609, %v1611
      %v1613 = vrot.slane %v1348, 1
      %v1614 = vsel %vm613, %v1611, %v1613
      %v1615 = vrot.slane %v1443, 1
      %v1616 = vsel %vm613, %v1613, %v1615
      %v1618 = vsel %vm467, %v1602, 0
      %v1621 = vsel %vm467, %v1604, 0
      %v1624 = vsel %vm467, %v1606, 0
      %v1627 = vsel %vm467, %v1608, 0
      %v1630 = vsel %vm467, %v1610, 0
      %v1633 = vsel %vm467, %v1612, 0
      %v1636 = vsel %vm467, %v1614, 0
      %v1639 = vsel %vm467, %v1616, 0
      %v1642 = vsel %vm492, %v348, 0
      %1644 = vmatpush.bf16.msra.mxu0 0
      %1645 = vmatpush.bf16.msra.mxu0 0
      %1646 = vmatpush.bf16.msra.mxu0 0
      %1647 = vmatpush.bf16.msra.mxu0 0
      %1648 = vmatpush.bf16.msra.mxu0 0
      %1649 = vmatpush.bf16.msra.mxu0 0
      %1650 = vmatpush.bf16.msra.mxu0 0
      %1651 = vmatpush.bf16.msra.mxu0 %v1642
      %1652 = vmatmul.bf16.gmra.mxu0 %v1618
      %v1653 = vpop.f32.mrf.mxu0
      %v1654 = vadd.f32 0.0, %v1653
      %v1655 = vpop.f32.mrf.mxu0
      %v1656 = vadd.f32 0.0, %v1655
      %1657 = vmatmul.bf16.gmra.mxu0 %v1621
      %v1658 = vpop.f32.mrf.mxu0
      %v1659 = vadd.f32 0.0, %v1658
      %v1660 = vpop.f32.mrf.mxu0
      %v1661 = vadd.f32 0.0, %v1660
      %1662 = vmatmul.bf16.gmra.mxu0 %v1624
      %v1663 = vpop.f32.mrf.mxu0
      %v1664 = vadd.f32 0.0, %v1663
      %v1665 = vpop.f32.mrf.mxu0
      %v1666 = vadd.f32 0.0, %v1665
      %1667 = vmatmul.bf16.gmra.mxu0 %v1627
      %v1668 = vpop.f32.mrf.mxu0
      %v1669 = vadd.f32 0.0, %v1668
      %v1670 = vpop.f32.mrf.mxu0
      %v1671 = vadd.f32 0.0, %v1670
      %1672 = vmatmul.bf16.gmra.mxu0 %v1630
      %v1673 = vpop.f32.mrf.mxu0
      %v1674 = vadd.f32 0.0, %v1673
      %v1675 = vpop.f32.mrf.mxu0
      %v1676 = vadd.f32 0.0, %v1675
      %1677 = vmatmul.bf16.gmra.mxu0 %v1633
      %v1678 = vpop.f32.mrf.mxu0
      %v1679 = vadd.f32 0.0, %v1678
      %v1680 = vpop.f32.mrf.mxu0
      %v1681 = vadd.f32 0.0, %v1680
      %1682 = vmatmul.bf16.gmra.mxu0 %v1636
      %v1683 = vpop.f32.mrf.mxu0
      %v1684 = vadd.f32 0.0, %v1683
      %v1685 = vpop.f32.mrf.mxu0
      %v1686 = vadd.f32 0.0, %v1685
      %1687 = vmatmul.bf16.gmra.mxu0 %v1639
      %v1688 = vpop.f32.mrf.mxu0
      %v1689 = vadd.f32 0.0, %v1688
      %v1690 = vpop.f32.mrf.mxu0
      %v1691 = vadd.f32 0.0, %v1690
      %1692 = vdwg.mxu0
      %v1693 = vadd.f32 %v1584, %v1654
      %v1694 = vadd.f32 %v1585, %v1656
      %v1695 = vadd.f32 %v1586, %v1659
      %v1696 = vadd.f32 %v1587, %v1661
      %v1697 = vadd.f32 %v1588, %v1664
      %v1698 = vadd.f32 %v1589, %v1666
      %v1699 = vadd.f32 %v1590, %v1669
      %v1700 = vadd.f32 %v1591, %v1671
      %v1701 = vadd.f32 %v1592, %v1674
      %v1702 = vadd.f32 %v1593, %v1676
      %v1703 = vadd.f32 %v1594, %v1679
      %v1704 = vadd.f32 %v1595, %v1681
      %v1705 = vadd.f32 %v1596, %v1684
      %v1706 = vadd.f32 %v1597, %v1686
      %v1707 = vadd.f32 %v1598, %v1689
      %v1708 = vadd.f32 %v1599, %v1691
      %v1709 = vrot.slane %v1444, 1
      %v1710 = vrot.slane %v1446, 2
      %v1711 = vor.u32 %v1709, %v1710
      %v1712 = vrot.slane %v1454, 1
      %v1713 = vrot.slane %v1450, 2
      %v1714 = vor.u32 %v1712, %v1713
      %v1715 = vsel %vm723, %v1711, %v1714
      %v1716 = vrot.slane %v1461, 1
      %v1717 = vrot.slane %v1457, 2
      %v1718 = vor.u32 %v1716, %v1717
      %v1719 = vsel %vm723, %v1714, %v1718
      %v1720 = vrot.slane %v1468, 1
      %v1721 = vrot.slane %v1464, 2
      %v1722 = vor.u32 %v1720, %v1721
      %v1723 = vsel %vm723, %v1718, %v1722
      %v1724 = vrot.slane %v1475, 1
      %v1725 = vrot.slane %v1471, 2
      %v1726 = vor.u32 %v1724, %v1725
      %v1727 = vsel %vm723, %v1722, %v1726
      %v1728 = vrot.slane %v1482, 1
      %v1729 = vrot.slane %v1478, 2
      %v1730 = vor.u32 %v1728, %v1729
      %v1731 = vsel %vm723, %v1726, %v1730
      %v1732 = vrot.slane %v1489, 1
      %v1733 = vrot.slane %v1485, 2
      %v1734 = vor.u32 %v1732, %v1733
      %v1735 = vsel %vm723, %v1730, %v1734
      %v1736 = vrot.slane %v1496, 1
      %v1737 = vrot.slane %v1492, 2
      %v1738 = vor.u32 %v1736, %v1737
      %v1739 = vsel %vm723, %v1734, %v1738
      %v1740 = vshrl.u32 %v1443, 16
      %v1742 = vrot.slane %v1740, 1
      %v1743 = vrot.slane %v1500, 2
      %v1744 = vor.u32 %v1742, %v1743
      %v1745 = vsel %vm723, %v1738, %v1744
      %v1747 = vunpack.c.l.b16 %v348
      %v1748 = vpack.c.b16 %v1747, %v1747
      %v1749 = vrot.slane %v1748, 2
      %v1751 = vsel %vm467, %v1715, 0
      %v1754 = vsel %vm467, %v1719, 0
      %v1757 = vsel %vm467, %v1723, 0
      %v1760 = vsel %vm467, %v1727, 0
      %v1763 = vsel %vm467, %v1731, 0
      %v1766 = vsel %vm467, %v1735, 0
      %v1769 = vsel %vm467, %v1739, 0
      %v1772 = vsel %vm467, %v1745, 0
      %v1775 = vsel %vm492, %v1749, 0
      %1777 = vmatpush.bf16.msra.mxu0 0
      %1778 = vmatpush.bf16.msra.mxu0 0
      %1779 = vmatpush.bf16.msra.mxu0 0
      %1780 = vmatpush.bf16.msra.mxu0 0
      %1781 = vmatpush.bf16.msra.mxu0 0
      %1782 = vmatpush.bf16.msra.mxu0 0
      %1783 = vmatpush.bf16.msra.mxu0 0
      %1784 = vmatpush.bf16.msra.mxu0 %v1775
      %1785 = vmatmul.bf16.gmra.mxu0 %v1751
      %v1786 = vpop.f32.mrf.mxu0
      %v1787 = vadd.f32 0.0, %v1786
      %v1788 = vpop.f32.mrf.mxu0
      %v1789 = vadd.f32 0.0, %v1788
      %1790 = vmatmul.bf16.gmra.mxu0 %v1754
      %v1791 = vpop.f32.mrf.mxu0
      %v1792 = vadd.f32 0.0, %v1791
      %v1793 = vpop.f32.mrf.mxu0
      %v1794 = vadd.f32 0.0, %v1793
      %1795 = vmatmul.bf16.gmra.mxu0 %v1757
      %v1796 = vpop.f32.mrf.mxu0
      %v1797 = vadd.f32 0.0, %v1796
      %v1798 = vpop.f32.mrf.mxu0
      %v1799 = vadd.f32 0.0, %v1798
      %1800 = vmatmul.bf16.gmra.mxu0 %v1760
      %v1801 = vpop.f32.mrf.mxu0
      %v1802 = vadd.f32 0.0, %v1801
      %v1803 = vpop.f32.mrf.mxu0
      %v1804 = vadd.f32 0.0, %v1803
      %1805 = vmatmul.bf16.gmra.mxu0 %v1763
      %v1806 = vpop.f32.mrf.mxu0
      %v1807 = vadd.f32 0.0, %v1806
      %v1808 = vpop.f32.mrf.mxu0
      %v1809 = vadd.f32 0.0, %v1808
      %1810 = vmatmul.bf16.gmra.mxu0 %v1766
      %v1811 = vpop.f32.mrf.mxu0
      %v1812 = vadd.f32 0.0, %v1811
      %v1813 = vpop.f32.mrf.mxu0
      %v1814 = vadd.f32 0.0, %v1813
      %1815 = vmatmul.bf16.gmra.mxu0 %v1769
      %v1816 = vpop.f32.mrf.mxu0
      %v1817 = vadd.f32 0.0, %v1816
      %v1818 = vpop.f32.mrf.mxu0
      %v1819 = vadd.f32 0.0, %v1818
      %1820 = vmatmul.bf16.gmra.mxu0 %v1772
      %v1821 = vpop.f32.mrf.mxu0
      %v1822 = vadd.f32 0.0, %v1821
      %v1823 = vpop.f32.mrf.mxu0
      %v1824 = vadd.f32 0.0, %v1823
      %1825 = vdwg.mxu0
      %v1826 = vadd.f32 %v1693, %v1787
      %v1827 = vadd.f32 %v1694, %v1789
      %v1828 = vadd.f32 %v1695, %v1792
      %v1829 = vadd.f32 %v1696, %v1794
      %v1830 = vadd.f32 %v1697, %v1797
      %v1831 = vadd.f32 %v1698, %v1799
      %v1832 = vadd.f32 %v1699, %v1802
      %v1833 = vadd.f32 %v1700, %v1804
      %v1834 = vadd.f32 %v1701, %v1807
      %v1835 = vadd.f32 %v1702, %v1809
      %v1836 = vadd.f32 %v1703, %v1812
      %v1837 = vadd.f32 %v1704, %v1814
      %v1838 = vadd.f32 %v1705, %v1817
      %v1839 = vadd.f32 %v1706, %v1819
      %v1840 = vadd.f32 %v1707, %v1822
      %v1841 = vadd.f32 %v1708, %v1824
      %v1842 = vrot.slane %v1341, 2
      %v1843 = vrot.slane %v1342, 2
      %v1844 = vsel %vm857, %v1842, %v1843
      %v1845 = vrot.slane %v1343, 2
      %v1846 = vsel %vm857, %v1843, %v1845
      %v1847 = vrot.slane %v1344, 2
      %v1848 = vsel %vm857, %v1845, %v1847
      %v1849 = vrot.slane %v1345, 2
      %v1850 = vsel %vm857, %v1847, %v1849
      %v1851 = vrot.slane %v1346, 2
      %v1852 = vsel %vm857, %v1849, %v1851
      %v1853 = vrot.slane %v1347, 2
      %v1854 = vsel %vm857, %v1851, %v1853
      %v1855 = vrot.slane %v1348, 2
      %v1856 = vsel %vm857, %v1853, %v1855
      %v1857 = vrot.slane %v1443, 2
      %v1858 = vsel %vm857, %v1855, %v1857
      %v1860 = vsel %vm467, %v1844, 0
      %v1863 = vsel %vm467, %v1846, 0
      %v1866 = vsel %vm467, %v1848, 0
      %v1869 = vsel %vm467, %v1850, 0
      %v1872 = vsel %vm467, %v1852, 0
      %v1875 = vsel %vm467, %v1854, 0
      %v1878 = vsel %vm467, %v1856, 0
      %v1881 = vsel %vm467, %v1858, 0
      %v1884 = vsel %vm492, %v349, 0
      %1886 = vmatpush.bf16.msra.mxu0 0
      %1887 = vmatpush.bf16.msra.mxu0 0
      %1888 = vmatpush.bf16.msra.mxu0 0
      %1889 = vmatpush.bf16.msra.mxu0 0
      %1890 = vmatpush.bf16.msra.mxu0 0
      %1891 = vmatpush.bf16.msra.mxu0 0
      %1892 = vmatpush.bf16.msra.mxu0 0
      %1893 = vmatpush.bf16.msra.mxu0 %v1884
      %1894 = vmatmul.bf16.gmra.mxu0 %v1860
      %v1895 = vpop.f32.mrf.mxu0
      %v1896 = vadd.f32 0.0, %v1895
      %v1897 = vpop.f32.mrf.mxu0
      %v1898 = vadd.f32 0.0, %v1897
      %1899 = vmatmul.bf16.gmra.mxu0 %v1863
      %v1900 = vpop.f32.mrf.mxu0
      %v1901 = vadd.f32 0.0, %v1900
      %v1902 = vpop.f32.mrf.mxu0
      %v1903 = vadd.f32 0.0, %v1902
      %1904 = vmatmul.bf16.gmra.mxu0 %v1866
      %v1905 = vpop.f32.mrf.mxu0
      %v1906 = vadd.f32 0.0, %v1905
      %v1907 = vpop.f32.mrf.mxu0
      %v1908 = vadd.f32 0.0, %v1907
      %1909 = vmatmul.bf16.gmra.mxu0 %v1869
      %v1910 = vpop.f32.mrf.mxu0
      %v1911 = vadd.f32 0.0, %v1910
      %v1912 = vpop.f32.mrf.mxu0
      %v1913 = vadd.f32 0.0, %v1912
      %1914 = vmatmul.bf16.gmra.mxu0 %v1872
      %v1915 = vpop.f32.mrf.mxu0
      %v1916 = vadd.f32 0.0, %v1915
      %v1917 = vpop.f32.mrf.mxu0
      %v1918 = vadd.f32 0.0, %v1917
      %1919 = vmatmul.bf16.gmra.mxu0 %v1875
      %v1920 = vpop.f32.mrf.mxu0
      %v1921 = vadd.f32 0.0, %v1920
      %v1922 = vpop.f32.mrf.mxu0
      %v1923 = vadd.f32 0.0, %v1922
      %1924 = vmatmul.bf16.gmra.mxu0 %v1878
      %v1925 = vpop.f32.mrf.mxu0
      %v1926 = vadd.f32 0.0, %v1925
      %v1927 = vpop.f32.mrf.mxu0
      %v1928 = vadd.f32 0.0, %v1927
      %1929 = vmatmul.bf16.gmra.mxu0 %v1881
      %v1930 = vpop.f32.mrf.mxu0
      %v1931 = vadd.f32 0.0, %v1930
      %v1932 = vpop.f32.mrf.mxu0
      %v1933 = vadd.f32 0.0, %v1932
      %1934 = vdwg.mxu0
      %v1935 = vadd.f32 %v1826, %v1896
      %v1936 = vadd.f32 %v1827, %v1898
      %v1937 = vadd.f32 %v1828, %v1901
      %v1938 = vadd.f32 %v1829, %v1903
      %v1939 = vadd.f32 %v1830, %v1906
      %v1940 = vadd.f32 %v1831, %v1908
      %v1941 = vadd.f32 %v1832, %v1911
      %v1942 = vadd.f32 %v1833, %v1913
      %v1943 = vadd.f32 %v1834, %v1916
      %v1944 = vadd.f32 %v1835, %v1918
      %v1945 = vadd.f32 %v1836, %v1921
      %v1946 = vadd.f32 %v1837, %v1923
      %v1947 = vadd.f32 %v1838, %v1926
      %v1948 = vadd.f32 %v1839, %v1928
      %v1949 = vadd.f32 %v1840, %v1931
      %v1950 = vadd.f32 %v1841, %v1933
      %v1951 = vrot.slane %v1444, 2
      %v1952 = vrot.slane %v1446, 3
      %v1953 = vor.u32 %v1951, %v1952
      %v1954 = vrot.slane %v1454, 2
      %v1955 = vrot.slane %v1450, 3
      %v1956 = vor.u32 %v1954, %v1955
      %v1957 = vsel %vm967, %v1953, %v1956
      %v1958 = vrot.slane %v1461, 2
      %v1959 = vrot.slane %v1457, 3
      %v1960 = vor.u32 %v1958, %v1959
      %v1961 = vsel %vm967, %v1956, %v1960
      %v1962 = vrot.slane %v1468, 2
      %v1963 = vrot.slane %v1464, 3
      %v1964 = vor.u32 %v1962, %v1963
      %v1965 = vsel %vm967, %v1960, %v1964
      %v1966 = vrot.slane %v1475, 2
      %v1967 = vrot.slane %v1471, 3
      %v1968 = vor.u32 %v1966, %v1967
      %v1969 = vsel %vm967, %v1964, %v1968
      %v1970 = vrot.slane %v1482, 2
      %v1971 = vrot.slane %v1478, 3
      %v1972 = vor.u32 %v1970, %v1971
      %v1973 = vsel %vm967, %v1968, %v1972
      %v1974 = vrot.slane %v1489, 2
      %v1975 = vrot.slane %v1485, 3
      %v1976 = vor.u32 %v1974, %v1975
      %v1977 = vsel %vm967, %v1972, %v1976
      %v1978 = vrot.slane %v1496, 2
      %v1979 = vrot.slane %v1492, 3
      %v1980 = vor.u32 %v1978, %v1979
      %v1981 = vsel %vm967, %v1976, %v1980
      %v1982 = vrot.slane %v1740, 2
      %v1983 = vrot.slane %v1500, 3
      %v1984 = vor.u32 %v1982, %v1983
      %v1985 = vsel %vm967, %v1980, %v1984
      %v1987 = vunpack.c.l.b16 %v349
      %v1988 = vpack.c.b16 %v1987, %v1987
      %v1989 = vrot.slane %v1988, 2
      %v1991 = vsel %vm467, %v1957, 0
      %v1994 = vsel %vm467, %v1961, 0
      %v1997 = vsel %vm467, %v1965, 0
      %v2000 = vsel %vm467, %v1969, 0
      %v2003 = vsel %vm467, %v1973, 0
      %v2006 = vsel %vm467, %v1977, 0
      %v2009 = vsel %vm467, %v1981, 0
      %v2012 = vsel %vm467, %v1985, 0
      %v2015 = vsel %vm492, %v1989, 0
      %2017 = vmatpush.bf16.msra.mxu0 0
      %2018 = vmatpush.bf16.msra.mxu0 0
      %2019 = vmatpush.bf16.msra.mxu0 0
      %2020 = vmatpush.bf16.msra.mxu0 0
      %2021 = vmatpush.bf16.msra.mxu0 0
      %2022 = vmatpush.bf16.msra.mxu0 0
      %2023 = vmatpush.bf16.msra.mxu0 0
      %2024 = vmatpush.bf16.msra.mxu0 %v2015
      %2025 = vmatmul.bf16.gmra.mxu0 %v1991
      %v2026 = vpop.f32.mrf.mxu0
      %v2027 = vadd.f32 0.0, %v2026
      %v2028 = vpop.f32.mrf.mxu0
      %v2029 = vadd.f32 0.0, %v2028
      %2030 = vmatmul.bf16.gmra.mxu0 %v1994
      %v2031 = vpop.f32.mrf.mxu0
      %v2032 = vadd.f32 0.0, %v2031
      %v2033 = vpop.f32.mrf.mxu0
      %v2034 = vadd.f32 0.0, %v2033
      %2035 = vmatmul.bf16.gmra.mxu0 %v1997
      %v2036 = vpop.f32.mrf.mxu0
      %v2037 = vadd.f32 0.0, %v2036
      %v2038 = vpop.f32.mrf.mxu0
      %v2039 = vadd.f32 0.0, %v2038
      %2040 = vmatmul.bf16.gmra.mxu0 %v2000
      %v2041 = vpop.f32.mrf.mxu0
      %v2042 = vadd.f32 0.0, %v2041
      %v2043 = vpop.f32.mrf.mxu0
      %v2044 = vadd.f32 0.0, %v2043
      %2045 = vmatmul.bf16.gmra.mxu0 %v2003
      %v2046 = vpop.f32.mrf.mxu0
      %v2047 = vadd.f32 0.0, %v2046
      %v2048 = vpop.f32.mrf.mxu0
      %v2049 = vadd.f32 0.0, %v2048
      %2050 = vmatmul.bf16.gmra.mxu0 %v2006
      %v2051 = vpop.f32.mrf.mxu0
      %v2052 = vadd.f32 0.0, %v2051
      %v2053 = vpop.f32.mrf.mxu0
      %v2054 = vadd.f32 0.0, %v2053
      %2055 = vmatmul.bf16.gmra.mxu0 %v2009
      %v2056 = vpop.f32.mrf.mxu0
      %v2057 = vadd.f32 0.0, %v2056
      %v2058 = vpop.f32.mrf.mxu0
      %v2059 = vadd.f32 0.0, %v2058
      %2060 = vmatmul.bf16.gmra.mxu0 %v2012
      %v2061 = vpop.f32.mrf.mxu0
      %v2062 = vadd.f32 0.0, %v2061
      %v2063 = vpop.f32.mrf.mxu0
      %v2064 = vadd.f32 0.0, %v2063
      %2065 = vdwg.mxu0
      %v2066 = vadd.f32 %v1935, %v2027
      %v2067 = vadd.f32 %v1936, %v2029
      %v2068 = vadd.f32 %v1937, %v2032
      %v2069 = vadd.f32 %v1938, %v2034
      %v2070 = vadd.f32 %v1939, %v2037
      %v2071 = vadd.f32 %v1940, %v2039
      %v2072 = vadd.f32 %v1941, %v2042
      %v2073 = vadd.f32 %v1942, %v2044
      %v2074 = vadd.f32 %v1943, %v2047
      %v2075 = vadd.f32 %v1944, %v2049
      %v2076 = vadd.f32 %v1945, %v2052
      %v2077 = vadd.f32 %v1946, %v2054
      %v2078 = vadd.f32 %v1947, %v2057
      %v2079 = vadd.f32 %v1948, %v2059
      %v2080 = vadd.f32 %v1949, %v2062
      %v2081 = vadd.f32 %v1950, %v2064
      %v2082 = vrot.slane %v1341, 3
      %v2083 = vrot.slane %v1342, 3
      %v2084 = vsel %vm1099, %v2082, %v2083
      %v2085 = vrot.slane %v1343, 3
      %v2086 = vsel %vm1099, %v2083, %v2085
      %v2087 = vrot.slane %v1344, 3
      %v2088 = vsel %vm1099, %v2085, %v2087
      %v2089 = vrot.slane %v1345, 3
      %v2090 = vsel %vm1099, %v2087, %v2089
      %v2091 = vrot.slane %v1346, 3
      %v2092 = vsel %vm1099, %v2089, %v2091
      %v2093 = vrot.slane %v1347, 3
      %v2094 = vsel %vm1099, %v2091, %v2093
      %v2095 = vrot.slane %v1348, 3
      %v2096 = vsel %vm1099, %v2093, %v2095
      %v2097 = vrot.slane %v1443, 3
      %v2098 = vsel %vm1099, %v2095, %v2097
      %v2100 = vsel %vm467, %v2084, 0
      %v2103 = vsel %vm467, %v2086, 0
      %v2106 = vsel %vm467, %v2088, 0
      %v2109 = vsel %vm467, %v2090, 0
      %v2112 = vsel %vm467, %v2092, 0
      %v2115 = vsel %vm467, %v2094, 0
      %v2118 = vsel %vm467, %v2096, 0
      %v2121 = vsel %vm467, %v2098, 0
      %v2124 = vsel %vm492, %v350, 0
      %2126 = vmatpush.bf16.msra.mxu0 0
      %2127 = vmatpush.bf16.msra.mxu0 0
      %2128 = vmatpush.bf16.msra.mxu0 0
      %2129 = vmatpush.bf16.msra.mxu0 0
      %2130 = vmatpush.bf16.msra.mxu0 0
      %2131 = vmatpush.bf16.msra.mxu0 0
      %2132 = vmatpush.bf16.msra.mxu0 0
      %2133 = vmatpush.bf16.msra.mxu0 %v2124
      %2134 = vmatmul.bf16.gmra.mxu0 %v2100
      %v2135 = vpop.f32.mrf.mxu0
      %v2136 = vadd.f32 0.0, %v2135
      %v2137 = vpop.f32.mrf.mxu0
      %v2138 = vadd.f32 0.0, %v2137
      %2139 = vmatmul.bf16.gmra.mxu0 %v2103
      %v2140 = vpop.f32.mrf.mxu0
      %v2141 = vadd.f32 0.0, %v2140
      %v2142 = vpop.f32.mrf.mxu0
      %v2143 = vadd.f32 0.0, %v2142
      %2144 = vmatmul.bf16.gmra.mxu0 %v2106
      %v2145 = vpop.f32.mrf.mxu0
      %v2146 = vadd.f32 0.0, %v2145
      %v2147 = vpop.f32.mrf.mxu0
      %v2148 = vadd.f32 0.0, %v2147
      %2149 = vmatmul.bf16.gmra.mxu0 %v2109
      %v2150 = vpop.f32.mrf.mxu0
      %v2151 = vadd.f32 0.0, %v2150
      %v2152 = vpop.f32.mrf.mxu0
      %v2153 = vadd.f32 0.0, %v2152
      %2154 = vmatmul.bf16.gmra.mxu0 %v2112
      %v2155 = vpop.f32.mrf.mxu0
      %v2156 = vadd.f32 0.0, %v2155
      %v2157 = vpop.f32.mrf.mxu0
      %v2158 = vadd.f32 0.0, %v2157
      %2159 = vmatmul.bf16.gmra.mxu0 %v2115
      %v2160 = vpop.f32.mrf.mxu0
      %v2161 = vadd.f32 0.0, %v2160
      %v2162 = vpop.f32.mrf.mxu0
      %v2163 = vadd.f32 0.0, %v2162
      %2164 = vmatmul.bf16.gmra.mxu0 %v2118
      %v2165 = vpop.f32.mrf.mxu0
      %v2166 = vadd.f32 0.0, %v2165
      %v2167 = vpop.f32.mrf.mxu0
      %v2168 = vadd.f32 0.0, %v2167
      %2169 = vmatmul.bf16.gmra.mxu0 %v2121
      %v2170 = vpop.f32.mrf.mxu0
      %v2171 = vadd.f32 0.0, %v2170
      %v2172 = vpop.f32.mrf.mxu0
      %v2173 = vadd.f32 0.0, %v2172
      %2174 = vdwg.mxu0
      %v2175 = vadd.f32 %v2066, %v2136
      %v2176 = vadd.f32 %v2067, %v2138
      %v2177 = vadd.f32 %v2068, %v2141
      %v2178 = vadd.f32 %v2069, %v2143
      %v2179 = vadd.f32 %v2070, %v2146
      %v2180 = vadd.f32 %v2071, %v2148
      %v2181 = vadd.f32 %v2072, %v2151
      %v2182 = vadd.f32 %v2073, %v2153
      %v2183 = vadd.f32 %v2074, %v2156
      %v2184 = vadd.f32 %v2075, %v2158
      %v2185 = vadd.f32 %v2076, %v2161
      %v2186 = vadd.f32 %v2077, %v2163
      %v2187 = vadd.f32 %v2078, %v2166
      %v2188 = vadd.f32 %v2079, %v2168
      %v2189 = vadd.f32 %v2080, %v2171
      %v2190 = vadd.f32 %v2081, %v2173
      %v2191 = vld [vmem:[%s2] sm:$0x1]
      %v2193 = vperm.slane %v2191, 0
      %v2195 = vadd.f32 %v2175, %v2193
      %v2196 = vadd.f32 %v2176, %v2193
      %v2197 = vadd.f32 %v2177, %v2193
      %v2198 = vadd.f32 %v2178, %v2193
      %v2199 = vadd.f32 %v2179, %v2193
      %v2200 = vadd.f32 %v2180, %v2193
      %v2201 = vadd.f32 %v2181, %v2193
      %v2202 = vadd.f32 %v2182, %v2193
      %v2203 = vadd.f32 %v2183, %v2193
      %v2204 = vadd.f32 %v2184, %v2193
      %v2205 = vadd.f32 %v2185, %v2193
      %v2206 = vadd.f32 %v2186, %v2193
      %v2207 = vadd.f32 %v2187, %v2193
      %v2208 = vadd.f32 %v2188, %v2193
      %v2209 = vadd.f32 %v2189, %v2193
      %v2210 = vadd.f32 %v2190, %v2193
      %v2211 = vld [vmem:[%s3] sm:$0x1]
      %v2213 = vperm.slane %v2211, 0
      %v2215 = vmul.f32 %v2195, %v2213
      %v2216 = vmul.f32 %v2196, %v2213
      %v2217 = vmul.f32 %v2197, %v2213
      %v2218 = vmul.f32 %v2198, %v2213
      %v2219 = vmul.f32 %v2199, %v2213
      %v2220 = vmul.f32 %v2200, %v2213
      %v2221 = vmul.f32 %v2201, %v2213
      %v2222 = vmul.f32 %v2202, %v2213
      %v2223 = vmul.f32 %v2203, %v2213
      %v2224 = vmul.f32 %v2204, %v2213
      %v2225 = vmul.f32 %v2205, %v2213
      %v2226 = vmul.f32 %v2206, %v2213
      %v2227 = vmul.f32 %v2207, %v2213
      %v2228 = vmul.f32 %v2208, %v2213
      %v2229 = vmul.f32 %v2209, %v2213
      %v2230 = vmul.f32 %v2210, %v2213
      %v2231 = vld [vmem:[%s4] sm:$0x1]
      %v2233 = vperm.slane %v2231, 0
      %v2235 = vadd.f32 %v2215, %v2233
      %v2236 = vadd.f32 %v2216, %v2233
      %v2237 = vadd.f32 %v2217, %v2233
      %v2238 = vadd.f32 %v2218, %v2233
      %v2239 = vadd.f32 %v2219, %v2233
      %v2240 = vadd.f32 %v2220, %v2233
      %v2241 = vadd.f32 %v2221, %v2233
      %v2242 = vadd.f32 %v2222, %v2233
      %v2243 = vadd.f32 %v2223, %v2233
      %v2244 = vadd.f32 %v2224, %v2233
      %v2245 = vadd.f32 %v2225, %v2233
      %v2246 = vadd.f32 %v2226, %v2233
      %v2247 = vadd.f32 %v2227, %v2233
      %v2248 = vadd.f32 %v2228, %v2233
      %v2249 = vadd.f32 %v2229, %v2233
      %v2250 = vadd.f32 %v2230, %v2233
      %v2251 = vmul.f32 %v2235, -1.702
      %v2252 = vmul.f32 %v2236, -1.702
      %v2253 = vmul.f32 %v2237, -1.702
      %v2254 = vmul.f32 %v2238, -1.702
      %v2255 = vmul.f32 %v2239, -1.702
      %v2256 = vmul.f32 %v2240, -1.702
      %v2257 = vmul.f32 %v2241, -1.702
      %v2258 = vmul.f32 %v2242, -1.702
      %v2259 = vmul.f32 %v2243, -1.702
      %v2260 = vmul.f32 %v2244, -1.702
      %v2261 = vmul.f32 %v2245, -1.702
      %v2262 = vmul.f32 %v2246, -1.702
      %v2263 = vmul.f32 %v2247, -1.702
      %v2264 = vmul.f32 %v2248, -1.702
      %v2265 = vmul.f32 %v2249, -1.702
      %v2266 = vmul.f32 %v2250, -1.702
      %v2267 = vmul.f32 %v2251, 1.442695
      %v2268 = vpow.pop %v2267
      %v2269 = vmul.f32 %v2252, 1.442695
      %v2270 = vpow.pop %v2269
      %v2271 = vmul.f32 %v2253, 1.442695
      %v2272 = vpow.pop %v2271
      %v2273 = vmul.f32 %v2254, 1.442695
      %v2274 = vpow.pop %v2273
      %v2275 = vmul.f32 %v2255, 1.442695
      %v2276 = vpow.pop %v2275
      %v2277 = vmul.f32 %v2256, 1.442695
      %v2278 = vpow.pop %v2277
      %v2279 = vmul.f32 %v2257, 1.442695
      %v2280 = vpow.pop %v2279
      %v2281 = vmul.f32 %v2258, 1.442695
      %v2282 = vpow.pop %v2281
      %v2283 = vmul.f32 %v2259, 1.442695
      %v2284 = vpow.pop %v2283
      %v2285 = vmul.f32 %v2260, 1.442695
      %v2286 = vpow.pop %v2285
      %v2287 = vmul.f32 %v2261, 1.442695
      %v2288 = vpow.pop %v2287
      %v2289 = vmul.f32 %v2262, 1.442695
      %v2290 = vpow.pop %v2289
      %v2291 = vmul.f32 %v2263, 1.442695
      %v2292 = vpow.pop %v2291
      %v2293 = vmul.f32 %v2264, 1.442695
      %v2294 = vpow.pop %v2293
      %v2295 = vmul.f32 %v2265, 1.442695
      %v2296 = vpow.pop %v2295
      %v2297 = vmul.f32 %v2266, 1.442695
      %v2298 = vpow.pop %v2297
      %v2299 = vadd.f32 %v2268, 1.0
      %v2300 = vadd.f32 %v2270, 1.0
      %v2301 = vadd.f32 %v2272, 1.0
      %v2302 = vadd.f32 %v2274, 1.0
      %v2303 = vadd.f32 %v2276, 1.0
      %v2304 = vadd.f32 %v2278, 1.0
      %v2305 = vadd.f32 %v2280, 1.0
      %v2306 = vadd.f32 %v2282, 1.0
      %v2307 = vadd.f32 %v2284, 1.0
      %v2308 = vadd.f32 %v2286, 1.0
      %v2309 = vadd.f32 %v2288, 1.0
      %v2310 = vadd.f32 %v2290, 1.0
      %v2311 = vadd.f32 %v2292, 1.0
      %v2312 = vadd.f32 %v2294, 1.0
      %v2313 = vadd.f32 %v2296, 1.0
      %v2314 = vadd.f32 %v2298, 1.0
      %v2315 = vrcp.pop %v2299
      %v2316 = vmul.f32 %v2299, %v2315
      %v2317 = vsub.f32 1.0, %v2316
      %v2318 = vmul.f32 %v2315, %v2317
      %v2319 = vadd.f32 %v2315, %v2318
      %vm2320 = vweird.f32 %v2299
      %vm2321 = vweird.f32 %v2315
      %vm2322 = vmor %vm2320, %vm2321
      %v2323 = vsel %vm2322, %v2315, %v2319
      %v2324 = vand.u32 2147483647, %v2299
      %vm2325 = vcmp.eq.f32.partialorder %v2324, 8.507059e+37
      %v2326 = vand.u32 %v2299, 2147483648
      %v2327 = vor.u32 1.1754944e-38, %v2326
      %v2328 = vsel %vm2325, %v2327, %v2323
      %v2329 = vmul.f32 %v2235, %v2328
      %v2330 = vrcp.pop %v2300
      %v2331 = vmul.f32 %v2300, %v2330
      %v2332 = vsub.f32 1.0, %v2331
      %v2333 = vmul.f32 %v2330, %v2332
      %v2334 = vadd.f32 %v2330, %v2333
      %vm2335 = vweird.f32 %v2300
      %vm2336 = vweird.f32 %v2330
      %vm2337 = vmor %vm2335, %vm2336
      %v2338 = vsel %vm2337, %v2330, %v2334
      %v2339 = vand.u32 2147483647, %v2300
      %vm2340 = vcmp.eq.f32.partialorder %v2339, 8.507059e+37
      %v2341 = vand.u32 %v2300, 2147483648
      %v2342 = vor.u32 1.1754944e-38, %v2341
      %v2343 = vsel %vm2340, %v2342, %v2338
      %v2344 = vmul.f32 %v2236, %v2343
      %v2345 = vrcp.pop %v2301
      %v2346 = vmul.f32 %v2301, %v2345
      %v2347 = vsub.f32 1.0, %v2346
      %v2348 = vmul.f32 %v2345, %v2347
      %v2349 = vadd.f32 %v2345, %v2348
      %vm2350 = vweird.f32 %v2301
      %vm2351 = vweird.f32 %v2345
      %vm2352 = vmor %vm2350, %vm2351
      %v2353 = vsel %vm2352, %v2345, %v2349
      %v2354 = vand.u32 2147483647, %v2301
      %vm2355 = vcmp.eq.f32.partialorder %v2354, 8.507059e+37
      %v2356 = vand.u32 %v2301, 2147483648
      %v2357 = vor.u32 1.1754944e-38, %v2356
      %v2358 = vsel %vm2355, %v2357, %v2353
      %v2359 = vmul.f32 %v2237, %v2358
      %v2360 = vrcp.pop %v2302
      %v2361 = vmul.f32 %v2302, %v2360
      %v2362 = vsub.f32 1.0, %v2361
      %v2363 = vmul.f32 %v2360, %v2362
      %v2364 = vadd.f32 %v2360, %v2363
      %vm2365 = vweird.f32 %v2302
      %vm2366 = vweird.f32 %v2360
      %vm2367 = vmor %vm2365, %vm2366
      %v2368 = vsel %vm2367, %v2360, %v2364
      %v2369 = vand.u32 2147483647, %v2302
      %vm2370 = vcmp.eq.f32.partialorder %v2369, 8.507059e+37
      %v2371 = vand.u32 %v2302, 2147483648
      %v2372 = vor.u32 1.1754944e-38, %v2371
      %v2373 = vsel %vm2370, %v2372, %v2368
      %v2374 = vmul.f32 %v2238, %v2373
      %v2375 = vrcp.pop %v2303
      %v2376 = vmul.f32 %v2303, %v2375
      %v2377 = vsub.f32 1.0, %v2376
      %v2378 = vmul.f32 %v2375, %v2377
      %v2379 = vadd.f32 %v2375, %v2378
      %vm2380 = vweird.f32 %v2303
      %vm2381 = vweird.f32 %v2375
      %vm2382 = vmor %vm2380, %vm2381
      %v2383 = vsel %vm2382, %v2375, %v2379
      %v2384 = vand.u32 2147483647, %v2303
      %vm2385 = vcmp.eq.f32.partialorder %v2384, 8.507059e+37
      %v2386 = vand.u32 %v2303, 2147483648
      %v2387 = vor.u32 1.1754944e-38, %v2386
      %v2388 = vsel %vm2385, %v2387, %v2383
      %v2389 = vmul.f32 %v2239, %v2388
      %v2390 = vrcp.pop %v2304
      %v2391 = vmul.f32 %v2304, %v2390
      %v2392 = vsub.f32 1.0, %v2391
      %v2393 = vmul.f32 %v2390, %v2392
      %v2394 = vadd.f32 %v2390, %v2393
      %vm2395 = vweird.f32 %v2304
      %vm2396 = vweird.f32 %v2390
      %vm2397 = vmor %vm2395, %vm2396
      %v2398 = vsel %vm2397, %v2390, %v2394
      %v2399 = vand.u32 2147483647, %v2304
      %vm2400 = vcmp.eq.f32.partialorder %v2399, 8.507059e+37
      %v2401 = vand.u32 %v2304, 2147483648
      %v2402 = vor.u32 1.1754944e-38, %v2401
      %v2403 = vsel %vm2400, %v2402, %v2398
      %v2404 = vmul.f32 %v2240, %v2403
      %v2405 = vrcp.pop %v2305
      %v2406 = vmul.f32 %v2305, %v2405
      %v2407 = vsub.f32 1.0, %v2406
      %v2408 = vmul.f32 %v2405, %v2407
      %v2409 = vadd.f32 %v2405, %v2408
      %vm2410 = vweird.f32 %v2305
      %vm2411 = vweird.f32 %v2405
      %vm2412 = vmor %vm2410, %vm2411
      %v2413 = vsel %vm2412, %v2405, %v2409
      %v2414 = vand.u32 2147483647, %v2305
      %vm2415 = vcmp.eq.f32.partialorder %v2414, 8.507059e+37
      %v2416 = vand.u32 %v2305, 2147483648
      %v2417 = vor.u32 1.1754944e-38, %v2416
      %v2418 = vsel %vm2415, %v2417, %v2413
      %v2419 = vmul.f32 %v2241, %v2418
      %v2420 = vrcp.pop %v2306
      %v2421 = vmul.f32 %v2306, %v2420
      %v2422 = vsub.f32 1.0, %v2421
      %v2423 = vmul.f32 %v2420, %v2422
      %v2424 = vadd.f32 %v2420, %v2423
      %vm2425 = vweird.f32 %v2306
      %vm2426 = vweird.f32 %v2420
      %vm2427 = vmor %vm2425, %vm2426
      %v2428 = vsel %vm2427, %v2420, %v2424
      %v2429 = vand.u32 2147483647, %v2306
      %vm2430 = vcmp.eq.f32.partialorder %v2429, 8.507059e+37
      %v2431 = vand.u32 %v2306, 2147483648
      %v2432 = vor.u32 1.1754944e-38, %v2431
      %v2433 = vsel %vm2430, %v2432, %v2428
      %v2434 = vmul.f32 %v2242, %v2433
      %v2435 = vrcp.pop %v2307
      %v2436 = vmul.f32 %v2307, %v2435
      %v2437 = vsub.f32 1.0, %v2436
      %v2438 = vmul.f32 %v2435, %v2437
      %v2439 = vadd.f32 %v2435, %v2438
      %vm2440 = vweird.f32 %v2307
      %vm2441 = vweird.f32 %v2435
      %vm2442 = vmor %vm2440, %vm2441
      %v2443 = vsel %vm2442, %v2435, %v2439
      %v2444 = vand.u32 2147483647, %v2307
      %vm2445 = vcmp.eq.f32.partialorder %v2444, 8.507059e+37
      %v2446 = vand.u32 %v2307, 2147483648
      %v2447 = vor.u32 1.1754944e-38, %v2446
      %v2448 = vsel %vm2445, %v2447, %v2443
      %v2449 = vmul.f32 %v2243, %v2448
      %v2450 = vrcp.pop %v2308
      %v2451 = vmul.f32 %v2308, %v2450
      %v2452 = vsub.f32 1.0, %v2451
      %v2453 = vmul.f32 %v2450, %v2452
      %v2454 = vadd.f32 %v2450, %v2453
      %vm2455 = vweird.f32 %v2308
      %vm2456 = vweird.f32 %v2450
      %vm2457 = vmor %vm2455, %vm2456
      %v2458 = vsel %vm2457, %v2450, %v2454
      %v2459 = vand.u32 2147483647, %v2308
      %vm2460 = vcmp.eq.f32.partialorder %v2459, 8.507059e+37
      %v2461 = vand.u32 %v2308, 2147483648
      %v2462 = vor.u32 1.1754944e-38, %v2461
      %v2463 = vsel %vm2460, %v2462, %v2458
      %v2464 = vmul.f32 %v2244, %v2463
      %v2465 = vrcp.pop %v2309
      %v2466 = vmul.f32 %v2309, %v2465
      %v2467 = vsub.f32 1.0, %v2466
      %v2468 = vmul.f32 %v2465, %v2467
      %v2469 = vadd.f32 %v2465, %v2468
      %vm2470 = vweird.f32 %v2309
      %vm2471 = vweird.f32 %v2465
      %vm2472 = vmor %vm2470, %vm2471
      %v2473 = vsel %vm2472, %v2465, %v2469
      %v2474 = vand.u32 2147483647, %v2309
      %vm2475 = vcmp.eq.f32.partialorder %v2474, 8.507059e+37
      %v2476 = vand.u32 %v2309, 2147483648
      %v2477 = vor.u32 1.1754944e-38, %v2476
      %v2478 = vsel %vm2475, %v2477, %v2473
      %v2479 = vmul.f32 %v2245, %v2478
      %v2480 = vrcp.pop %v2310
      %v2481 = vmul.f32 %v2310, %v2480
      %v2482 = vsub.f32 1.0, %v2481
      %v2483 = vmul.f32 %v2480, %v2482
      %v2484 = vadd.f32 %v2480, %v2483
      %vm2485 = vweird.f32 %v2310
      %vm2486 = vweird.f32 %v2480
      %vm2487 = vmor %vm2485, %vm2486
      %v2488 = vsel %vm2487, %v2480, %v2484
      %v2489 = vand.u32 2147483647, %v2310
      %vm2490 = vcmp.eq.f32.partialorder %v2489, 8.507059e+37
      %v2491 = vand.u32 %v2310, 2147483648
      %v2492 = vor.u32 1.1754944e-38, %v2491
      %v2493 = vsel %vm2490, %v2492, %v2488
      %v2494 = vmul.f32 %v2246, %v2493
      %v2495 = vrcp.pop %v2311
      %v2496 = vmul.f32 %v2311, %v2495
      %v2497 = vsub.f32 1.0, %v2496
      %v2498 = vmul.f32 %v2495, %v2497
      %v2499 = vadd.f32 %v2495, %v2498
      %vm2500 = vweird.f32 %v2311
      %vm2501 = vweird.f32 %v2495
      %vm2502 = vmor %vm2500, %vm2501
      %v2503 = vsel %vm2502, %v2495, %v2499
      %v2504 = vand.u32 2147483647, %v2311
      %vm2505 = vcmp.eq.f32.partialorder %v2504, 8.507059e+37
      %v2506 = vand.u32 %v2311, 2147483648
      %v2507 = vor.u32 1.1754944e-38, %v2506
      %v2508 = vsel %vm2505, %v2507, %v2503
      %v2509 = vmul.f32 %v2247, %v2508
      %v2510 = vrcp.pop %v2312
      %v2511 = vmul.f32 %v2312, %v2510
      %v2512 = vsub.f32 1.0, %v2511
      %v2513 = vmul.f32 %v2510, %v2512
      %v2514 = vadd.f32 %v2510, %v2513
      %vm2515 = vweird.f32 %v2312
      %vm2516 = vweird.f32 %v2510
      %vm2517 = vmor %vm2515, %vm2516
      %v2518 = vsel %vm2517, %v2510, %v2514
      %v2519 = vand.u32 2147483647, %v2312
      %vm2520 = vcmp.eq.f32.partialorder %v2519, 8.507059e+37
      %v2521 = vand.u32 %v2312, 2147483648
      %v2522 = vor.u32 1.1754944e-38, %v2521
      %v2523 = vsel %vm2520, %v2522, %v2518
      %v2524 = vmul.f32 %v2248, %v2523
      %v2525 = vrcp.pop %v2313
      %v2526 = vmul.f32 %v2313, %v2525
      %v2527 = vsub.f32 1.0, %v2526
      %v2528 = vmul.f32 %v2525, %v2527
      %v2529 = vadd.f32 %v2525, %v2528
      %vm2530 = vweird.f32 %v2313
      %vm2531 = vweird.f32 %v2525
      %vm2532 = vmor %vm2530, %vm2531
      %v2533 = vsel %vm2532, %v2525, %v2529
      %v2534 = vand.u32 2147483647, %v2313
      %vm2535 = vcmp.eq.f32.partialorder %v2534, 8.507059e+37
      %v2536 = vand.u32 %v2313, 2147483648
      %v2537 = vor.u32 1.1754944e-38, %v2536
      %v2538 = vsel %vm2535, %v2537, %v2533
      %v2539 = vmul.f32 %v2249, %v2538
      %v2540 = vrcp.pop %v2314
      %v2541 = vmul.f32 %v2314, %v2540
      %v2542 = vsub.f32 1.0, %v2541
      %v2543 = vmul.f32 %v2540, %v2542
      %v2544 = vadd.f32 %v2540, %v2543
      %vm2545 = vweird.f32 %v2314
      %vm2546 = vweird.f32 %v2540
      %vm2547 = vmor %vm2545, %vm2546
      %v2548 = vsel %vm2547, %v2540, %v2544
      %v2549 = vand.u32 2147483647, %v2314
      %vm2550 = vcmp.eq.f32.partialorder %v2549, 8.507059e+37
      %v2551 = vand.u32 %v2314, 2147483648
      %v2552 = vor.u32 1.1754944e-38, %v2551
      %v2553 = vsel %vm2550, %v2552, %v2548
      %v2554 = vmul.f32 %v2250, %v2553
      %v2555 = vpack.c.bf16 %v2344, %v2329
      %v2556 = vpack.c.bf16 %v2374, %v2359
      %v2557 = vpack.c.bf16 %v2404, %v2389
      %v2558 = vpack.c.bf16 %v2434, %v2419
      %v2559 = vpack.c.bf16 %v2464, %v2449
      %v2560 = vpack.c.bf16 %v2494, %v2479
      %v2561 = vpack.c.bf16 %v2524, %v2509
      %v2562 = vpack.c.bf16 %v2554, %v2539
      %v2563 = vld [vmem:[%s5] sm:$0xf]
      %v2564 = vld [vmem:[%s5 + $0x4] sm:$0xf]
      %v2565 = vld [vmem:[%s6] sm:$0x1]
      %v2567 = vperm.slane %v2565, 0
      %v2571 = vunpack.c.l.b16 %v2563
      %v2572 = vunpack.c.l.b16 %v2564
      %v2573 = vpack.c.b16 %v2572, %v2571
      %vm2575 = vcmask 130048
      %v2577 = vsel %vm2575, %v2555, 0
      %v2580 = vsel %vm2575, %v2556, 0
      %v2583 = vsel %vm2575, %v2557, 0
      %v2586 = vsel %vm2575, %v2558, 0
      %v2589 = vsel %vm2575, %v2559, 0
      %v2592 = vsel %vm2575, %v2560, 0
      %v2595 = vsel %vm2575, %v2561, 0
      %v2598 = vsel %vm2575, %v2562, 0
      %2600 = vmatpush.bf16.msra.mxu0 0
      %2601 = vmatpush.bf16.msra.mxu0 0
      %2602 = vmatpush.bf16.msra.mxu0 0
      %2603 = vmatpush.bf16.msra.mxu0 0
      %2604 = vmatpush.bf16.msra.mxu0 0
      %2605 = vmatpush.bf16.msra.mxu0 0
      %2606 = vmatpush.bf16.msra.mxu0 0
      %2607 = vmatpush.bf16.msra.mxu0 %v2573
      %2608 = vmatmul.bf16.gmra.mxu0 %v2577
      %v2609 = vpop.f32.mrf.mxu0
      %v2610 = vadd.f32 %v2567, %v2609
      %v2611 = vpop.f32.mrf.mxu0
      %v2612 = vadd.f32 %v2567, %v2611
      %2613 = vmatmul.bf16.gmra.mxu0 %v2580
      %v2614 = vpop.f32.mrf.mxu0
      %v2615 = vadd.f32 %v2567, %v2614
      %v2616 = vpop.f32.mrf.mxu0
      %v2617 = vadd.f32 %v2567, %v2616
      %2618 = vmatmul.bf16.gmra.mxu0 %v2583
      %v2619 = vpop.f32.mrf.mxu0
      %v2620 = vadd.f32 %v2567, %v2619
      %v2621 = vpop.f32.mrf.mxu0
      %v2622 = vadd.f32 %v2567, %v2621
      %2623 = vmatmul.bf16.gmra.mxu0 %v2586
      %v2624 = vpop.f32.mrf.mxu0
      %v2625 = vadd.f32 %v2567, %v2624
      %v2626 = vpop.f32.mrf.mxu0
      %v2627 = vadd.f32 %v2567, %v2626
      %2628 = vmatmul.bf16.gmra.mxu0 %v2589
      %v2629 = vpop.f32.mrf.mxu0
      %v2630 = vadd.f32 %v2567, %v2629
      %v2631 = vpop.f32.mrf.mxu0
      %v2632 = vadd.f32 %v2567, %v2631
      %2633 = vmatmul.bf16.gmra.mxu0 %v2592
      %v2634 = vpop.f32.mrf.mxu0
      %v2635 = vadd.f32 %v2567, %v2634
      %v2636 = vpop.f32.mrf.mxu0
      %v2637 = vadd.f32 %v2567, %v2636
      %2638 = vmatmul.bf16.gmra.mxu0 %v2595
      %v2639 = vpop.f32.mrf.mxu0
      %v2640 = vadd.f32 %v2567, %v2639
      %v2641 = vpop.f32.mrf.mxu0
      %v2642 = vadd.f32 %v2567, %v2641
      %2643 = vmatmul.bf16.gmra.mxu0 %v2598
      %v2644 = vpop.f32.mrf.mxu0
      %v2645 = vadd.f32 %v2567, %v2644
      %v2646 = vpop.f32.mrf.mxu0
      %v2647 = vadd.f32 %v2567, %v2646
      %2648 = vdwg.mxu0
      %v2649 = vadd.f32 %v2195, %v2610
      %v2650 = vadd.f32 %v2196, %v2612
      %v2651 = vadd.f32 %v2197, %v2615
      %v2652 = vadd.f32 %v2198, %v2617
      %v2653 = vadd.f32 %v2199, %v2620
      %v2654 = vadd.f32 %v2200, %v2622
      %v2655 = vadd.f32 %v2201, %v2625
      %v2656 = vadd.f32 %v2202, %v2627
      %v2657 = vadd.f32 %v2203, %v2630
      %v2658 = vadd.f32 %v2204, %v2632
      %v2659 = vadd.f32 %v2205, %v2635
      %v2660 = vadd.f32 %v2206, %v2637
      %v2661 = vadd.f32 %v2207, %v2640
      %v2662 = vadd.f32 %v2208, %v2642
      %v2663 = vadd.f32 %v2209, %v2645
      %v2664 = vadd.f32 %v2210, %v2647
      %v2665 = vpack.c.bf16 %v2650, %v2649
      %v2666 = vpack.c.bf16 %v2652, %v2651
      %v2667 = vpack.c.bf16 %v2654, %v2653
      %v2668 = vpack.c.bf16 %v2656, %v2655
      %v2669 = vpack.c.bf16 %v2658, %v2657
      %v2670 = vpack.c.bf16 %v2660, %v2659
      %v2671 = vpack.c.bf16 %v2662, %v2661
      %v2672 = vpack.c.bf16 %v2664, %v2663
      %v2673 = vld [vmem:[%s7] sm:$0xf]
      %v2674 = vld [vmem:[%s7 + $0x4] sm:$0xf]
      %v2677 = vunpack.c.l.b16 %v2673
      %v2678 = vunpack.c.l.b16 %v2674
      %v2679 = vpack.c.b16 %v2678, %v2677
      %v2682 = vsel %vm2575, %v2665, 0
      %v2685 = vsel %vm2575, %v2666, 0
      %v2688 = vsel %vm2575, %v2667, 0
      %v2691 = vsel %vm2575, %v2668, 0
      %v2694 = vsel %vm2575, %v2669, 0
      %v2697 = vsel %vm2575, %v2670, 0
      %v2700 = vsel %vm2575, %v2671, 0
      %v2703 = vsel %vm2575, %v2672, 0
      %2705 = vmatpush.bf16.msra.mxu0 0
      %2706 = vmatpush.bf16.msra.mxu0 0
      %2707 = vmatpush.bf16.msra.mxu0 0
      %2708 = vmatpush.bf16.msra.mxu0 0
      %2709 = vmatpush.bf16.msra.mxu0 0
      %2710 = vmatpush.bf16.msra.mxu0 0
      %2711 = vmatpush.bf16.msra.mxu0 0
      %2712 = vmatpush.bf16.msra.mxu0 %v2679
      %2713 = vmatmul.bf16.gmra.mxu0 %v2682
      %v2714 = vpop.f32.mrf.mxu0
      %v2715 = vadd.f32 0.0, %v2714
      %v2716 = vpop.f32.mrf.mxu0
      %v2717 = vadd.f32 0.0, %v2716
      %2718 = vmatmul.bf16.gmra.mxu0 %v2685
      %v2719 = vpop.f32.mrf.mxu0
      %v2720 = vadd.f32 0.0, %v2719
      %v2721 = vpop.f32.mrf.mxu0
      %v2722 = vadd.f32 0.0, %v2721
      %2723 = vmatmul.bf16.gmra.mxu0 %v2688
      %v2724 = vpop.f32.mrf.mxu0
      %v2725 = vadd.f32 0.0, %v2724
      %v2726 = vpop.f32.mrf.mxu0
      %v2727 = vadd.f32 0.0, %v2726
      %2728 = vmatmul.bf16.gmra.mxu0 %v2691
      %v2729 = vpop.f32.mrf.mxu0
      %v2730 = vadd.f32 0.0, %v2729
      %v2731 = vpop.f32.mrf.mxu0
      %v2732 = vadd.f32 0.0, %v2731
      %2733 = vmatmul.bf16.gmra.mxu0 %v2694
      %v2734 = vpop.f32.mrf.mxu0
      %v2735 = vadd.f32 0.0, %v2734
      %v2736 = vpop.f32.mrf.mxu0
      %v2737 = vadd.f32 0.0, %v2736
      %2738 = vmatmul.bf16.gmra.mxu0 %v2697
      %v2739 = vpop.f32.mrf.mxu0
      %v2740 = vadd.f32 0.0, %v2739
      %v2741 = vpop.f32.mrf.mxu0
      %v2742 = vadd.f32 0.0, %v2741
      %2743 = vmatmul.bf16.gmra.mxu0 %v2700
      %v2744 = vpop.f32.mrf.mxu0
      %v2745 = vadd.f32 0.0, %v2744
      %v2746 = vpop.f32.mrf.mxu0
      %v2747 = vadd.f32 0.0, %v2746
      %2748 = vmatmul.bf16.gmra.mxu0 %v2703
      %v2749 = vpop.f32.mrf.mxu0
      %v2750 = vadd.f32 0.0, %v2749
      %v2751 = vpop.f32.mrf.mxu0
      %v2752 = vadd.f32 0.0, %v2751
      %2753 = vdwg.mxu0
      %v2754 = vlaneseq
      %v2755 = vshrl.u32 %v2754, 7
      %v2756 = vadd.s32 %v2755, 8
      %v2757 = vadd.s32 %v2755, 16
      %v2758 = vadd.s32 %v2755, 24
      %v2759 = vadd.s32 %v2755, 32
      %v2760 = vadd.s32 %v2755, 40
      %v2761 = vadd.s32 %v2755, 48
      %v2762 = vadd.s32 %v2755, 56
      %v2763 = vlaneseq
      %v2764 = vand.u32 %v2763, 127
      %v2765 = vmul.u32 %v2755, 2
      %v2766 = vmul.u32 %v2756, 2
      %v2767 = vmul.u32 %v2757, 2
      %v2768 = vmul.u32 %v2758, 2
      %v2769 = vmul.u32 %v2759, 2
      %v2770 = vmul.u32 %v2760, 2
      %v2771 = vmul.u32 %v2761, 2
      %v2772 = vmul.u32 %v2762, 2
      %vm2773 = vcmp.eq.s32.totalorder %v2764, %v2765
      %vm2774 = vcmp.eq.s32.totalorder %v2764, %v2766
      %vm2775 = vcmp.eq.s32.totalorder %v2764, %v2767
      %vm2776 = vcmp.eq.s32.totalorder %v2764, %v2768
      %vm2777 = vcmp.eq.s32.totalorder %v2764, %v2769
      %vm2778 = vcmp.eq.s32.totalorder %v2764, %v2770
      %vm2779 = vcmp.eq.s32.totalorder %v2764, %v2771
      %vm2780 = vcmp.eq.s32.totalorder %v2764, %v2772
      %v2781 = vsel %vm2773, 1, 0
      %v2782 = vsel %vm2774, 1, 0
      %v2783 = vsel %vm2775, 1, 0
      %v2784 = vsel %vm2776, 1, 0
      %v2785 = vsel %vm2777, 1, 0
      %v2786 = vsel %vm2778, 1, 0
      %v2787 = vsel %vm2779, 1, 0
      %v2788 = vsel %vm2780, 1, 0
      %v2789 = vcvt.s32.f32 %v2781
      %v2790 = vcvt.s32.f32 %v2782
      %v2791 = vcvt.s32.f32 %v2783
      %v2792 = vcvt.s32.f32 %v2784
      %v2793 = vcvt.s32.f32 %v2785
      %v2794 = vcvt.s32.f32 %v2786
      %v2795 = vcvt.s32.f32 %v2787
      %v2796 = vcvt.s32.f32 %v2788
      %v2797 = vadd.s32 %v2765, 1
      %v2798 = vadd.s32 %v2766, 1
      %v2799 = vadd.s32 %v2767, 1
      %v2800 = vadd.s32 %v2768, 1
      %v2801 = vadd.s32 %v2769, 1
      %v2802 = vadd.s32 %v2770, 1
      %v2803 = vadd.s32 %v2771, 1
      %v2804 = vadd.s32 %v2772, 1
      %vm2805 = vcmp.eq.s32.totalorder %v2764, %v2797
      %vm2806 = vcmp.eq.s32.totalorder %v2764, %v2798
      %vm2807 = vcmp.eq.s32.totalorder %v2764, %v2799
      %vm2808 = vcmp.eq.s32.totalorder %v2764, %v2800
      %vm2809 = vcmp.eq.s32.totalorder %v2764, %v2801
      %vm2810 = vcmp.eq.s32.totalorder %v2764, %v2802
      %vm2811 = vcmp.eq.s32.totalorder %v2764, %v2803
      %vm2812 = vcmp.eq.s32.totalorder %v2764, %v2804
      %v2813 = vsel %vm2805, 1, 0
      %v2814 = vsel %vm2806, 1, 0
      %v2815 = vsel %vm2807, 1, 0
      %v2816 = vsel %vm2808, 1, 0
      %v2817 = vsel %vm2809, 1, 0
      %v2818 = vsel %vm2810, 1, 0
      %v2819 = vsel %vm2811, 1, 0
      %v2820 = vsel %vm2812, 1, 0
      %v2821 = vcvt.s32.f32 %v2813
      %v2822 = vcvt.s32.f32 %v2814
      %v2823 = vcvt.s32.f32 %v2815
      %v2824 = vcvt.s32.f32 %v2816
      %v2825 = vcvt.s32.f32 %v2817
      %v2826 = vcvt.s32.f32 %v2818
      %v2827 = vcvt.s32.f32 %v2819
      %v2828 = vcvt.s32.f32 %v2820
      %2829 = vmatpush.msra.mxu0 %v2664
      %2830 = vmatpush.msra.mxu0 %v2663
      %2831 = vmatpush.msra.mxu0 %v2662
      %2832 = vmatpush.msra.mxu0 %v2661
      %2833 = vmatpush.msra.mxu0 %v2660
      %2834 = vmatpush.msra.mxu0 %v2659
      %2835 = vmatpush.msra.mxu0 %v2658
      %2836 = vmatpush.msra.mxu0 %v2657
      %2837 = vmatpush.msra.mxu0 %v2656
      %2838 = vmatpush.msra.mxu0 %v2655
      %2839 = vmatpush.msra.mxu0 %v2654
      %2840 = vmatpush.msra.mxu0 %v2653
      %2841 = vmatpush.msra.mxu0 %v2652
      %2842 = vmatpush.msra.mxu0 %v2651
      %2843 = vmatpush.msra.mxu0 %v2650
      %2844 = vmatpush.msra.mxu0 %v2649
      %2845 = vmatmul.f32.gmra.mxu0 %v2789
      %v2846 = vpop.f32.mrf.mxu0
      %v2847 = vadd.f32 0.0, %v2846
      %2848 = vmatmul.f32.gmra.mxu0 %v2790
      %v2849 = vpop.f32.mrf.mxu0
      %v2850 = vadd.f32 0.0, %v2849
      %2851 = vmatmul.f32.gmra.mxu0 %v2791
      %v2852 = vpop.f32.mrf.mxu0
      %v2853 = vadd.f32 0.0, %v2852
      %2854 = vmatmul.f32.gmra.mxu0 %v2792
      %v2855 = vpop.f32.mrf.mxu0
      %v2856 = vadd.f32 0.0, %v2855
      %2857 = vmatmul.f32.gmra.mxu0 %v2793
      %v2858 = vpop.f32.mrf.mxu0
      %v2859 = vadd.f32 0.0, %v2858
      %2860 = vmatmul.f32.gmra.mxu0 %v2794
      %v2861 = vpop.f32.mrf.mxu0
      %v2862 = vadd.f32 0.0, %v2861
      %2863 = vmatmul.f32.gmra.mxu0 %v2795
      %v2864 = vpop.f32.mrf.mxu0
      %v2865 = vadd.f32 0.0, %v2864
      %2866 = vmatmul.f32.gmra.mxu0 %v2796
      %v2867 = vpop.f32.mrf.mxu0
      %v2868 = vadd.f32 0.0, %v2867
      %2869 = vdwg.mxu0
      %2870 = vmatpush.msra.mxu0 %v2664
      %2871 = vmatpush.msra.mxu0 %v2663
      %2872 = vmatpush.msra.mxu0 %v2662
      %2873 = vmatpush.msra.mxu0 %v2661
      %2874 = vmatpush.msra.mxu0 %v2660
      %2875 = vmatpush.msra.mxu0 %v2659
      %2876 = vmatpush.msra.mxu0 %v2658
      %2877 = vmatpush.msra.mxu0 %v2657
      %2878 = vmatpush.msra.mxu0 %v2656
      %2879 = vmatpush.msra.mxu0 %v2655
      %2880 = vmatpush.msra.mxu0 %v2654
      %2881 = vmatpush.msra.mxu0 %v2653
      %2882 = vmatpush.msra.mxu0 %v2652
      %2883 = vmatpush.msra.mxu0 %v2651
      %2884 = vmatpush.msra.mxu0 %v2650
      %2885 = vmatpush.msra.mxu0 %v2649
      %2886 = vmatmul.f32.gmra.mxu0 %v2821
      %v2887 = vpop.f32.mrf.mxu0
      %v2888 = vadd.f32 0.0, %v2887
      %2889 = vmatmul.f32.gmra.mxu0 %v2822
      %v2890 = vpop.f32.mrf.mxu0
      %v2891 = vadd.f32 0.0, %v2890
      %2892 = vmatmul.f32.gmra.mxu0 %v2823
      %v2893 = vpop.f32.mrf.mxu0
      %v2894 = vadd.f32 0.0, %v2893
      %2895 = vmatmul.f32.gmra.mxu0 %v2824
      %v2896 = vpop.f32.mrf.mxu0
      %v2897 = vadd.f32 0.0, %v2896
      %2898 = vmatmul.f32.gmra.mxu0 %v2825
      %v2899 = vpop.f32.mrf.mxu0
      %v2900 = vadd.f32 0.0, %v2899
      %2901 = vmatmul.f32.gmra.mxu0 %v2826
      %v2902 = vpop.f32.mrf.mxu0
      %v2903 = vadd.f32 0.0, %v2902
      %2904 = vmatmul.f32.gmra.mxu0 %v2827
      %v2905 = vpop.f32.mrf.mxu0
      %v2906 = vadd.f32 0.0, %v2905
      %2907 = vmatmul.f32.gmra.mxu0 %v2828
      %v2908 = vpop.f32.mrf.mxu0
      %v2909 = vadd.f32 0.0, %v2908
      %2910 = vdwg.mxu0
      %2911 = vmatpush.msra.mxu0 %v2752
      %2912 = vmatpush.msra.mxu0 %v2750
      %2913 = vmatpush.msra.mxu0 %v2747
      %2914 = vmatpush.msra.mxu0 %v2745
      %2915 = vmatpush.msra.mxu0 %v2742
      %2916 = vmatpush.msra.mxu0 %v2740
      %2917 = vmatpush.msra.mxu0 %v2737
      %2918 = vmatpush.msra.mxu0 %v2735
      %2919 = vmatpush.msra.mxu0 %v2732
      %2920 = vmatpush.msra.mxu0 %v2730
      %2921 = vmatpush.msra.mxu0 %v2727
      %2922 = vmatpush.msra.mxu0 %v2725
      %2923 = vmatpush.msra.mxu0 %v2722
      %2924 = vmatpush.msra.mxu0 %v2720
      %2925 = vmatpush.msra.mxu0 %v2717
      %2926 = vmatpush.msra.mxu0 %v2715
      %2927 = vmatmul.f32.gmra.mxu0 %v2789
      %v2928 = vpop.f32.mrf.mxu0
      %v2929 = vadd.f32 0.0, %v2928
      %2930 = vmatmul.f32.gmra.mxu0 %v2790
      %v2931 = vpop.f32.mrf.mxu0
      %v2932 = vadd.f32 0.0, %v2931
      %2933 = vmatmul.f32.gmra.mxu0 %v2791
      %v2934 = vpop.f32.mrf.mxu0
      %v2935 = vadd.f32 0.0, %v2934
      %2936 = vmatmul.f32.gmra.mxu0 %v2792
      %v2937 = vpop.f32.mrf.mxu0
      %v2938 = vadd.f32 0.0, %v2937
      %2939 = vmatmul.f32.gmra.mxu0 %v2793
      %v2940 = vpop.f32.mrf.mxu0
      %v2941 = vadd.f32 0.0, %v2940
      %2942 = vmatmul.f32.gmra.mxu0 %v2794
      %v2943 = vpop.f32.mrf.mxu0
      %v2944 = vadd.f32 0.0, %v2943
      %2945 = vmatmul.f32.gmra.mxu0 %v2795
      %v2946 = vpop.f32.mrf.mxu0
      %v2947 = vadd.f32 0.0, %v2946
      %2948 = vmatmul.f32.gmra.mxu0 %v2796
      %v2949 = vpop.f32.mrf.mxu0
      %v2950 = vadd.f32 0.0, %v2949
      %2951 = vdwg.mxu0
      %2952 = vmatpush.msra.mxu0 %v2752
      %2953 = vmatpush.msra.mxu0 %v2750
      %2954 = vmatpush.msra.mxu0 %v2747
      %2955 = vmatpush.msra.mxu0 %v2745
      %2956 = vmatpush.msra.mxu0 %v2742
      %2957 = vmatpush.msra.mxu0 %v2740
      %2958 = vmatpush.msra.mxu0 %v2737
      %2959 = vmatpush.msra.mxu0 %v2735
      %2960 = vmatpush.msra.mxu0 %v2732
      %2961 = vmatpush.msra.mxu0 %v2730
      %2962 = vmatpush.msra.mxu0 %v2727
      %2963 = vmatpush.msra.mxu0 %v2725
      %2964 = vmatpush.msra.mxu0 %v2722
      %2965 = vmatpush.msra.mxu0 %v2720
      %2966 = vmatpush.msra.mxu0 %v2717
      %2967 = vmatpush.msra.mxu0 %v2715
      %2968 = vmatmul.f32.gmra.mxu0 %v2821
      %v2969 = vpop.f32.mrf.mxu0
      %v2970 = vadd.f32 0.0, %v2969
      %2971 = vmatmul.f32.gmra.mxu0 %v2822
      %v2972 = vpop.f32.mrf.mxu0
      %v2973 = vadd.f32 0.0, %v2972
      %2974 = vmatmul.f32.gmra.mxu0 %v2823
      %v2975 = vpop.f32.mrf.mxu0
      %v2976 = vadd.f32 0.0, %v2975
      %2977 = vmatmul.f32.gmra.mxu0 %v2824
      %v2978 = vpop.f32.mrf.mxu0
      %v2979 = vadd.f32 0.0, %v2978
      %2980 = vmatmul.f32.gmra.mxu0 %v2825
      %v2981 = vpop.f32.mrf.mxu0
      %v2982 = vadd.f32 0.0, %v2981
      %2983 = vmatmul.f32.gmra.mxu0 %v2826
      %v2984 = vpop.f32.mrf.mxu0
      %v2985 = vadd.f32 0.0, %v2984
      %2986 = vmatmul.f32.gmra.mxu0 %v2827
      %v2987 = vpop.f32.mrf.mxu0
      %v2988 = vadd.f32 0.0, %v2987
      %2989 = vmatmul.f32.gmra.mxu0 %v2828
      %v2990 = vpop.f32.mrf.mxu0
      %v2991 = vadd.f32 0.0, %v2990
      %2992 = vdwg.mxu0
      %v2993 = vmax.f32 %v2929, %v2970
      %v2994 = vmax.f32 %v2932, %v2973
      %v2995 = vmax.f32 %v2935, %v2976
      %v2996 = vmax.f32 %v2938, %v2979
      %v2997 = vmax.f32 %v2941, %v2982
      %v2998 = vmax.f32 %v2944, %v2985
      %v2999 = vmax.f32 %v2947, %v2988
      %v3000 = vmax.f32 %v2950, %v2991
      %v3001 = vsub.f32 %v2929, %v2993
      %v3002 = vsub.f32 %v2932, %v2994
      %v3003 = vsub.f32 %v2935, %v2995
      %v3004 = vsub.f32 %v2938, %v2996
      %v3005 = vsub.f32 %v2941, %v2997
      %v3006 = vsub.f32 %v2944, %v2998
      %v3007 = vsub.f32 %v2947, %v2999
      %v3008 = vsub.f32 %v2950, %v3000
      %v3009 = vmul.f32 %v3001, 1.442695
      %v3010 = vpow.pop %v3009
      %v3011 = vmul.f32 %v3002, 1.442695
      %v3012 = vpow.pop %v3011
      %v3013 = vmul.f32 %v3003, 1.442695
      %v3014 = vpow.pop %v3013
      %v3015 = vmul.f32 %v3004, 1.442695
      %v3016 = vpow.pop %v3015
      %v3017 = vmul.f32 %v3005, 1.442695
      %v3018 = vpow.pop %v3017
      %v3019 = vmul.f32 %v3006, 1.442695
      %v3020 = vpow.pop %v3019
      %v3021 = vmul.f32 %v3007, 1.442695
      %v3022 = vpow.pop %v3021
      %v3023 = vmul.f32 %v3008, 1.442695
      %v3024 = vpow.pop %v3023
      %v3025 = vsub.f32 %v2970, %v2993
      %v3026 = vsub.f32 %v2973, %v2994
      %v3027 = vsub.f32 %v2976, %v2995
      %v3028 = vsub.f32 %v2979, %v2996
      %v3029 = vsub.f32 %v2982, %v2997
      %v3030 = vsub.f32 %v2985, %v2998
      %v3031 = vsub.f32 %v2988, %v2999
      %v3032 = vsub.f32 %v2991, %v3000
      %v3033 = vmul.f32 %v3025, 1.442695
      %v3034 = vpow.pop %v3033
      %v3035 = vmul.f32 %v3026, 1.442695
      %v3036 = vpow.pop %v3035
      %v3037 = vmul.f32 %v3027, 1.442695
      %v3038 = vpow.pop %v3037
      %v3039 = vmul.f32 %v3028, 1.442695
      %v3040 = vpow.pop %v3039
      %v3041 = vmul.f32 %v3029, 1.442695
      %v3042 = vpow.pop %v3041
      %v3043 = vmul.f32 %v3030, 1.442695
      %v3044 = vpow.pop %v3043
      %v3045 = vmul.f32 %v3031, 1.442695
      %v3046 = vpow.pop %v3045
      %v3047 = vmul.f32 %v3032, 1.442695
      %v3048 = vpow.pop %v3047
      %v3049 = vmul.f32 %v2847, %v3010
      %v3050 = vmul.f32 %v2850, %v3012
      %v3051 = vmul.f32 %v2853, %v3014
      %v3052 = vmul.f32 %v2856, %v3016
      %v3053 = vmul.f32 %v2859, %v3018
      %v3054 = vmul.f32 %v2862, %v3020
      %v3055 = vmul.f32 %v2865, %v3022
      %v3056 = vmul.f32 %v2868, %v3024
      %v3057 = vmul.f32 %v2888, %v3034
      %v3058 = vmul.f32 %v2891, %v3036
      %v3059 = vmul.f32 %v2894, %v3038
      %v3060 = vmul.f32 %v2897, %v3040
      %v3061 = vmul.f32 %v2900, %v3042
      %v3062 = vmul.f32 %v2903, %v3044
      %v3063 = vmul.f32 %v2906, %v3046
      %v3064 = vmul.f32 %v2909, %v3048
      %v3065 = vadd.f32 %v3049, %v3057
      %v3066 = vadd.f32 %v3050, %v3058
      %v3067 = vadd.f32 %v3051, %v3059
      %v3068 = vadd.f32 %v3052, %v3060
      %v3069 = vadd.f32 %v3053, %v3061
      %v3070 = vadd.f32 %v3054, %v3062
      %v3071 = vadd.f32 %v3055, %v3063
      %v3072 = vadd.f32 %v3056, %v3064
      %v3073 = vadd.f32 %v3010, %v3034
      %v3074 = vadd.f32 %v3012, %v3036
      %v3075 = vadd.f32 %v3014, %v3038
      %v3076 = vadd.f32 %v3016, %v3040
      %v3077 = vadd.f32 %v3018, %v3042
      %v3078 = vadd.f32 %v3020, %v3044
      %v3079 = vadd.f32 %v3022, %v3046
      %v3080 = vadd.f32 %v3024, %v3048
      %v3081 = vrcp.pop %v3073
      %v3082 = vrcp.pop %v3074
      %v3083 = vrcp.pop %v3075
      %v3084 = vrcp.pop %v3076
      %v3085 = vrcp.pop %v3077
      %v3086 = vrcp.pop %v3078
      %v3087 = vrcp.pop %v3079
      %v3088 = vrcp.pop %v3080
      %v3089 = vmul.f32 %v3065, %v3081
      %v3090 = vmul.f32 %v3066, %v3082
      %v3091 = vmul.f32 %v3067, %v3083
      %v3092 = vmul.f32 %v3068, %v3084
      %v3093 = vmul.f32 %v3069, %v3085
      %v3094 = vmul.f32 %v3070, %v3086
      %v3095 = vmul.f32 %v3071, %v3087
      %v3096 = vmul.f32 %v3072, %v3088
      %3097 = vst.msk [vmem:[%s305] sm:$0xff] %vm2575, %v3089
      %3098 = vst.msk [vmem:[%s305 + $0x8] sm:$0xff] %vm2575, %v3090
      %3099 = vst.msk [vmem:[%s305 + $0x10] sm:$0xff] %vm2575, %v3091
      %3100 = vst.msk [vmem:[%s305 + $0x18] sm:$0xff] %vm2575, %v3092
      %3101 = vst.msk [vmem:[%s305 + $0x20] sm:$0xff] %vm2575, %v3093
      %3102 = vst.msk [vmem:[%s305 + $0x28] sm:$0xff] %vm2575, %v3094
      %3103 = vst.msk [vmem:[%s305 + $0x30] sm:$0xff] %vm2575, %v3095
      %3104 = vst.msk [vmem:[%s305 + $0x38] sm:$0xff] %vm2575, %v3096
      %p3105 = scmp.lt.s32.totalorder %s19, 1
      %s3106 = scalar_select %p3105, %s19, 1
      %s3107 = smul.addr %s3106, 8
      %s3108 = smul.addr %s3107, 8
      %s3109 = scalar_lea.vmem %s8, %s3108
      // Predicated region
      $region53: #{tpu_custom_call.1} parent=51 // pred_check
        %p3110 = pneg %p210
      $region54: #{tpu_custom_call.1} parent=51 // pred_check_branch
        %3112 = sbr.rel (%p3110) target = $region56
      $region55: #{tpu_custom_call.1} parent=51 // pred_region
        _
      $region56: #{tpu_custom_call.1} parent=51 // pred_fallthru
        _
    $region52: #{tpu_custom_call.1} parent=5 // pred_fallthru
      _
    %p3113 = scmp.le.s32.totalorder 2, %s14
    // Predicated region
    $region57: #{tpu_custom_call.1} parent=5 // pred_check
      %p3114 = pneg %p3113
    $region58: #{tpu_custom_call.1} parent=5 // pred_check_branch
      %3116 = sbr.rel (%p3114) target = $region60
    $region59: #{tpu_custom_call.1} parent=5 // pred_region
      %s3117 = ssub.s32 %s14, 2
      // Predicated region
      $region61: #{tpu_custom_call.1} parent=59 // pred_check
        %p3118 = pneg %p216
      $region62: #{tpu_custom_call.1} parent=59 // pred_check_branch
        %3120 = sbr.rel (%p3118) target = $region64
      $region63: #{tpu_custom_call.1} parent=59 // pred_region
        %p3121 = scmp.lt.s32.totalorder %s20, 1
        %s3122 = scalar_select %p3121, %s20, 1
        %s3123 = smul.addr %s3122, 8
        %s3124 = smul.addr %s3123, 8
        %s3125 = scalar_lea.vmem %s8, %s3124
      $region64: #{tpu_custom_call.1} parent=59 // pred_fallthru
        _
    $region60: #{tpu_custom_call.1} parent=5 // pred_fallthru
      _
  $region6: #{tpu_custom_call.1} parent=0 // loop_footer
    %s18 = sadd.s32 1, %s14
  $region7: #{tpu_custom_call.1} parent=0 // loop_footer_branch
    %13 = sbr.rel target = $region3
  $region8: #{tpu_custom_call.1} parent=0 // loop_exit
    _

</llo_original>
